<compile_context>
chip_gen: v7x
topology: tpu7x:2x2x1
jax: 0.10.0
libtpu: 0.0.40
codegen_flags: <defaults>
</compile_context>

<pallas_src>
import functools
import math

import jax
import jax.numpy as jnp
from jax.experimental import pallas as pl
from jax.experimental.pallas import tpu as pltpu

D_MODEL = 128   # transformer width (lane-aligned)
D_FFN = 256     # FFN hidden width (split into two 128-lane halves in-kernel)


# ----------------------------------------------------------------------------
# Fused transformer-block Pallas kernel (one grid step per batch element)
# ----------------------------------------------------------------------------
def _fused_block_kernel(tokens_ref, tb_ref, cond_ref, mbias_ref,
                        wkc_ref, wd_ref, b_ref, o_ref,
                        *, pe_rows, audio_lo, audio_hi):
    f32 = jnp.float32
    bf16 = jnp.bfloat16
    D = D_MODEL

    # ---- patch embedding; timestep-MLP output + patch-embed bias pre-folded --
    h = jnp.dot(tokens_ref[0], wkc_ref[0:pe_rows, :], preferred_element_type=f32)
    h = h + tb_ref[0]                                              # (L,D)+(1,D)

    # ---- conditioning projection (ctx/clip/audio slotted into one matmul) ----
    c = jnp.dot(cond_ref[0], wkc_ref[pe_rows:, :], preferred_element_type=f32)
    c = c + b_ref[8:, :]                                           # per-row bias
    if audio_hi > audio_lo:                                        # static bounds
        row = jax.lax.broadcasted_iota(jnp.int32, c.shape, 0)
        gate = (row >= audio_lo) & (row < audio_hi)
        c = jnp.where(gate, jax.nn.gelu(c), c)                     # audio rows GELU
    c_bf = c.astype(bf16)

    # ---- cross attention (w_q / b_q pre-scaled by 1/sqrt(D) in the wrapper) --
    h_bf = h.astype(bf16)
    q = jnp.dot(h_bf, wd_ref[:, 0:D], preferred_element_type=f32) + b_ref[0:1, :]
    k = jnp.dot(c_bf, wd_ref[:, D:2 * D], preferred_element_type=f32) + b_ref[1:2, :]
    v = jnp.dot(c_bf, wd_ref[:, 2 * D:3 * D], preferred_element_type=f32) + b_ref[2:3, :]

    s = jax.lax.dot_general(q.astype(bf16), k.astype(bf16),
                            (((1,), (1,)), ((), ())),
                            preferred_element_type=f32)            # (L, Lk) f32
    s = s + mbias_ref[0]                                           # additive mask bias
    mx = jnp.max(s, axis=-1, keepdims=True)
    p = jnp.exp(s - mx)
    denom = jnp.sum(p, axis=-1, keepdims=True)
    p = p * pl.reciprocal(denom, approx=True)                      # EUP divide
    attn = jnp.dot(p.astype(bf16), v.astype(bf16), preferred_element_type=f32)

    # ---- O projection with fused residual add --------------------------------
    h = h + jnp.dot(attn.astype(bf16), wd_ref[:, 3 * D:4 * D],
                    preferred_element_type=f32) + b_ref[3:4, :]

    # ---- FFN: hidden dim split into two 128-lane halves, bf16 immediately ----
    h_bf = h.astype(bf16)
    ffa = jax.nn.gelu(jnp.dot(h_bf, wd_ref[:, 4 * D:5 * D],
                              preferred_element_type=f32) + b_ref[4:5, :]).astype(bf16)
    ffb = jax.nn.gelu(jnp.dot(h_bf, wd_ref[:, 5 * D:6 * D],
                              preferred_element_type=f32) + b_ref[5:6, :]).astype(bf16)
    h = h + (jnp.dot(ffa, wd_ref[:, 6 * D:7 * D], preferred_element_type=f32)
             + jnp.dot(ffb, wd_ref[:, 7 * D:8 * D], preferred_element_type=f32)
             + b_ref[6:7, :])

    # ---- lane-dense output head (zero-padded to 128 lanes), bf16 store -------
    out = jnp.dot(h.astype(bf16), wd_ref[:, 8 * D:9 * D],
                  preferred_element_type=f32) + b_ref[7:8, :]
    o_ref[0] = out.astype(o_ref.dtype)


# ----------------------------------------------------------------------------
# Parameter setup (deterministic, in-script)
# ----------------------------------------------------------------------------
def _lin_init(key, din, dout):
    w = jax.random.normal(key, (din, dout), jnp.float32) / math.sqrt(din)
    b = jnp.zeros((dout,), jnp.float32)
    return {"w": w, "b": b}


def init_params(key, cfg):
    keys = jax.random.split(key, 13)
    return {
        "audio_proj":  _lin_init(keys[0], cfg["audio_dim"], D_MODEL),
        "patch_embed": _lin_init(keys[1], 2 * cfg["C"], D_MODEL),
        "t_mlp1":      _lin_init(keys[2], D_MODEL, D_MODEL),
        "t_mlp2":      _lin_init(keys[3], D_MODEL, D_MODEL),
        "ctx_proj":    _lin_init(keys[4], cfg["ctx_dim"], D_MODEL),
        "clip_proj":   _lin_init(keys[5], cfg["clip_dim"], D_MODEL),
        "q":           _lin_init(keys[6], D_MODEL, D_MODEL),
        "k":           _lin_init(keys[7], D_MODEL, D_MODEL),
        "v":           _lin_init(keys[8], D_MODEL, D_MODEL),
        "o":           _lin_init(keys[9], D_MODEL, D_MODEL),
        "ffn1":        _lin_init(keys[10], D_MODEL, D_FFN),
        "ffn2":        _lin_init(keys[11], D_FFN, D_MODEL),
        "head":        _lin_init(keys[12], D_MODEL, cfg["C"]),
    }


# ----------------------------------------------------------------------------
# Submodules (synthetic stand-ins for the opaque nn.Modules passed to Net)
# ----------------------------------------------------------------------------
def sinusoidal_embedding(timesteps, dim):
    half = dim // 2
    freqs = jnp.exp(-math.log(10000.0) *
                    jnp.arange(half, dtype=jnp.float32) / half)
    args = timesteps.astype(jnp.float32)[:, None] * freqs[None, :]
    return jnp.concatenate([jnp.cos(args), jnp.sin(args)], axis=-1)


def audio2token(params, audio_emb):
    """Marks audio embeddings for conditioning.  The audio projection
    (audio_dim -> D, GELU) is fused into the transformer3d kernel prologue
    (slotted conditioning matmul + audio-row GELU) to avoid a standalone tiny
    pallas_call and its HBM round-trip."""
    del params
    return audio_emb


def transformer3d(params, x, timesteps, *, context, seq_len, clip_fea, y, mask,
                  ref_fea=None, audio_feat=None, motion_frame=None):
    B, C, F, H, W = x.shape
    L = F * H * W
    assert seq_len == L, "seq_len must match the flattened latent token count"
    # TODO(synk): ref_fea / motion_frame conditioning branches are None in this
    # synthetic configuration and are not modeled.

    bf16 = jnp.bfloat16
    f32 = jnp.float32
    D = D_MODEL
    scale = 1.0 / math.sqrt(D)

    # ---- token-major layout prep (cheap XLA layout plumbing) -----------------
    xin = jnp.concatenate([x, y], axis=1)                           # (B, 2C, F, H, W)
    tok_feat = 2 * C
    pe_rows = ((tok_feat + 7) // 8) * 8                             # sublane pad
    tokens = jnp.transpose(xin, (0, 2, 3, 4, 1)).reshape(B, L, tok_feat)
    if pe_rows != tok_feat:
        tokens = jnp.pad(tokens, ((0, 0), (0, 0), (0, pe_rows - tok_feat)))
    tokens = tokens.astype(bf16)

    # ---- timestep MLP hoisted to XLA (M=1 matmuls off kernel critical path) --
    t_sin = sinusoidal_embedding(timesteps, D)                      # (B, D) f32
    t = t_sin @ params["t_mlp1"]["w"] + params["t_mlp1"]["b"]
    t = t * jax.nn.sigmoid(t)                                       # SiLU
    t = t @ params["t_mlp2"]["w"] + params["t_mlp2"]["b"]
    tb = (t + params["patch_embed"]["b"][None, :]).reshape(B, 1, D).astype(f32)

    # ---- conditioning assembly: slot each source's features into disjoint
    #      columns; key dim padded to a lane-dense multiple of 128 -------------
    ctx_dim = context.shape[-1]
    clip_dim = clip_fea.shape[-1]
    Lc = context.shape[1]
    if audio_feat is not None:
        aud_dim = audio_feat.shape[-1]
        Ta = audio_feat.shape[1]
    else:
        aud_dim = 0
        Ta = 0
    Kc = ctx_dim + clip_dim + aud_dim
    Lk = Lc + 1 + Ta
    Lk_pad = ((Lk + 127) // 128) * 128                              # lane-dense keys

    cond_raw = jnp.zeros((B, Lk_pad, Kc), f32)
    cond_raw = cond_raw.at[:, :Lc, :ctx_dim].set(context)
    cond_raw = cond_raw.at[:, Lc, ctx_dim:ctx_dim + clip_dim].set(clip_fea)
    if audio_feat is not None:
        cond_raw = cond_raw.at[:, Lc + 1:Lk, ctx_dim + clip_dim:].set(audio_feat)
    cond_raw = cond_raw.astype(bf16)

    # additive attention mask bias: 0 = keep, -1e30 = drop (padded keys dropped)
    kmask = jnp.zeros((B, Lk_pad), f32)
    kmask = kmask.at[:, :Lc].set(mask.astype(f32))
    kmask = kmask.at[:, Lc].set(1.0)                                # clip always kept
    if audio_feat is not None:
        kmask = kmask.at[:, Lc + 1:Lk].set(1.0)
    mask_bias = ((kmask - 1.0) * 1e30).reshape(B, 1, Lk_pad)

    # ---- weight / bias slabs: 3 shared operands instead of ~24 ---------------
    w_pe = params["patch_embed"]["w"]
    if pe_rows != tok_feat:
        w_pe = jnp.pad(w_pe, ((0, pe_rows - tok_feat), (0, 0)))
    wc_parts = [params["ctx_proj"]["w"], params["clip_proj"]["w"]]
    if audio_feat is not None:
        wc_parts.append(params["audio_proj"]["w"])
    w_cond = jnp.concatenate(wc_parts, axis=0)                      # (Kc, D)
    w_kc = jnp.concatenate([w_pe, w_cond], axis=0).astype(bf16)     # (pe_rows+Kc, D)

    w_head = jnp.zeros((D, D), f32).at[:, :C].set(params["head"]["w"])
    b_head = jnp.zeros((D,), f32).at[:C].set(params["head"]["b"])
    w_d = jnp.concatenate([
        params["q"]["w"] * scale,                                   # scale folded in
        params["k"]["w"], params["v"]["w"], params["o"]["w"],
        params["ffn1"]["w"][:, :D], params["ffn1"]["w"][:, D:],
        params["ffn2"]["w"][:D, :], params["ffn2"]["w"][D:, :],
        w_head], axis=1).astype(bf16)                               # (D, 9D)

    b_cond = jnp.zeros((Lk_pad, D), f32)
    b_cond = b_cond.at[:Lc, :].set(params["ctx_proj"]["b"][None, :])
    b_cond = b_cond.at[Lc, :].set(params["clip_proj"]["b"])
    if audio_feat is not None:
        b_cond = b_cond.at[Lc + 1:Lk, :].set(params["audio_proj"]["b"][None, :])
    b_slab = jnp.concatenate([
        jnp.stack([params["q"]["b"] * scale, params["k"]["b"], params["v"]["b"],
                   params["o"]["b"],
                   params["ffn1"]["b"][:D], params["ffn1"]["b"][D:],
                   params["ffn2"]["b"], b_head], axis=0),            # (8, D)
        b_cond], axis=0)                                             # (8+Lk_pad, D)

    kern = functools.partial(_fused_block_kernel,
                             pe_rows=pe_rows,
                             audio_lo=Lc + 1, audio_hi=Lc + 1 + Ta)

    out_pad = pl.pallas_call(
        kern,
        out_shape=jax.ShapeDtypeStruct((B, L, D), bf16),            # bf16 writeback
        grid=(B,),
        in_specs=[
            pl.BlockSpec((1, L, pe_rows), lambda b: (b, 0, 0)),      # tokens
            pl.BlockSpec((1, 1, D), lambda b: (b, 0, 0)),            # t_mlp + b_pe
            pl.BlockSpec((1, Lk_pad, Kc), lambda b: (b, 0, 0)),      # conditioning
            pl.BlockSpec((1, 1, Lk_pad), lambda b: (b, 0, 0)),       # mask bias
            pl.BlockSpec((pe_rows + Kc, D), lambda b: (0, 0)),       # w_pe + w_cond slab
            pl.BlockSpec((D, 9 * D), lambda b: (0, 0)),              # (D,*) weight slab
            pl.BlockSpec((8 + Lk_pad, D), lambda b: (0, 0)),         # bias slab
        ],
        out_specs=pl.BlockSpec((1, L, D), lambda b: (b, 0, 0)),
        compiler_params=pltpu.CompilerParams(
            dimension_semantics=("parallel",)),                      # megacore batch axis
    )(tokens, tb, cond_raw, mask_bias, w_kc, w_d, b_slab)

    # Slice real channels from the lane-dense head output and unpatchify.
    out_tok = out_pad[:, :, :C].astype(f32)                          # (B, L, C)
    out = out_tok.reshape(B, F, H, W, C).transpose(0, 4, 1, 2, 3)    # (B, C, F, H, W)
    return out


# ----------------------------------------------------------------------------
# Net.forward equivalent
# ----------------------------------------------------------------------------
def net_forward(params, args, noisy_latents, timesteps, context, seq_len,
                clip_fea, image_latents, audio_emb, mask,
                ref_fea=None, motion_frame=None):
    if "a2v" in args["model_type"]:
        audio_feat = audio2token(params, audio_emb)
    else:
        audio_feat = None
    noise_pred = transformer3d(
        params, noisy_latents, timesteps, context=context, seq_len=seq_len,
        clip_fea=clip_fea, y=image_latents, mask=mask, ref_fea=ref_fea,
        audio_feat=audio_feat, motion_frame=motion_frame)
    return noise_pred


# ----------------------------------------------------------------------------
# Demo
# ----------------------------------------------------------------------------
if __name__ == "__main__":
    cfg = {"C": 4, "F": 2, "H": 8, "W": 8,
           "ctx_dim": 64, "clip_dim": 64, "audio_dim": 32}
    B = 2
    L = cfg["F"] * cfg["H"] * cfg["W"]          # 128 latent tokens
    Lc, Ta = 16, 4

    key = jax.random.PRNGKey(0)
    k_par, k_x, k_ctx, k_clip, k_img, k_aud = jax.random.split(key, 6)

    params = init_params(k_par, cfg)
    args = {"model_type": "a2v_diffusion"}

    noisy_latents = jax.random.normal(
        k_x, (B, cfg["C"], cfg["F"], cfg["H"], cfg["W"]), jnp.float32)
    image_latents = jax.random.normal(
        k_img, (B, cfg["C"], cfg["F"], cfg["H"], cfg["W"]), jnp.float32)
    timesteps = jnp.array([10.0, 500.0], dtype=jnp.float32)
    context = jax.random.normal(k_ctx, (B, Lc, cfg["ctx_dim"]), jnp.float32)
    clip_fea = jax.random.normal(k_clip, (B, cfg["clip_dim"]), jnp.float32)
    audio_emb = jax.random.normal(k_aud, (B, Ta, cfg["audio_dim"]), jnp.float32)
    mask = jnp.concatenate(
        [jnp.ones((B, Lc - 4), jnp.float32), jnp.zeros((B, 4), jnp.float32)], axis=1)

    noise_pred = net_forward(params, args, noisy_latents, timesteps, context,
                             L, clip_fea, image_latents, audio_emb, mask)
    noise_pred = jax.block_until_ready(noise_pred)
    assert noise_pred.shape == noisy_latents.shape
    assert jnp.all(jnp.isfinite(noise_pred))
    print("KERNEL_OK")
</pallas_src>

<mosaic_0001>
module attributes {stable_mosaic.version = 11 : i64} {
  func.func @_fused_block_kernel(%arg0: i32, %arg1: memref<1x128x8xbf16, #tpu.memory_space<vmem>>, %arg2: memref<1x1x128xf32, #tpu.memory_space<vmem>>, %arg3: memref<1x128x160xbf16, #tpu.memory_space<vmem>>, %arg4: memref<1x1x128xf32, #tpu.memory_space<vmem>>, %arg5: memref<168x128xbf16, #tpu.memory_space<vmem>>, %arg6: memref<128x1152xbf16, #tpu.memory_space<vmem>>, %arg7: memref<136x128xf32, #tpu.memory_space<vmem>>, %arg8: memref<1x128x128xbf16, #tpu.memory_space<vmem>>) attributes {dimension_semantics = [#tpu.dimension_semantics<parallel>], iteration_bounds = array<i64: 2>, scalar_prefetch = 0 : i64, scratch_operands = 0 : i64, tpu.core_type = #tpu.core_type<tc>, window_params = [{transform_indices = @transform_0, window_bounds = array<i64: 1, 128, 8>}, {transform_indices = @transform_1, window_bounds = array<i64: 1, 1, 128>}, {transform_indices = @transform_2, window_bounds = array<i64: 1, 128, 160>}, {transform_indices = @transform_3, window_bounds = array<i64: 1, 1, 128>}, {pipeline_mode = #tpu.pipeline_mode<synchronous>, transform_indices = @transform_4, window_bounds = array<i64: 168, 128>}, {pipeline_mode = #tpu.pipeline_mode<synchronous>, transform_indices = @transform_5, window_bounds = array<i64: 128, 1152>}, {pipeline_mode = #tpu.pipeline_mode<synchronous>, transform_indices = @transform_6, window_bounds = array<i64: 136, 128>}, {transform_indices = @transform_7, window_bounds = array<i64: 1, 128, 128>}]} {
    %c0 = arith.constant 0 : index
    %c0_0 = arith.constant 0 : index
    %c0_1 = arith.constant 0 : index
    %0 = vector.load %arg1[%c0, %c0_0, %c0_1] : memref<1x128x8xbf16, #tpu.memory_space<vmem>>, vector<1x128x8xbf16>
    %1 = vector.shape_cast %0 : vector<1x128x8xbf16> to vector<128x8xbf16>
    %c0_2 = arith.constant 0 : index
    %c0_3 = arith.constant 0 : index
    %2 = vector.load %arg5[%c0_2, %c0_3] : memref<168x128xbf16, #tpu.memory_space<vmem>>, vector<8x128xbf16>
    %cst = arith.constant dense<0.000000e+00> : vector<128x128xf32>
    %3 = tpu.matmul %1, %2, %cst {dimension_numbers = #tpu.dot_dimension_numbers<[1], [0], [0], [1], [0, 0, 1, 1], [], []>} : vector<128x8xbf16>, vector<8x128xbf16>, vector<128x128xf32> -> vector<128x128xf32>
    %c0_4 = arith.constant 0 : index
    %c0_5 = arith.constant 0 : index
    %c0_6 = arith.constant 0 : index
    %4 = vector.load %arg2[%c0_4, %c0_5, %c0_6] : memref<1x1x128xf32, #tpu.memory_space<vmem>>, vector<1x1x128xf32>
    %5 = vector.shape_cast %4 : vector<1x1x128xf32> to vector<1x128xf32>
    %6 = vector.broadcast %5 : vector<1x128xf32> to vector<128x128xf32>
    %7 = arith.addf %3, %6 : vector<128x128xf32>
    %c0_7 = arith.constant 0 : index
    %c0_8 = arith.constant 0 : index
    %c0_9 = arith.constant 0 : index
    %8 = vector.load %arg3[%c0_7, %c0_8, %c0_9] : memref<1x128x160xbf16, #tpu.memory_space<vmem>>, vector<1x128x160xbf16>
    %9 = vector.shape_cast %8 : vector<1x128x160xbf16> to vector<128x160xbf16>
    %c8 = arith.constant 8 : index
    %c0_10 = arith.constant 0 : index
    %10 = vector.load %arg5[%c8, %c0_10] : memref<168x128xbf16, #tpu.memory_space<vmem>>, vector<160x128xbf16>
    %cst_11 = arith.constant dense<0.000000e+00> : vector<128x128xf32>
    %11 = tpu.matmul %9, %10, %cst_11 {dimension_numbers = #tpu.dot_dimension_numbers<[1], [0], [0], [1], [0, 0, 1, 1], [], []>} : vector<128x160xbf16>, vector<160x128xbf16>, vector<128x128xf32> -> vector<128x128xf32>
    %c8_12 = arith.constant 8 : index
    %c0_13 = arith.constant 0 : index
    %12 = vector.load %arg7[%c8_12, %c0_13] : memref<136x128xf32, #tpu.memory_space<vmem>>, vector<128x128xf32>
    %13 = arith.addf %11, %12 : vector<128x128xf32>
    %14 = tpu.iota {dimensions = array<i32: 0>} : vector<128x128xi32>
    %c17_i32 = arith.constant 17 : i32
    %15 = vector.broadcast %c17_i32 : i32 to vector<128x128xi32>
    %16 = arith.cmpi sge, %14, %15 : vector<128x128xi32>
    %c21_i32 = arith.constant 21 : i32
    %17 = vector.broadcast %c21_i32 : i32 to vector<128x128xi32>
    %18 = arith.cmpi slt, %14, %17 : vector<128x128xi32>
    %19 = arith.andi %16, %18 : vector<128x128xi1>
    %20 = arith.mulf %13, %13 : vector<128x128xf32>
    %21 = arith.mulf %13, %20 : vector<128x128xf32>
    %cst_14 = arith.constant 4.471500e-02 : f32
    %22 = vector.broadcast %cst_14 : f32 to vector<128x128xf32>
    %23 = arith.mulf %22, %21 : vector<128x128xf32>
    %24 = arith.addf %13, %23 : vector<128x128xf32>
    %cst_15 = arith.constant 0.797884583 : f32
    %25 = vector.broadcast %cst_15 : f32 to vector<128x128xf32>
    %26 = arith.mulf %25, %24 : vector<128x128xf32>
    %27 = math.tanh %26 : vector<128x128xf32>
    %cst_16 = arith.constant 1.000000e+00 : f32
    %28 = vector.broadcast %cst_16 : f32 to vector<128x128xf32>
    %29 = arith.addf %28, %27 : vector<128x128xf32>
    %cst_17 = arith.constant 5.000000e-01 : f32
    %30 = vector.broadcast %cst_17 : f32 to vector<128x128xf32>
    %31 = arith.mulf %30, %29 : vector<128x128xf32>
    %32 = arith.mulf %13, %31 : vector<128x128xf32>
    %33 = arith.select %19, %32, %13 : vector<128x128xi1>, vector<128x128xf32>
    %34 = arith.truncf %33 : vector<128x128xf32> to vector<128x128xbf16>
    %35 = arith.truncf %7 : vector<128x128xf32> to vector<128x128xbf16>
    %c0_18 = arith.constant 0 : index
    %c0_19 = arith.constant 0 : index
    %36 = vector.load %arg6[%c0_18, %c0_19] : memref<128x1152xbf16, #tpu.memory_space<vmem>>, vector<128x128xbf16>
    %cst_20 = arith.constant dense<0.000000e+00> : vector<128x128xf32>
    %37 = tpu.matmul %35, %36, %cst_20 {dimension_numbers = #tpu.dot_dimension_numbers<[1], [0], [0], [1], [0, 0, 1, 1], [], []>} : vector<128x128xbf16>, vector<128x128xbf16>, vector<128x128xf32> -> vector<128x128xf32>
    %c0_21 = arith.constant 0 : index
    %c0_22 = arith.constant 0 : index
    %38 = vector.load %arg7[%c0_21, %c0_22] : memref<136x128xf32, #tpu.memory_space<vmem>>, vector<1x128xf32>
    %39 = vector.broadcast %38 : vector<1x128xf32> to vector<128x128xf32>
    %40 = arith.addf %37, %39 : vector<128x128xf32>
    %c0_23 = arith.constant 0 : index
    %c128 = arith.constant 128 : index
    %41 = vector.load %arg6[%c0_23, %c128] : memref<128x1152xbf16, #tpu.memory_space<vmem>>, vector<128x128xbf16>
    %cst_24 = arith.constant dense<0.000000e+00> : vector<128x128xf32>
    %42 = tpu.matmul %34, %41, %cst_24 {dimension_numbers = #tpu.dot_dimension_numbers<[1], [0], [0], [1], [0, 0, 1, 1], [], []>} : vector<128x128xbf16>, vector<128x128xbf16>, vector<128x128xf32> -> vector<128x128xf32>
    %c1 = arith.constant 1 : index
    %c0_25 = arith.constant 0 : index
    %43 = vector.load %arg7[%c1, %c0_25] : memref<136x128xf32, #tpu.memory_space<vmem>>, vector<1x128xf32>
    %44 = vector.broadcast %43 : vector<1x128xf32> to vector<128x128xf32>
    %45 = arith.addf %42, %44 : vector<128x128xf32>
    %c0_26 = arith.constant 0 : index
    %c256 = arith.constant 256 : index
    %46 = vector.load %arg6[%c0_26, %c256] : memref<128x1152xbf16, #tpu.memory_space<vmem>>, vector<128x128xbf16>
    %cst_27 = arith.constant dense<0.000000e+00> : vector<128x128xf32>
    %47 = tpu.matmul %34, %46, %cst_27 {dimension_numbers = #tpu.dot_dimension_numbers<[1], [0], [0], [1], [0, 0, 1, 1], [], []>} : vector<128x128xbf16>, vector<128x128xbf16>, vector<128x128xf32> -> vector<128x128xf32>
    %c2 = arith.constant 2 : index
    %c0_28 = arith.constant 0 : index
    %48 = vector.load %arg7[%c2, %c0_28] : memref<136x128xf32, #tpu.memory_space<vmem>>, vector<1x128xf32>
    %49 = vector.broadcast %48 : vector<1x128xf32> to vector<128x128xf32>
    %50 = arith.addf %47, %49 : vector<128x128xf32>
    %51 = arith.truncf %40 : vector<128x128xf32> to vector<128x128xbf16>
    %52 = arith.truncf %45 : vector<128x128xf32> to vector<128x128xbf16>
    %cst_29 = arith.constant dense<0.000000e+00> : vector<128x128xf32>
    %53 = tpu.matmul %51, %52, %cst_29 {dimension_numbers = #tpu.dot_dimension_numbers<[1], [1], [0], [0], [0, 0, 1, 0], [], []>} : vector<128x128xbf16>, vector<128x128xbf16>, vector<128x128xf32> -> vector<128x128xf32>
    %c0_30 = arith.constant 0 : index
    %c0_31 = arith.constant 0 : index
    %c0_32 = arith.constant 0 : index
    %54 = vector.load %arg4[%c0_30, %c0_31, %c0_32] : memref<1x1x128xf32, #tpu.memory_space<vmem>>, vector<1x1x128xf32>
    %55 = vector.shape_cast %54 : vector<1x1x128xf32> to vector<1x128xf32>
    %56 = vector.broadcast %55 : vector<1x128xf32> to vector<128x128xf32>
    %57 = arith.addf %53, %56 : vector<128x128xf32>
    %cst_33 = arith.constant dense<0xFF800000> : vector<128xf32>
    %58 = vector.multi_reduction <maximumf>, %57, %cst_33 [1] : vector<128x128xf32> to vector<128xf32>
    %59 = vector.shape_cast %58 : vector<128xf32> to vector<128x1xf32>
    %60 = vector.broadcast %59 : vector<128x1xf32> to vector<128x128xf32>
    %61 = arith.subf %57, %60 : vector<128x128xf32>
    %62 = math.exp %61 : vector<128x128xf32>
    %cst_34 = arith.constant dense<0.000000e+00> : vector<128xf32>
    %63 = vector.multi_reduction <add>, %62, %cst_34 [1] : vector<128x128xf32> to vector<128xf32>
    %64 = vector.shape_cast %63 : vector<128xf32> to vector<128x1xf32>
    %65 = tpu.reciprocal %64 {approx = true} : vector<128x1xf32> -> vector<128x1xf32>
    %66 = vector.broadcast %65 : vector<128x1xf32> to vector<128x128xf32>
    %67 = arith.mulf %62, %66 : vector<128x128xf32>
    %68 = arith.truncf %67 : vector<128x128xf32> to vector<128x128xbf16>
    %69 = arith.truncf %50 : vector<128x128xf32> to vector<128x128xbf16>
    %cst_35 = arith.constant dense<0.000000e+00> : vector<128x128xf32>
    %70 = tpu.matmul %68, %69, %cst_35 {dimension_numbers = #tpu.dot_dimension_numbers<[1], [0], [0], [1], [0, 0, 1, 1], [], []>} : vector<128x128xbf16>, vector<128x128xbf16>, vector<128x128xf32> -> vector<128x128xf32>
    %71 = arith.truncf %70 : vector<128x128xf32> to vector<128x128xbf16>
    %c0_36 = arith.constant 0 : index
    %c384 = arith.constant 384 : index
    %72 = vector.load %arg6[%c0_36, %c384] : memref<128x1152xbf16, #tpu.memory_space<vmem>>, vector<128x128xbf16>
    %cst_37 = arith.constant dense<0.000000e+00> : vector<128x128xf32>
    %73 = tpu.matmul %71, %72, %cst_37 {dimension_numbers = #tpu.dot_dimension_numbers<[1], [0], [0], [1], [0, 0, 1, 1], [], []>} : vector<128x128xbf16>, vector<128x128xbf16>, vector<128x128xf32> -> vector<128x128xf32>
    %74 = arith.addf %7, %73 : vector<128x128xf32>
    %c3 = arith.constant 3 : index
    %c0_38 = arith.constant 0 : index
    %75 = vector.load %arg7[%c3, %c0_38] : memref<136x128xf32, #tpu.memory_space<vmem>>, vector<1x128xf32>
    %76 = vector.broadcast %75 : vector<1x128xf32> to vector<128x128xf32>
    %77 = arith.addf %74, %76 : vector<128x128xf32>
    %78 = arith.truncf %77 : vector<128x128xf32> to vector<128x128xbf16>
    %c0_39 = arith.constant 0 : index
    %c512 = arith.constant 512 : index
    %79 = vector.load %arg6[%c0_39, %c512] : memref<128x1152xbf16, #tpu.memory_space<vmem>>, vector<128x128xbf16>
    %cst_40 = arith.constant dense<0.000000e+00> : vector<128x128xf32>
    %80 = tpu.matmul %78, %79, %cst_40 {dimension_numbers = #tpu.dot_dimension_numbers<[1], [0], [0], [1], [0, 0, 1, 1], [], []>} : vector<128x128xbf16>, vector<128x128xbf16>, vector<128x128xf32> -> vector<128x128xf32>
    %c4 = arith.constant 4 : index
    %c0_41 = arith.constant 0 : index
    %81 = vector.load %arg7[%c4, %c0_41] : memref<136x128xf32, #tpu.memory_space<vmem>>, vector<1x128xf32>
    %82 = vector.broadcast %81 : vector<1x128xf32> to vector<128x128xf32>
    %83 = arith.addf %80, %82 : vector<128x128xf32>
    %84 = arith.mulf %83, %83 : vector<128x128xf32>
    %85 = arith.mulf %83, %84 : vector<128x128xf32>
    %cst_42 = arith.constant 4.471500e-02 : f32
    %86 = vector.broadcast %cst_42 : f32 to vector<128x128xf32>
    %87 = arith.mulf %86, %85 : vector<128x128xf32>
    %88 = arith.addf %83, %87 : vector<128x128xf32>
    %cst_43 = arith.constant 0.797884583 : f32
    %89 = vector.broadcast %cst_43 : f32 to vector<128x128xf32>
    %90 = arith.mulf %89, %88 : vector<128x128xf32>
    %91 = math.tanh %90 : vector<128x128xf32>
    %cst_44 = arith.constant 1.000000e+00 : f32
    %92 = vector.broadcast %cst_44 : f32 to vector<128x128xf32>
    %93 = arith.addf %92, %91 : vector<128x128xf32>
    %cst_45 = arith.constant 5.000000e-01 : f32
    %94 = vector.broadcast %cst_45 : f32 to vector<128x128xf32>
    %95 = arith.mulf %94, %93 : vector<128x128xf32>
    %96 = arith.mulf %83, %95 : vector<128x128xf32>
    %97 = arith.truncf %96 : vector<128x128xf32> to vector<128x128xbf16>
    %c0_46 = arith.constant 0 : index
    %c640 = arith.constant 640 : index
    %98 = vector.load %arg6[%c0_46, %c640] : memref<128x1152xbf16, #tpu.memory_space<vmem>>, vector<128x128xbf16>
    %cst_47 = arith.constant dense<0.000000e+00> : vector<128x128xf32>
    %99 = tpu.matmul %78, %98, %cst_47 {dimension_numbers = #tpu.dot_dimension_numbers<[1], [0], [0], [1], [0, 0, 1, 1], [], []>} : vector<128x128xbf16>, vector<128x128xbf16>, vector<128x128xf32> -> vector<128x128xf32>
    %c5 = arith.constant 5 : index
    %c0_48 = arith.constant 0 : index
    %100 = vector.load %arg7[%c5, %c0_48] : memref<136x128xf32, #tpu.memory_space<vmem>>, vector<1x128xf32>
    %101 = vector.broadcast %100 : vector<1x128xf32> to vector<128x128xf32>
    %102 = arith.addf %99, %101 : vector<128x128xf32>
    %103 = arith.mulf %102, %102 : vector<128x128xf32>
    %104 = arith.mulf %102, %103 : vector<128x128xf32>
    %cst_49 = arith.constant 4.471500e-02 : f32
    %105 = vector.broadcast %cst_49 : f32 to vector<128x128xf32>
    %106 = arith.mulf %105, %104 : vector<128x128xf32>
    %107 = arith.addf %102, %106 : vector<128x128xf32>
    %cst_50 = arith.constant 0.797884583 : f32
    %108 = vector.broadcast %cst_50 : f32 to vector<128x128xf32>
    %109 = arith.mulf %108, %107 : vector<128x128xf32>
    %110 = math.tanh %109 : vector<128x128xf32>
    %cst_51 = arith.constant 1.000000e+00 : f32
    %111 = vector.broadcast %cst_51 : f32 to vector<128x128xf32>
    %112 = arith.addf %111, %110 : vector<128x128xf32>
    %cst_52 = arith.constant 5.000000e-01 : f32
    %113 = vector.broadcast %cst_52 : f32 to vector<128x128xf32>
    %114 = arith.mulf %113, %112 : vector<128x128xf32>
    %115 = arith.mulf %102, %114 : vector<128x128xf32>
    %116 = arith.truncf %115 : vector<128x128xf32> to vector<128x128xbf16>
    %c0_53 = arith.constant 0 : index
    %c768 = arith.constant 768 : index
    %117 = vector.load %arg6[%c0_53, %c768] : memref<128x1152xbf16, #tpu.memory_space<vmem>>, vector<128x128xbf16>
    %cst_54 = arith.constant dense<0.000000e+00> : vector<128x128xf32>
    %118 = tpu.matmul %97, %117, %cst_54 {dimension_numbers = #tpu.dot_dimension_numbers<[1], [0], [0], [1], [0, 0, 1, 1], [], []>} : vector<128x128xbf16>, vector<128x128xbf16>, vector<128x128xf32> -> vector<128x128xf32>
    %c0_55 = arith.constant 0 : index
    %c896 = arith.constant 896 : index
    %119 = vector.load %arg6[%c0_55, %c896] : memref<128x1152xbf16, #tpu.memory_space<vmem>>, vector<128x128xbf16>
    %cst_56 = arith.constant dense<0.000000e+00> : vector<128x128xf32>
    %120 = tpu.matmul %116, %119, %cst_56 {dimension_numbers = #tpu.dot_dimension_numbers<[1], [0], [0], [1], [0, 0, 1, 1], [], []>} : vector<128x128xbf16>, vector<128x128xbf16>, vector<128x128xf32> -> vector<128x128xf32>
    %121 = arith.addf %118, %120 : vector<128x128xf32>
    %c6 = arith.constant 6 : index
    %c0_57 = arith.constant 0 : index
    %122 = vector.load %arg7[%c6, %c0_57] : memref<136x128xf32, #tpu.memory_space<vmem>>, vector<1x128xf32>
    %123 = vector.broadcast %122 : vector<1x128xf32> to vector<128x128xf32>
    %124 = arith.addf %121, %123 : vector<128x128xf32>
    %125 = arith.addf %77, %124 : vector<128x128xf32>
    %126 = arith.truncf %125 : vector<128x128xf32> to vector<128x128xbf16>
    %c0_58 = arith.constant 0 : index
    %c1024 = arith.constant 1024 : index
    %127 = vector.load %arg6[%c0_58, %c1024] : memref<128x1152xbf16, #tpu.memory_space<vmem>>, vector<128x128xbf16>
    %cst_59 = arith.constant dense<0.000000e+00> : vector<128x128xf32>
    %128 = tpu.matmul %126, %127, %cst_59 {dimension_numbers = #tpu.dot_dimension_numbers<[1], [0], [0], [1], [0, 0, 1, 1], [], []>} : vector<128x128xbf16>, vector<128x128xbf16>, vector<128x128xf32> -> vector<128x128xf32>
    %c7 = arith.constant 7 : index
    %c0_60 = arith.constant 0 : index
    %129 = vector.load %arg7[%c7, %c0_60] : memref<136x128xf32, #tpu.memory_space<vmem>>, vector<1x128xf32>
    %130 = vector.broadcast %129 : vector<1x128xf32> to vector<128x128xf32>
    %131 = arith.addf %128, %130 : vector<128x128xf32>
    %132 = arith.truncf %131 : vector<128x128xf32> to vector<128x128xbf16>
    %c0_61 = arith.constant 0 : index
    %c0_62 = arith.constant 0 : index
    %c0_63 = arith.constant 0 : index
    %133 = vector.load %arg8[%c0_61, %c0_62, %c0_63] : memref<1x128x128xbf16, #tpu.memory_space<vmem>>, vector<1x128x128xbf16>
    %134 = vector.shape_cast %133 : vector<1x128x128xbf16> to vector<128x128xbf16>
    %135 = vector.shape_cast %132 : vector<128x128xbf16> to vector<1x128x128xbf16>
    tpu.vector_store %arg8[%c0_61, %c0_62, %c0_63], %135 {strides = array<i32>} : memref<1x128x128xbf16, #tpu.memory_space<vmem>>, vector<1x128x128xbf16>,
    return
  }
  func.func @transform_0(%arg0: i32) -> (i32, i32, i32) {
    %c0_i32 = arith.constant 0 : i32
    %c0_i32_0 = arith.constant 0 : i32
    %c0_i32_1 = arith.constant 0 : i32
    return %arg0, %c0_i32, %c0_i32_0 : i32, i32, i32
  }
  func.func @transform_1(%arg0: i32) -> (i32, i32, i32) {
    %c0_i32 = arith.constant 0 : i32
    %c0_i32_0 = arith.constant 0 : i32
    %c0_i32_1 = arith.constant 0 : i32
    return %arg0, %c0_i32, %c0_i32_0 : i32, i32, i32
  }
  func.func @transform_2(%arg0: i32) -> (i32, i32, i32) {
    %c0_i32 = arith.constant 0 : i32
    %c0_i32_0 = arith.constant 0 : i32
    %c0_i32_1 = arith.constant 0 : i32
    return %arg0, %c0_i32, %c0_i32_0 : i32, i32, i32
  }
  func.func @transform_3(%arg0: i32) -> (i32, i32, i32) {
    %c0_i32 = arith.constant 0 : i32
    %c0_i32_0 = arith.constant 0 : i32
    %c0_i32_1 = arith.constant 0 : i32
    return %arg0, %c0_i32, %c0_i32_0 : i32, i32, i32
  }
  func.func @transform_4(%arg0: i32) -> (i32, i32) {
    %c0_i32 = arith.constant 0 : i32
    %c0_i32_0 = arith.constant 0 : i32
    %c0_i32_1 = arith.constant 0 : i32
    return %c0_i32, %c0_i32_0 : i32, i32
  }
  func.func @transform_5(%arg0: i32) -> (i32, i32) {
    %c0_i32 = arith.constant 0 : i32
    %c0_i32_0 = arith.constant 0 : i32
    %c0_i32_1 = arith.constant 0 : i32
    return %c0_i32, %c0_i32_0 : i32, i32
  }
  func.func @transform_6(%arg0: i32) -> (i32, i32) {
    %c0_i32 = arith.constant 0 : i32
    %c0_i32_0 = arith.constant 0 : i32
    %c0_i32_1 = arith.constant 0 : i32
    return %c0_i32, %c0_i32_0 : i32, i32
  }
  func.func @transform_7(%arg0: i32) -> (i32, i32, i32) {
    %c0_i32 = arith.constant 0 : i32
    %c0_i32_0 = arith.constant 0 : i32
    %c0_i32_1 = arith.constant 0 : i32
    return %arg0, %c0_i32, %c0_i32_0 : i32, i32, i32
  }
}

</mosaic_0001>

<llo_original>
// kernel: tpu_custom_call.1
$region0: #{tpu_custom_call.1}
  #allocation0 [shape = 'u32[]', space=smem, size = 0x4, offset = 0x4, fixed_abs, tag = 'smem constant byte address 0x4 - core index']
  #allocation1 [shape = 'u32[144,128]{1,0:T(1,128)}', space=vmem, size = 0x12000, scoped, tag = 'internal scratch']
  %s0 = inlined_call_operand.vmem [shape: bf16[2,128,8], index: 0, kind: input, shape index: {}]
  %s1 = inlined_call_operand.vmem [shape: f32[2,1,128], index: 1, kind: input, shape index: {}]
  %s2 = inlined_call_operand.vmem [shape: bf16[2,128,160], index: 2, kind: input, shape index: {}]
  %s3 = inlined_call_operand.vmem [shape: f32[2,1,128], index: 3, kind: input, shape index: {}]
  %s4 = inlined_call_operand.vmem [shape: bf16[168,128], index: 4, kind: input, shape index: {}]
  %s5 = inlined_call_operand.hbm [shape: bf16[128,1152], index: 5, kind: input, shape index: {}]
  %s6 = inlined_call_operand.vmem [shape: f32[136,128], index: 6, kind: input, shape index: {}]
  %s7 = inlined_call_operand.hbm [shape: bf16[2,128,128], index: 7, kind: output, shape index: {}]
  %s8 = sld [smem:[#allocation0]]
  $region65: #{tpu_custom_call.1} parent=0
    _
  %s10 = ssub.s32 1, %s8
  %s11 = scalar_select 0, %s10, %s8
  $region1: #{tpu_custom_call.1} parent=0
    #allocation2 [shape = 'u8[294912]{0}', space=vmem, size = 0x48000, scoped, tag = 'input window, operand 5, single buffered']
    #allocation3 [shape = 's32[2]{0}', space=sflag, size = 0x8, scoped, tag = 'scoped memory for tpu_custom_call.1']
    #allocation4 [shape = 's32[2]{0}', space=sflag, size = 0x8, scoped, tag = 'scoped memory for tpu_custom_call.1']
    #allocation5 [shape = 'u8[65536]{0}', space=vmem, size = 0x10000, scoped, tag = 'output window, operand 0']
    %12 = vsyncpa [#allocation3], 0
    %13 = vsyncpa [#allocation4], 0
    %s14 = scalar_lea.sflag [#allocation4], 1
    %15 = vsyncpa %s14, 0
    loop: start=0, step=1, limit=4
    $region2: #{tpu_custom_call.1} parent=1 // loop_pre_header
      _
    $region3: #{tpu_custom_call.1} parent=1 // loop_header
      %s17 = sphi 0, %s21
      %p18 = scmp.ge.s32.totalorder %s17, 4
      %s27 = sphi 0, %s29
      %s30 = sphi 0, %s27
      %s31 = sphi 0, %s30
      %s47 = sphi 0, %s31
      %s53 = sphi 0, %s55
      %s56 = sphi 0, %s53
      %s57 = sphi 0, %s56
      %s73 = sphi 0, %s57
      %s79 = sphi 0, %s81
      %s82 = sphi 0, %s79
      %s83 = sphi 0, %s82
      %s99 = sphi 0, %s83
      %s105 = sphi 0, %s107
      %s108 = sphi 0, %s105
      %s109 = sphi 0, %s108
      %s125 = sphi 0, %s109
      %s129 = sphi 0, %s129
      %s131 = sphi 0, %s129
      %s132 = sphi 0, %s131
      %s146 = sphi 0, %s132
      %s150 = sphi 0, %s150
      %s152 = sphi 0, %s150
      %s153 = sphi 0, %s152
      %s167 = sphi 0, %s153
      %s171 = sphi 0, %s171
      %s173 = sphi 0, %s171
      %s174 = sphi 0, %s173
      %s188 = sphi 0, %s174
      %s194 = sphi 0, %s196
      %s197 = sphi 0, %s194
      %s198 = sphi 0, %s197
      %s214 = sphi 0, %s198
    $region4: #{tpu_custom_call.1} parent=1 // loop_header_branch
      %20 = sbr.rel (%p18) target = $region8
    $region5: #{tpu_custom_call.1} parent=1 // loop_body
      %s22 = ssub.s32 %s17, 1
      %s23 = ssub.s32 %s17, 2
      %s24 = sadd.s32 %s17, 1
      %s25 = ssub.s32 %s17, %s24
      %p26 = scmp.eq.s32.totalorder %s25, 0
      %s28 = sadd.s32 %s27, 1
      %s29 = scalar_select %p26, %s27, %s28
      %p32 = pneg %p26
      %p33 = scmp.eq.s32.totalorder %s17, 1
      %p34 = por %p32, %p33
      %p35 = scmp.ne.s32.totalorder %s27, %s30
      %p36 = scmp.eq.s32.totalorder %s17, 0
      %p37 = por %p35, %p36
      %p38 = scmp.ne.s32.totalorder %s27, %s30
      %p39 = scmp.eq.s32.totalorder %s22, 1
      %p40 = por %p38, %p39
      %p41 = scmp.ne.s32.totalorder %s30, %s31
      %p42 = scmp.eq.s32.totalorder %s22, 0
      %p43 = por %p41, %p42
      %p44 = scmp.ne.s32.totalorder %s30, %s31
      %p45 = scmp.eq.s32.totalorder %s23, 1
      %p46 = por %p44, %p45
      %p48 = scmp.ne.s32.totalorder %s31, %s47
      %p49 = scmp.eq.s32.totalorder %s23, 0
      %p50 = por %p48, %p49
      %s51 = ssub.s32 %s17, %s24
      %p52 = scmp.eq.s32.totalorder %s51, 0
      %s54 = sadd.s32 %s53, 1
      %s55 = scalar_select %p52, %s53, %s54
      %p58 = pneg %p52
      %p59 = scmp.eq.s32.totalorder %s17, 1
      %p60 = por %p58, %p59
      %p61 = scmp.ne.s32.totalorder %s53, %s56
      %p62 = scmp.eq.s32.totalorder %s17, 0
      %p63 = por %p61, %p62
      %p64 = scmp.ne.s32.totalorder %s53, %s56
      %p65 = scmp.eq.s32.totalorder %s22, 1
      %p66 = por %p64, %p65
      %p67 = scmp.ne.s32.totalorder %s56, %s57
      %p68 = scmp.eq.s32.totalorder %s22, 0
      %p69 = por %p67, %p68
      %p70 = scmp.ne.s32.totalorder %s56, %s57
      %p71 = scmp.eq.s32.totalorder %s23, 1
      %p72 = por %p70, %p71
      %p74 = scmp.ne.s32.totalorder %s57, %s73
      %p75 = scmp.eq.s32.totalorder %s23, 0
      %p76 = por %p74, %p75
      %s77 = ssub.s32 %s17, %s24
      %p78 = scmp.eq.s32.totalorder %s77, 0
      %s80 = sadd.s32 %s79, 1
      %s81 = scalar_select %p78, %s79, %s80
      %p84 = pneg %p78
      %p85 = scmp.eq.s32.totalorder %s17, 1
      %p86 = por %p84, %p85
      %p87 = scmp.ne.s32.totalorder %s79, %s82
      %p88 = scmp.eq.s32.totalorder %s17, 0
      %p89 = por %p87, %p88
      %p90 = scmp.ne.s32.totalorder %s79, %s82
      %p91 = scmp.eq.s32.totalorder %s22, 1
      %p92 = por %p90, %p91
      %p93 = scmp.ne.s32.totalorder %s82, %s83
      %p94 = scmp.eq.s32.totalorder %s22, 0
      %p95 = por %p93, %p94
      %p96 = scmp.ne.s32.totalorder %s82, %s83
      %p97 = scmp.eq.s32.totalorder %s23, 1
      %p98 = por %p96, %p97
      %p100 = scmp.ne.s32.totalorder %s83, %s99
      %p101 = scmp.eq.s32.totalorder %s23, 0
      %p102 = por %p100, %p101
      %s103 = ssub.s32 %s17, %s24
      %p104 = scmp.eq.s32.totalorder %s103, 0
      %s106 = sadd.s32 %s105, 1
      %s107 = scalar_select %p104, %s105, %s106
      %p110 = pneg %p104
      %p111 = scmp.eq.s32.totalorder %s17, 1
      %p112 = por %p110, %p111
      %p113 = scmp.ne.s32.totalorder %s105, %s108
      %p114 = scmp.eq.s32.totalorder %s17, 0
      %p115 = por %p113, %p114
      %p116 = scmp.ne.s32.totalorder %s105, %s108
      %p117 = scmp.eq.s32.totalorder %s22, 1
      %p118 = por %p116, %p117
      %p119 = scmp.ne.s32.totalorder %s108, %s109
      %p120 = scmp.eq.s32.totalorder %s22, 0
      %p121 = por %p119, %p120
      %p122 = scmp.ne.s32.totalorder %s108, %s109
      %p123 = scmp.eq.s32.totalorder %s23, 1
      %p124 = por %p122, %p123
      %p126 = scmp.ne.s32.totalorder %s109, %s125
      %p127 = scmp.eq.s32.totalorder %s23, 0
      %p128 = por %p126, %p127
      %s130 = sadd.s32 %s129, 1
      %p133 = scmp.eq.s32.totalorder %s17, 1
      %p134 = scmp.ne.s32.totalorder %s129, %s131
      %p135 = scmp.eq.s32.totalorder %s17, 0
      %p136 = por %p134, %p135
      %p137 = scmp.ne.s32.totalorder %s129, %s131
      %p138 = scmp.eq.s32.totalorder %s22, 1
      %p139 = por %p137, %p138
      %p140 = scmp.ne.s32.totalorder %s131, %s132
      %p141 = scmp.eq.s32.totalorder %s22, 0
      %p142 = por %p140, %p141
      %p143 = scmp.ne.s32.totalorder %s131, %s132
      %p144 = scmp.eq.s32.totalorder %s23, 1
      %p145 = por %p143, %p144
      %p147 = scmp.ne.s32.totalorder %s132, %s146
      %p148 = scmp.eq.s32.totalorder %s23, 0
      %p149 = por %p147, %p148
      %s151 = sadd.s32 %s150, 1
      %p154 = scmp.eq.s32.totalorder %s17, 1
      %p155 = scmp.ne.s32.totalorder %s150, %s152
      %p156 = scmp.eq.s32.totalorder %s17, 0
      %p157 = por %p155, %p156
      %p158 = scmp.ne.s32.totalorder %s150, %s152
      %p159 = scmp.eq.s32.totalorder %s22, 1
      %p160 = por %p158, %p159
      %p161 = scmp.ne.s32.totalorder %s152, %s153
      %p162 = scmp.eq.s32.totalorder %s22, 0
      %p163 = por %p161, %p162
      %p164 = scmp.ne.s32.totalorder %s152, %s153
      %p165 = scmp.eq.s32.totalorder %s23, 1
      %p166 = por %p164, %p165
      %p168 = scmp.ne.s32.totalorder %s153, %s167
      %p169 = scmp.eq.s32.totalorder %s23, 0
      %p170 = por %p168, %p169
      %s172 = sadd.s32 %s171, 1
      %p175 = scmp.eq.s32.totalorder %s17, 1
      %p176 = scmp.ne.s32.totalorder %s171, %s173
      %p177 = scmp.eq.s32.totalorder %s17, 0
      %p178 = por %p176, %p177
      %p179 = scmp.ne.s32.totalorder %s171, %s173
      %p180 = scmp.eq.s32.totalorder %s22, 1
      %p181 = por %p179, %p180
      %p182 = scmp.ne.s32.totalorder %s173, %s174
      %p183 = scmp.eq.s32.totalorder %s22, 0
      %p184 = por %p182, %p183
      %p185 = scmp.ne.s32.totalorder %s173, %s174
      %p186 = scmp.eq.s32.totalorder %s23, 1
      %p187 = por %p185, %p186
      %p189 = scmp.ne.s32.totalorder %s174, %s188
      %p190 = scmp.eq.s32.totalorder %s23, 0
      %p191 = por %p189, %p190
      %s192 = ssub.s32 %s17, %s24
      %p193 = scmp.eq.s32.totalorder %s192, 0
      %s195 = sadd.s32 %s194, 1
      %s196 = scalar_select %p193, %s194, %s195
      %p199 = pneg %p193
      %p200 = scmp.eq.s32.totalorder %s17, 1
      %p201 = por %p199, %p200
      %p202 = scmp.ne.s32.totalorder %s194, %s197
      %p203 = scmp.eq.s32.totalorder %s17, 0
      %p204 = por %p202, %p203
      %p205 = scmp.ne.s32.totalorder %s194, %s197
      %p206 = scmp.eq.s32.totalorder %s22, 1
      %p207 = por %p205, %p206
      %p208 = scmp.ne.s32.totalorder %s197, %s198
      %p209 = scmp.eq.s32.totalorder %s22, 0
      %p210 = por %p208, %p209
      %p211 = scmp.ne.s32.totalorder %s197, %s198
      %p212 = scmp.eq.s32.totalorder %s23, 1
      %p213 = por %p211, %p212
      %p215 = scmp.ne.s32.totalorder %s198, %s214
      %p216 = scmp.eq.s32.totalorder %s23, 0
      %p217 = por %p215, %p216
      %p218 = scmp.le.s32.totalorder 1, %s17
      %p219 = scmp.lt.s32.totalorder %s17, 3
      %p220 = pnand %p218, %p219
      %p221 = pneg %p220
      // Predicated region
      $region9: #{tpu_custom_call.1} parent=5 // pred_check
        _
      $region10: #{tpu_custom_call.1} parent=5 // pred_check_branch
        %223 = sbr.rel (%p220) target = $region12
      $region11: #{tpu_custom_call.1} parent=5 // pred_region
        %s224 = ssub.s32 %s17, 1
        // Predicated region
        $region13: #{tpu_custom_call.1} parent=11 // pred_check
          %p225 = pneg %p142
        $region14: #{tpu_custom_call.1} parent=11 // pred_check_branch
          %227 = sbr.rel (%p225) target = $region16
        $region15: #{tpu_custom_call.1} parent=11 // pred_region
          _
        $region16: #{tpu_custom_call.1} parent=11 // pred_fallthru
          _
        // Predicated region
        $region17: #{tpu_custom_call.1} parent=11 // pred_check
          %p228 = pneg %p163
        $region18: #{tpu_custom_call.1} parent=11 // pred_check_branch
          %230 = sbr.rel (%p228) target = $region20
        $region19: #{tpu_custom_call.1} parent=11 // pred_region
          %s232 = ssub.s32 9216, 9216
          %233 = vsyncadd [#allocation3], %s232
          %s234 = sshll.u32 [#allocation2], 4
          %s235 = int_to_ptr.vmem [resolvable:$true] %s234
          %240 = dma.hbm_to_vmem [thread:$0]  %s5, 9216, %s235, [#allocation3], 576, 576, 36
        $region20: #{tpu_custom_call.1} parent=11 // pred_fallthru
          _
        // Predicated region
        $region21: #{tpu_custom_call.1} parent=11 // pred_check
          %p241 = pneg %p184
        $region22: #{tpu_custom_call.1} parent=11 // pred_check_branch
          %243 = sbr.rel (%p241) target = $region24
        $region23: #{tpu_custom_call.1} parent=11 // pred_region
          _
        $region24: #{tpu_custom_call.1} parent=11 // pred_fallthru
          _
      $region12: #{tpu_custom_call.1} parent=5 // pred_fallthru
        _
      %p244 = scmp.lt.s32.totalorder %s17, 2
      // Predicated region
      $region25: #{tpu_custom_call.1} parent=5 // pred_check
        %p245 = pneg %p244
      $region26: #{tpu_custom_call.1} parent=5 // pred_check_branch
        %247 = sbr.rel (%p245) target = $region28
      $region27: #{tpu_custom_call.1} parent=5 // pred_region
        // Predicated region
        $region29: #{tpu_custom_call.1} parent=27 // pred_check
          %p248 = pneg %p37
        $region30: #{tpu_custom_call.1} parent=27 // pred_check_branch
          %250 = sbr.rel (%p248) target = $region32
        $region31: #{tpu_custom_call.1} parent=27 // pred_region
          %p251 = scmp.lt.s32.totalorder %s17, 1
          %s252 = scalar_select %p251, %s17, 1
          %s253 = smul.addr %s252, 16
          %s254 = smul.addr %s253, 4
          %s255 = scalar_lea.vmem %s0, %s254
        $region32: #{tpu_custom_call.1} parent=27 // pred_fallthru
          _
        // Predicated region
        $region33: #{tpu_custom_call.1} parent=27 // pred_check
          %p256 = pneg %p63
        $region34: #{tpu_custom_call.1} parent=27 // pred_check_branch
          %258 = sbr.rel (%p256) target = $region36
        $region35: #{tpu_custom_call.1} parent=27 // pred_region
          %p259 = scmp.lt.s32.totalorder %s17, 1
          %s260 = scalar_select %p259, %s17, 1
          %s261 = scalar_lea.vmem %s1, %s260
        $region36: #{tpu_custom_call.1} parent=27 // pred_fallthru
          _
        // Predicated region
        $region37: #{tpu_custom_call.1} parent=27 // pred_check
          %p262 = pneg %p89
        $region38: #{tpu_custom_call.1} parent=27 // pred_check_branch
          %264 = sbr.rel (%p262) target = $region40
        $region39: #{tpu_custom_call.1} parent=27 // pred_region
          %p265 = scmp.lt.s32.totalorder %s17, 1
          %s266 = scalar_select %p265, %s17, 1
          %s267 = smul.addr %s266, 32
          %s268 = smul.addr %s267, 4
          %s269 = scalar_lea.vmem %s2, %s268
        $region40: #{tpu_custom_call.1} parent=27 // pred_fallthru
          _
        // Predicated region
        $region41: #{tpu_custom_call.1} parent=27 // pred_check
          %p270 = pneg %p115
        $region42: #{tpu_custom_call.1} parent=27 // pred_check_branch
          %272 = sbr.rel (%p270) target = $region44
        $region43: #{tpu_custom_call.1} parent=27 // pred_region
          %p273 = scmp.lt.s32.totalorder %s17, 1
          %s274 = scalar_select %p273, %s17, 1
          %s275 = scalar_lea.vmem %s3, %s274
        $region44: #{tpu_custom_call.1} parent=27 // pred_fallthru
          _
      $region28: #{tpu_custom_call.1} parent=5 // pred_fallthru
        _
      %p276 = scmp.le.s32.totalorder 1, %s17
      %p277 = scmp.lt.s32.totalorder %s17, 3
      %p278 = pnand %p276, %p277
      %p279 = pneg %p278
      // Predicated region
      $region45: #{tpu_custom_call.1} parent=5 // pred_check
        _
      $region46: #{tpu_custom_call.1} parent=5 // pred_check_branch
        %281 = sbr.rel (%p278) target = $region48
      $region47: #{tpu_custom_call.1} parent=5 // pred_region
        %s282 = ssub.s32 %s17, 1
        // Predicated region
        $region49: #{tpu_custom_call.1} parent=47 // pred_check
          %p283 = pneg %p163
        $region50: #{tpu_custom_call.1} parent=47 // pred_check_branch
          %285 = sbr.rel (%p283) target = $region52
        $region51: #{tpu_custom_call.1} parent=47 // pred_region
          %286 = dma.done [#allocation3], 9216
        $region52: #{tpu_custom_call.1} parent=47 // pred_fallthru
          _
        %p287 = scmp.lt.s32.totalorder %s22, 1
        %s288 = scalar_select %p287, %s22, 1
        %s289 = smul.addr %s288, 16
        %s290 = smul.addr %s289, 4
        %s291 = scalar_lea.vmem %s0, %s290
        %p292 = pneg %p43
        %p293 = pneg %p40
        %p294 = scmp.lt.s32.totalorder %s22, 1
        %s295 = scalar_select %p294, %s22, 1
        %s296 = scalar_lea.vmem %s1, %s295
        %p297 = pneg %p69
        %p298 = pneg %p66
        %p299 = scmp.lt.s32.totalorder %s22, 1
        %s300 = scalar_select %p299, %s22, 1
        %s301 = smul.addr %s300, 32
        %s302 = smul.addr %s301, 4
        %s303 = scalar_lea.vmem %s2, %s302
        %p304 = pneg %p95
        %p305 = pneg %p92
        %p306 = scmp.lt.s32.totalorder %s22, 1
        %s307 = scalar_select %p306, %s22, 1
        %s308 = scalar_lea.vmem %s3, %s307
        %p309 = pneg %p121
        %p310 = pneg %p118
        %p311 = pneg %p142
        %p312 = pneg %p139
        %p313 = pneg %p163
        %p314 = pneg %p160
        %p315 = pneg %p184
        %p316 = pneg %p181
        %p317 = pneg %p210
        %p318 = pneg %p207
        %s319 = sand.u32 %s197, 1
        %s320 = scalar_lea.sflag [#allocation4], %s319
        %s321 = sand.u32 %s197, 1
        %s322 = smul.addr %s321, 64
        %s323 = scalar_lea.vmem [#allocation5], %s322
        %p324 = scmp.lt.s32.totalorder %s22, 1
        %s325 = scalar_select %p324, %s22, 1
        %s326 = smul.addr %s325, 16
        %s327 = smul.addr %s326, 4
        %s328 = scalar_lea.vmem %s0, %s327
        %p329 = scmp.lt.s32.totalorder %s22, 1
        %s330 = scalar_select %p329, %s22, 1
        %s331 = scalar_lea.vmem %s1, %s330
        %p332 = scmp.lt.s32.totalorder %s22, 1
        %s333 = scalar_select %p332, %s22, 1
        %s334 = smul.addr %s333, 32
        %s335 = smul.addr %s334, 4
        %s336 = scalar_lea.vmem %s2, %s335
        %p337 = scmp.lt.s32.totalorder %s22, 1
        %s338 = scalar_select %p337, %s22, 1
        %s339 = scalar_lea.vmem %s3, %s338
        %v341 = vld [vmem:[%s328] sm:$0xf]
        %v342 = vld [vmem:[%s328 + $0x4] sm:$0xf]
        %v343 = vld [vmem:[%s328 + $0x8] sm:$0xf]
        %v344 = vld [vmem:[%s328 + $0xc] sm:$0xf]
        %v345 = vld [vmem:[%s328 + $0x10] sm:$0xf]
        %v346 = vld [vmem:[%s328 + $0x14] sm:$0xf]
        %v347 = vld [vmem:[%s328 + $0x18] sm:$0xf]
        %v348 = vld [vmem:[%s328 + $0x1c] sm:$0xf]
        %v349 = vld [vmem:[%s328 + $0x20] sm:$0xf]
        %v350 = vld [vmem:[%s328 + $0x24] sm:$0xf]
        %v351 = vld [vmem:[%s328 + $0x28] sm:$0xf]
        %v352 = vld [vmem:[%s328 + $0x2c] sm:$0xf]
        %v353 = vld [vmem:[%s328 + $0x30] sm:$0xf]
        %v354 = vld [vmem:[%s328 + $0x34] sm:$0xf]
        %v355 = vld [vmem:[%s328 + $0x38] sm:$0xf]
        %v356 = vld [vmem:[%s328 + $0x3c] sm:$0xf]
        %v357 = vld [vmem:[%s4] sm:$0xf]
        %v358 = vld [vmem:[%s331] sm:$0x1]
        %v360 = vlaneseq
        %v361 = vshrl.u32 %v360, 7
        %v362 = vsub.s32 0, %v361
        %v363 = vrot.slane %v358, %v362
        %v381 = vunpack.c.l.b16 %v341
        %v382 = vunpack.c.l.b16 %v342
        %v383 = vunpack.c.l.b16 %v343
        %v384 = vunpack.c.l.b16 %v344
        %v385 = vunpack.c.l.b16 %v345
        %v386 = vunpack.c.l.b16 %v346
        %v387 = vunpack.c.l.b16 %v347
        %v388 = vunpack.c.l.b16 %v348
        %v389 = vunpack.c.l.b16 %v349
        %v390 = vunpack.c.l.b16 %v350
        %v391 = vunpack.c.l.b16 %v351
        %v392 = vunpack.c.l.b16 %v352
        %v393 = vunpack.c.l.b16 %v353
        %v394 = vunpack.c.l.b16 %v354
        %v395 = vunpack.c.l.b16 %v355
        %v396 = vunpack.c.l.b16 %v356
        %v397 = vpack.c.b16 %v382, %v381
        %v398 = vpack.c.b16 %v384, %v383
        %v399 = vpack.c.b16 %v386, %v385
        %v400 = vpack.c.b16 %v388, %v387
        %v401 = vpack.c.b16 %v390, %v389
        %v402 = vpack.c.b16 %v392, %v391
        %v403 = vpack.c.b16 %v394, %v393
        %v404 = vpack.c.b16 %v396, %v395
        %vm405 = vcmask 64512
        %v407 = vsel %vm405, %v397, 0
        %v410 = vsel %vm405, %v398, 0
        %v413 = vsel %vm405, %v399, 0
        %v416 = vsel %vm405, %v400, 0
        %v419 = vsel %vm405, %v401, 0
        %v422 = vsel %vm405, %v402, 0
        %v425 = vsel %vm405, %v403, 0
        %v428 = vsel %vm405, %v404, 0
        %vm430 = vcmask 1043456
        %v432 = vsel %vm430, %v357, 0
        %434 = vmatprep.subr.bf16.mxu0 0
        %435 = vmatpush1.bf16.msra.mxu0 %v432
        %436 = vmatprep.subr.bf16.mxu0 0
        %437 = vmatpush1.bf16.msra.mxu0 0
        %438 = vmatprep.subr.bf16.mxu0 0
        %439 = vmatpush1.bf16.msra.mxu0 0
        %440 = vmatprep.subr.bf16.mxu0 0
        %441 = vmatpush1.bf16.msra.mxu0 0
        %442 = vmatprep.subr.bf16.mxu0 0
        %443 = vmatpush1.bf16.msra.mxu0 0
        %444 = vmatprep.subr.bf16.mxu0 0
        %445 = vmatpush1.bf16.msra.mxu0 0
        %446 = vmatprep.subr.bf16.mxu0 0
        %447 = vmatpush1.bf16.msra.mxu0 0
        %448 = vmatprep.subr.bf16.mxu0 0
        %449 = vmatpush1.bf16.msra.mxu0 0
        %450 = vmatprep.subr.bf16.mxu0 0
        %451 = vmatpush1.bf16.msra.mxu0 0
        %452 = vmatprep.subr.bf16.mxu0 0
        %453 = vmatpush1.bf16.msra.mxu0 0
        %454 = vmatprep.subr.bf16.mxu0 0
        %455 = vmatpush1.bf16.msra.mxu0 0
        %456 = vmatprep.subr.bf16.mxu0 0
        %457 = vmatpush1.bf16.msra.mxu0 0
        %458 = vmatprep.subr.bf16.mxu0 0
        %459 = vmatpush1.bf16.msra.mxu0 0
        %460 = vmatprep.subr.bf16.mxu0 0
        %461 = vmatpush1.bf16.msra.mxu0 0
        %462 = vmatprep.subr.bf16.mxu0 0
        %463 = vmatpush1.bf16.msra.mxu0 0
        %464 = vmatprep.subr.bf16.mxu0 0
        %465 = vmatpush1.bf16.msra.mxu0 0
        %466 = vmatprep.mubr.bf16.mxu0 0
        %467 = vmatmul.mubr.bf16.gmra.mrb[0].mxu0 %v407
        %v468 = vpop.f32.mrb[0].mxu0
        %v469 = vadd.f32 %v363, %v468
        %v470 = vpop.f32.mrb[0].mxu0
        %v471 = vpop.f32.mrb[0].mxu0
        %v472 = vadd.f32 %v363, %v471
        %v473 = vpop.f32.mrb[0].mxu0
        %474 = vmatprep.mubr.bf16.mxu0 0
        %475 = vmatmul.mubr.bf16.gmra.mrb[0].mxu0 %v410
        %v476 = vpop.f32.mrb[0].mxu0
        %v477 = vadd.f32 %v363, %v476
        %v478 = vpop.f32.mrb[0].mxu0
        %v479 = vpop.f32.mrb[0].mxu0
        %v480 = vadd.f32 %v363, %v479
        %v481 = vpop.f32.mrb[0].mxu0
        %482 = vmatprep.mubr.bf16.mxu0 0
        %483 = vmatmul.mubr.bf16.gmra.mrb[0].mxu0 %v413
        %v484 = vpop.f32.mrb[0].mxu0
        %v485 = vadd.f32 %v363, %v484
        %v486 = vpop.f32.mrb[0].mxu0
        %v487 = vpop.f32.mrb[0].mxu0
        %v488 = vadd.f32 %v363, %v487
        %v489 = vpop.f32.mrb[0].mxu0
        %490 = vmatprep.mubr.bf16.mxu0 0
        %491 = vmatmul.mubr.bf16.gmra.mrb[0].mxu0 %v416
        %v492 = vpop.f32.mrb[0].mxu0
        %v493 = vadd.f32 %v363, %v492
        %v494 = vpop.f32.mrb[0].mxu0
        %v495 = vpop.f32.mrb[0].mxu0
        %v496 = vadd.f32 %v363, %v495
        %v497 = vpop.f32.mrb[0].mxu0
        %498 = vmatprep.mubr.bf16.mxu0 0
        %499 = vmatmul.mubr.bf16.gmra.mrb[0].mxu0 %v419
        %v500 = vpop.f32.mrb[0].mxu0
        %v501 = vadd.f32 %v363, %v500
        %v502 = vpop.f32.mrb[0].mxu0
        %v503 = vpop.f32.mrb[0].mxu0
        %v504 = vadd.f32 %v363, %v503
        %v505 = vpop.f32.mrb[0].mxu0
        %506 = vmatprep.mubr.bf16.mxu0 0
        %507 = vmatmul.mubr.bf16.gmra.mrb[0].mxu0 %v422
        %v508 = vpop.f32.mrb[0].mxu0
        %v509 = vadd.f32 %v363, %v508
        %v510 = vpop.f32.mrb[0].mxu0
        %v511 = vpop.f32.mrb[0].mxu0
        %v512 = vadd.f32 %v363, %v511
        %v513 = vpop.f32.mrb[0].mxu0
        %514 = vmatprep.mubr.bf16.mxu0 0
        %515 = vmatmul.mubr.bf16.gmra.mrb[0].mxu0 %v425
        %v516 = vpop.f32.mrb[0].mxu0
        %v517 = vadd.f32 %v363, %v516
        %v518 = vpop.f32.mrb[0].mxu0
        %v519 = vpop.f32.mrb[0].mxu0
        %v520 = vadd.f32 %v363, %v519
        %v521 = vpop.f32.mrb[0].mxu0
        %522 = vmatprep.mubr.bf16.mxu0 0
        %523 = vmatmul.mubr.bf16.gmra.mrb[0].mxu0 %v428
        %v524 = vpop.f32.mrb[0].mxu0
        %v525 = vadd.f32 %v363, %v524
        %v526 = vpop.f32.mrb[0].mxu0
        %v527 = vpop.f32.mrb[0].mxu0
        %v528 = vadd.f32 %v363, %v527
        %v529 = vpop.f32.mrb[0].mxu0
        %530 = vdwg.mxu0
        %v531 = vld [vmem:[%s336] sm:$0xff]
        %v532 = vld [vmem:[%s336 + $0x8] sm:$0xff]
        %v533 = vld [vmem:[%s336 + $0x10] sm:$0xff]
        %v534 = vld [vmem:[%s336 + $0x18] sm:$0xff]
        %v535 = vld [vmem:[%s336 + $0x20] sm:$0xff]
        %v536 = vld [vmem:[%s336 + $0x28] sm:$0xff]
        %v537 = vld [vmem:[%s336 + $0x30] sm:$0xff]
        %v538 = vld [vmem:[%s336 + $0x38] sm:$0xff]
        %v539 = vld [vmem:[%s336 + $0x40] sm:$0xff]
        %v540 = vld [vmem:[%s336 + $0x48] sm:$0xff]
        %v541 = vld [vmem:[%s336 + $0x50] sm:$0xff]
        %v542 = vld [vmem:[%s336 + $0x58] sm:$0xff]
        %v543 = vld [vmem:[%s336 + $0x60] sm:$0xff]
        %v544 = vld [vmem:[%s336 + $0x68] sm:$0xff]
        %v545 = vld [vmem:[%s336 + $0x70] sm:$0xff]
        %v546 = vld [vmem:[%s336 + $0x78] sm:$0xff]
        %v547 = vld [vmem:[%s4 + $0x4] sm:$0xf]
        %v548 = vld [vmem:[%s4 + $0x8] sm:$0xf]
        %v549 = vld [vmem:[%s4 + $0xc] sm:$0xf]
        %v550 = vld [vmem:[%s4 + $0x10] sm:$0xf]
        %v551 = vld [vmem:[%s4 + $0x14] sm:$0xf]
        %v552 = vld [vmem:[%s4 + $0x18] sm:$0xf]
        %v553 = vld [vmem:[%s4 + $0x1c] sm:$0xf]
        %v554 = vld [vmem:[%s4 + $0x20] sm:$0xf]
        %v555 = vld [vmem:[%s4 + $0x24] sm:$0xf]
        %v556 = vld [vmem:[%s4 + $0x28] sm:$0xf]
        %v557 = vld [vmem:[%s4 + $0x2c] sm:$0xf]
        %v558 = vld [vmem:[%s4 + $0x30] sm:$0xf]
        %v559 = vld [vmem:[%s4 + $0x34] sm:$0xf]
        %v560 = vld [vmem:[%s4 + $0x38] sm:$0xf]
        %v561 = vld [vmem:[%s4 + $0x3c] sm:$0xf]
        %v562 = vld [vmem:[%s4 + $0x40] sm:$0xf]
        %v563 = vld [vmem:[%s4 + $0x44] sm:$0xf]
        %v564 = vld [vmem:[%s4 + $0x48] sm:$0xf]
        %v565 = vld [vmem:[%s4 + $0x4c] sm:$0xf]
        %v566 = vld [vmem:[%s4 + $0x50] sm:$0xf]
        %v567 = vld [vmem:[%s6 + $0x8] sm:$0xff]
        %v568 = vld [vmem:[%s6 + $0x10] sm:$0xff]
        %v569 = vld [vmem:[%s6 + $0x18] sm:$0xff]
        %v570 = vld [vmem:[%s6 + $0x20] sm:$0xff]
        %v571 = vld [vmem:[%s6 + $0x28] sm:$0xff]
        %v572 = vld [vmem:[%s6 + $0x30] sm:$0xff]
        %v573 = vld [vmem:[%s6 + $0x38] sm:$0xff]
        %v574 = vld [vmem:[%s6 + $0x40] sm:$0xff]
        %v575 = vld [vmem:[%s6 + $0x48] sm:$0xff]
        %v576 = vld [vmem:[%s6 + $0x50] sm:$0xff]
        %v577 = vld [vmem:[%s6 + $0x58] sm:$0xff]
        %v578 = vld [vmem:[%s6 + $0x60] sm:$0xff]
        %v579 = vld [vmem:[%s6 + $0x68] sm:$0xff]
        %v580 = vld [vmem:[%s6 + $0x70] sm:$0xff]
        %v581 = vld [vmem:[%s6 + $0x78] sm:$0xff]
        %v582 = vld [vmem:[%s6 + $0x80] sm:$0xff]
        %v599 = vunpack.c.l.b16 %v531
        %v600 = vunpack.c.h.b16 %v531
        %v601 = vunpack.c.l.b16 %v532
        %v602 = vunpack.c.h.b16 %v532
        %v603 = vunpack.c.l.b16 %v533
        %v604 = vunpack.c.h.b16 %v533
        %v605 = vunpack.c.l.b16 %v534
        %v606 = vunpack.c.h.b16 %v534
        %v607 = vunpack.c.l.b16 %v535
        %v608 = vunpack.c.h.b16 %v535
        %v609 = vunpack.c.l.b16 %v536
        %v610 = vunpack.c.h.b16 %v536
        %v611 = vunpack.c.l.b16 %v537
        %v612 = vunpack.c.h.b16 %v537
        %v613 = vunpack.c.l.b16 %v538
        %v614 = vunpack.c.h.b16 %v538
        %v615 = vunpack.c.l.b16 %v539
        %v616 = vunpack.c.h.b16 %v539
        %v617 = vunpack.c.l.b16 %v540
        %v618 = vunpack.c.h.b16 %v540
        %v619 = vunpack.c.l.b16 %v541
        %v620 = vunpack.c.h.b16 %v541
        %v621 = vunpack.c.l.b16 %v542
        %v622 = vunpack.c.h.b16 %v542
        %v623 = vunpack.c.l.b16 %v543
        %v624 = vunpack.c.h.b16 %v543
        %v625 = vunpack.c.l.b16 %v544
        %v626 = vunpack.c.h.b16 %v544
        %v627 = vunpack.c.l.b16 %v545
        %v628 = vunpack.c.h.b16 %v545
        %v629 = vunpack.c.l.b16 %v546
        %v630 = vunpack.c.h.b16 %v546
        %v631 = vpack.c.b16 %v601, %v599
        %v632 = vpack.c.b16 %v602, %v600
        %v633 = vpack.c.b16 %v605, %v603
        %v634 = vpack.c.b16 %v606, %v604
        %v635 = vpack.c.b16 %v609, %v607
        %v636 = vpack.c.b16 %v610, %v608
        %v637 = vpack.c.b16 %v613, %v611
        %v638 = vpack.c.b16 %v614, %v612
        %v639 = vpack.c.b16 %v617, %v615
        %v640 = vpack.c.b16 %v618, %v616
        %v641 = vpack.c.b16 %v621, %v619
        %v642 = vpack.c.b16 %v622, %v620
        %v643 = vpack.c.b16 %v625, %v623
        %v644 = vpack.c.b16 %v626, %v624
        %v645 = vpack.c.b16 %v629, %v627
        %v646 = vpack.c.b16 %v630, %v628
        %v675 = vunpack.c.l.b16 %v547
        %v676 = vunpack.c.l.b16 %v548
        %v677 = vunpack.c.l.b16 %v549
        %v678 = vunpack.c.l.b16 %v550
        %v679 = vunpack.c.l.b16 %v551
        %v680 = vunpack.c.l.b16 %v552
        %v681 = vunpack.c.l.b16 %v553
        %v682 = vunpack.c.l.b16 %v554
        %v683 = vunpack.c.l.b16 %v555
        %v684 = vunpack.c.l.b16 %v556
        %v685 = vunpack.c.l.b16 %v557
        %v686 = vunpack.c.l.b16 %v558
        %v687 = vunpack.c.l.b16 %v559
        %v688 = vunpack.c.l.b16 %v560
        %v689 = vunpack.c.l.b16 %v561
        %v690 = vunpack.c.l.b16 %v562
        %v691 = vunpack.c.l.b16 %v563
        %v692 = vunpack.c.l.b16 %v564
        %v693 = vunpack.c.l.b16 %v565
        %v694 = vunpack.c.l.b16 %v566
        %v695 = vpack.c.b16 %v676, %v675
        %v696 = vpack.c.b16 %v678, %v677
        %v697 = vpack.c.b16 %v680, %v679
        %v698 = vpack.c.b16 %v682, %v681
        %v699 = vpack.c.b16 %v684, %v683
        %v700 = vpack.c.b16 %v686, %v685
        %v701 = vpack.c.b16 %v688, %v687
        %v702 = vpack.c.b16 %v690, %v689
        %v703 = vpack.c.b16 %v692, %v691
        %v704 = vpack.c.b16 %v694, %v693
        %vm715 = vcmask 261120
        %v717 = vsel %vm715, %v632, 0
        %v720 = vsel %vm715, %v634, 0
        %v723 = vsel %vm715, %v636, 0
        %v726 = vsel %vm715, %v638, 0
        %v729 = vsel %vm715, %v640, 0
        %v732 = vsel %vm715, %v642, 0
        %v735 = vsel %vm715, %v644, 0
        %v738 = vsel %vm715, %v646, 0
        %740 = vmatprep.subr.bf16.mxu0 0
        %741 = vmatpush1.bf16.msra.mxu0 %v695
        %742 = vmatprep.subr.bf16.mxu0 0
        %743 = vmatpush1.bf16.msra.mxu0 %v696
        %744 = vmatprep.subr.bf16.mxu0 0
        %745 = vmatpush1.bf16.msra.mxu0 %v697
        %746 = vmatprep.subr.bf16.mxu0 0
        %747 = vmatpush1.bf16.msra.mxu0 %v698
        %748 = vmatprep.subr.bf16.mxu0 0
        %749 = vmatpush1.bf16.msra.mxu0 %v699
        %750 = vmatprep.subr.bf16.mxu0 0
        %751 = vmatpush1.bf16.msra.mxu0 %v700
        %752 = vmatprep.subr.bf16.mxu0 0
        %753 = vmatpush1.bf16.msra.mxu0 %v701
        %754 = vmatprep.subr.bf16.mxu0 0
        %755 = vmatpush1.bf16.msra.mxu0 %v702
        %756 = vmatprep.subr.bf16.mxu0 0
        %757 = vmatpush1.bf16.msra.mxu0 %v703
        %758 = vmatprep.subr.bf16.mxu0 0
        %759 = vmatpush1.bf16.msra.mxu0 %v704
        %760 = vmatprep.subr.bf16.mxu0 0
        %761 = vmatpush1.bf16.msra.mxu0 0
        %762 = vmatprep.subr.bf16.mxu0 0
        %763 = vmatpush1.bf16.msra.mxu0 0
        %764 = vmatprep.subr.bf16.mxu0 0
        %765 = vmatpush1.bf16.msra.mxu0 0
        %766 = vmatprep.subr.bf16.mxu0 0
        %767 = vmatpush1.bf16.msra.mxu0 0
        %768 = vmatprep.subr.bf16.mxu0 0
        %769 = vmatpush1.bf16.msra.mxu0 0
        %770 = vmatprep.subr.bf16.mxu0 0
        %771 = vmatpush1.bf16.msra.mxu0 0
        %772 = vmatprep.mubr.bf16.mxu0 %v717
        %773 = vmatmul.mubr.bf16.gmra.mrb[0].mxu0 %v631
        %v774 = vpop.f32.mrb[0].mxu0
        %v775 = vadd.f32 %v567, %v774
        %v776 = vpop.f32.mrb[0].mxu0
        %v777 = vpop.f32.mrb[0].mxu0
        %v778 = vadd.f32 %v568, %v777
        %v779 = vpop.f32.mrb[0].mxu0
        %780 = vmatprep.mubr.bf16.mxu0 %v720
        %781 = vmatmul.mubr.bf16.gmra.mrb[0].mxu0 %v633
        %v782 = vpop.f32.mrb[0].mxu0
        %v783 = vadd.f32 %v569, %v782
        %v784 = vpop.f32.mrb[0].mxu0
        %v785 = vpop.f32.mrb[0].mxu0
        %v786 = vadd.f32 %v570, %v785
        %v787 = vpop.f32.mrb[0].mxu0
        %788 = vmatprep.mubr.bf16.mxu0 %v723
        %789 = vmatmul.mubr.bf16.gmra.mrb[0].mxu0 %v635
        %v790 = vpop.f32.mrb[0].mxu0
        %v791 = vadd.f32 %v571, %v790
        %v792 = vpop.f32.mrb[0].mxu0
        %v793 = vpop.f32.mrb[0].mxu0
        %v794 = vadd.f32 %v572, %v793
        %v795 = vpop.f32.mrb[0].mxu0
        %796 = vmatprep.mubr.bf16.mxu0 %v726
        %797 = vmatmul.mubr.bf16.gmra.mrb[0].mxu0 %v637
        %v798 = vpop.f32.mrb[0].mxu0
        %v799 = vadd.f32 %v573, %v798
        %v800 = vpop.f32.mrb[0].mxu0
        %v801 = vpop.f32.mrb[0].mxu0
        %v802 = vadd.f32 %v574, %v801
        %v803 = vpop.f32.mrb[0].mxu0
        %804 = vmatprep.mubr.bf16.mxu0 %v729
        %805 = vmatmul.mubr.bf16.gmra.mrb[0].mxu0 %v639
        %v806 = vpop.f32.mrb[0].mxu0
        %v807 = vadd.f32 %v575, %v806
        %v808 = vpop.f32.mrb[0].mxu0
        %v809 = vpop.f32.mrb[0].mxu0
        %v810 = vadd.f32 %v576, %v809
        %v811 = vpop.f32.mrb[0].mxu0
        %812 = vmatprep.mubr.bf16.mxu0 %v732
        %813 = vmatmul.mubr.bf16.gmra.mrb[0].mxu0 %v641
        %v814 = vpop.f32.mrb[0].mxu0
        %v815 = vadd.f32 %v577, %v814
        %v816 = vpop.f32.mrb[0].mxu0
        %v817 = vpop.f32.mrb[0].mxu0
        %v818 = vadd.f32 %v578, %v817
        %v819 = vpop.f32.mrb[0].mxu0
        %820 = vmatprep.mubr.bf16.mxu0 %v735
        %821 = vmatmul.mubr.bf16.gmra.mrb[0].mxu0 %v643
        %v822 = vpop.f32.mrb[0].mxu0
        %v823 = vadd.f32 %v579, %v822
        %v824 = vpop.f32.mrb[0].mxu0
        %v825 = vpop.f32.mrb[0].mxu0
        %v826 = vadd.f32 %v580, %v825
        %v827 = vpop.f32.mrb[0].mxu0
        %828 = vmatprep.mubr.bf16.mxu0 %v738
        %829 = vmatmul.mubr.bf16.gmra.mrb[0].mxu0 %v645
        %v830 = vpop.f32.mrb[0].mxu0
        %v831 = vadd.f32 %v581, %v830
        %v832 = vpop.f32.mrb[0].mxu0
        %v833 = vpop.f32.mrb[0].mxu0
        %v834 = vadd.f32 %v582, %v833
        %v835 = vpop.f32.mrb[0].mxu0
        %836 = vdwg.mxu0
        %v837 = vlaneseq
        %v838 = vshrl.u32 %v837, 7
        %v839 = vadd.s32 %v838, 8
        %v840 = vadd.s32 %v838, 16
        %v841 = vadd.s32 %v838, 24
        %v842 = vadd.s32 %v838, 32
        %v843 = vadd.s32 %v838, 40
        %v844 = vadd.s32 %v838, 48
        %v845 = vadd.s32 %v838, 56
        %v846 = vadd.s32 %v838, 64
        %v847 = vadd.s32 %v838, 72
        %v848 = vadd.s32 %v838, 80
        %v849 = vadd.s32 %v838, 88
        %v850 = vadd.s32 %v838, 96
        %v851 = vadd.s32 %v838, 104
        %v852 = vadd.s32 %v838, 112
        %v853 = vadd.s32 %v838, 120
        %vm854 = vcmp.ge.s32.totalorder %v838, 17
        %vm855 = vcmp.ge.s32.totalorder %v839, 17
        %vm856 = vcmp.ge.s32.totalorder %v840, 17
        %vm857 = vcmp.ge.s32.totalorder %v841, 17
        %vm858 = vcmp.ge.s32.totalorder %v842, 17
        %vm859 = vcmp.ge.s32.totalorder %v843, 17
        %vm860 = vcmp.ge.s32.totalorder %v844, 17
        %vm861 = vcmp.ge.s32.totalorder %v845, 17
        %vm862 = vcmp.ge.s32.totalorder %v846, 17
        %vm863 = vcmp.ge.s32.totalorder %v847, 17
        %vm864 = vcmp.ge.s32.totalorder %v848, 17
        %vm865 = vcmp.ge.s32.totalorder %v849, 17
        %vm866 = vcmp.ge.s32.totalorder %v850, 17
        %vm867 = vcmp.ge.s32.totalorder %v851, 17
        %vm868 = vcmp.ge.s32.totalorder %v852, 17
        %vm869 = vcmp.ge.s32.totalorder %v853, 17
        %vm870 = vcmp.lt.s32.totalorder %v838, 21
        %vm871 = vcmp.lt.s32.totalorder %v839, 21
        %vm872 = vcmp.lt.s32.totalorder %v840, 21
        %vm873 = vcmp.lt.s32.totalorder %v841, 21
        %vm874 = vcmp.lt.s32.totalorder %v842, 21
        %vm875 = vcmp.lt.s32.totalorder %v843, 21
        %vm876 = vcmp.lt.s32.totalorder %v844, 21
        %vm877 = vcmp.lt.s32.totalorder %v845, 21
        %vm878 = vcmp.lt.s32.totalorder %v846, 21
        %vm879 = vcmp.lt.s32.totalorder %v847, 21
        %vm880 = vcmp.lt.s32.totalorder %v848, 21
        %vm881 = vcmp.lt.s32.totalorder %v849, 21
        %vm882 = vcmp.lt.s32.totalorder %v850, 21
        %vm883 = vcmp.lt.s32.totalorder %v851, 21
        %vm884 = vcmp.lt.s32.totalorder %v852, 21
        %vm885 = vcmp.lt.s32.totalorder %v853, 21
        %vm886 = vmand %vm854, %vm870
        %vm887 = vmand %vm855, %vm871
        %vm888 = vmand %vm856, %vm872
        %vm889 = vmand %vm857, %vm873
        %vm890 = vmand %vm858, %vm874
        %vm891 = vmand %vm859, %vm875
        %vm892 = vmand %vm860, %vm876
        %vm893 = vmand %vm861, %vm877
        %vm894 = vmand %vm862, %vm878
        %vm895 = vmand %vm863, %vm879
        %vm896 = vmand %vm864, %vm880
        %vm897 = vmand %vm865, %vm881
        %vm898 = vmand %vm866, %vm882
        %vm899 = vmand %vm867, %vm883
        %vm900 = vmand %vm868, %vm884
        %vm901 = vmand %vm869, %vm885
        %v902 = vmul.f32 %v775, %v775
        %v903 = vmul.f32 %v778, %v778
        %v904 = vmul.f32 %v783, %v783
        %v905 = vmul.f32 %v786, %v786
        %v906 = vmul.f32 %v791, %v791
        %v907 = vmul.f32 %v794, %v794
        %v908 = vmul.f32 %v799, %v799
        %v909 = vmul.f32 %v802, %v802
        %v910 = vmul.f32 %v807, %v807
        %v911 = vmul.f32 %v810, %v810
        %v912 = vmul.f32 %v815, %v815
        %v913 = vmul.f32 %v818, %v818
        %v914 = vmul.f32 %v823, %v823
        %v915 = vmul.f32 %v826, %v826
        %v916 = vmul.f32 %v831, %v831
        %v917 = vmul.f32 %v834, %v834
        %v918 = vmul.f32 %v775, %v902
        %v919 = vmul.f32 %v778, %v903
        %v920 = vmul.f32 %v783, %v904
        %v921 = vmul.f32 %v786, %v905
        %v922 = vmul.f32 %v791, %v906
        %v923 = vmul.f32 %v794, %v907
        %v924 = vmul.f32 %v799, %v908
        %v925 = vmul.f32 %v802, %v909
        %v926 = vmul.f32 %v807, %v910
        %v927 = vmul.f32 %v810, %v911
        %v928 = vmul.f32 %v815, %v912
        %v929 = vmul.f32 %v818, %v913
        %v930 = vmul.f32 %v823, %v914
        %v931 = vmul.f32 %v826, %v915
        %v932 = vmul.f32 %v831, %v916
        %v933 = vmul.f32 %v834, %v917
        %v934 = vmul.f32 %v918, 0.044715
        %v935 = vmul.f32 %v919, 0.044715
        %v936 = vmul.f32 %v920, 0.044715
        %v937 = vmul.f32 %v921, 0.044715
        %v938 = vmul.f32 %v922, 0.044715
        %v939 = vmul.f32 %v923, 0.044715
        %v940 = vmul.f32 %v924, 0.044715
        %v941 = vmul.f32 %v925, 0.044715
        %v942 = vmul.f32 %v926, 0.044715
        %v943 = vmul.f32 %v927, 0.044715
        %v944 = vmul.f32 %v928, 0.044715
        %v945 = vmul.f32 %v929, 0.044715
        %v946 = vmul.f32 %v930, 0.044715
        %v947 = vmul.f32 %v931, 0.044715
        %v948 = vmul.f32 %v932, 0.044715
        %v949 = vmul.f32 %v933, 0.044715
        %v950 = vadd.f32 %v775, %v934
        %v951 = vadd.f32 %v778, %v935
        %v952 = vadd.f32 %v783, %v936
        %v953 = vadd.f32 %v786, %v937
        %v954 = vadd.f32 %v791, %v938
        %v955 = vadd.f32 %v794, %v939
        %v956 = vadd.f32 %v799, %v940
        %v957 = vadd.f32 %v802, %v941
        %v958 = vadd.f32 %v807, %v942
        %v959 = vadd.f32 %v810, %v943
        %v960 = vadd.f32 %v815, %v944
        %v961 = vadd.f32 %v818, %v945
        %v962 = vadd.f32 %v823, %v946
        %v963 = vadd.f32 %v826, %v947
        %v964 = vadd.f32 %v831, %v948
        %v965 = vadd.f32 %v834, %v949
        %v966 = vmul.f32 %v950, 0.7978846
        %v967 = vmul.f32 %v951, 0.7978846
        %v968 = vmul.f32 %v952, 0.7978846
        %v969 = vmul.f32 %v953, 0.7978846
        %v970 = vmul.f32 %v954, 0.7978846
        %v971 = vmul.f32 %v955, 0.7978846
        %v972 = vmul.f32 %v956, 0.7978846
        %v973 = vmul.f32 %v957, 0.7978846
        %v974 = vmul.f32 %v958, 0.7978846
        %v975 = vmul.f32 %v959, 0.7978846
        %v976 = vmul.f32 %v960, 0.7978846
        %v977 = vmul.f32 %v961, 0.7978846
        %v978 = vmul.f32 %v962, 0.7978846
        %v979 = vmul.f32 %v963, 0.7978846
        %v980 = vmul.f32 %v964, 0.7978846
        %v981 = vmul.f32 %v965, 0.7978846
        %v982 = vtanh.pop %v966
        %v983 = vtanh.pop %v967
        %v984 = vtanh.pop %v968
        %v985 = vtanh.pop %v969
        %v986 = vtanh.pop %v970
        %v987 = vtanh.pop %v971
        %v988 = vtanh.pop %v972
        %v989 = vtanh.pop %v973
        %v990 = vtanh.pop %v974
        %v991 = vtanh.pop %v975
        %v992 = vtanh.pop %v976
        %v993 = vtanh.pop %v977
        %v994 = vtanh.pop %v978
        %v995 = vtanh.pop %v979
        %v996 = vtanh.pop %v980
        %v997 = vtanh.pop %v981
        %v998 = vadd.f32 %v982, 1.0
        %v999 = vadd.f32 %v983, 1.0
        %v1000 = vadd.f32 %v984, 1.0
        %v1001 = vadd.f32 %v985, 1.0
        %v1002 = vadd.f32 %v986, 1.0
        %v1003 = vadd.f32 %v987, 1.0
        %v1004 = vadd.f32 %v988, 1.0
        %v1005 = vadd.f32 %v989, 1.0
        %v1006 = vadd.f32 %v990, 1.0
        %v1007 = vadd.f32 %v991, 1.0
        %v1008 = vadd.f32 %v992, 1.0
        %v1009 = vadd.f32 %v993, 1.0
        %v1010 = vadd.f32 %v994, 1.0
        %v1011 = vadd.f32 %v995, 1.0
        %v1012 = vadd.f32 %v996, 1.0
        %v1013 = vadd.f32 %v997, 1.0
        %v1014 = vmul.f32 %v998, 0.5
        %v1015 = vmul.f32 %v999, 0.5
        %v1016 = vmul.f32 %v1000, 0.5
        %v1017 = vmul.f32 %v1001, 0.5
        %v1018 = vmul.f32 %v1002, 0.5
        %v1019 = vmul.f32 %v1003, 0.5
        %v1020 = vmul.f32 %v1004, 0.5
        %v1021 = vmul.f32 %v1005, 0.5
        %v1022 = vmul.f32 %v1006, 0.5
        %v1023 = vmul.f32 %v1007, 0.5
        %v1024 = vmul.f32 %v1008, 0.5
        %v1025 = vmul.f32 %v1009, 0.5
        %v1026 = vmul.f32 %v1010, 0.5
        %v1027 = vmul.f32 %v1011, 0.5
        %v1028 = vmul.f32 %v1012, 0.5
        %v1029 = vmul.f32 %v1013, 0.5
        %v1030 = vmul.f32 %v775, %v1014
        %v1031 = vmul.f32 %v778, %v1015
        %v1032 = vmul.f32 %v783, %v1016
        %v1033 = vmul.f32 %v786, %v1017
        %v1034 = vmul.f32 %v791, %v1018
        %v1035 = vmul.f32 %v794, %v1019
        %v1036 = vmul.f32 %v799, %v1020
        %v1037 = vmul.f32 %v802, %v1021
        %v1038 = vmul.f32 %v807, %v1022
        %v1039 = vmul.f32 %v810, %v1023
        %v1040 = vmul.f32 %v815, %v1024
        %v1041 = vmul.f32 %v818, %v1025
        %v1042 = vmul.f32 %v823, %v1026
        %v1043 = vmul.f32 %v826, %v1027
        %v1044 = vmul.f32 %v831, %v1028
        %v1045 = vmul.f32 %v834, %v1029
        %v1046 = vsel %vm886, %v1030, %v775
        %v1047 = vsel %vm887, %v1031, %v778
        %v1048 = vsel %vm888, %v1032, %v783
        %v1049 = vsel %vm889, %v1033, %v786
        %v1050 = vsel %vm890, %v1034, %v791
        %v1051 = vsel %vm891, %v1035, %v794
        %v1052 = vsel %vm892, %v1036, %v799
        %v1053 = vsel %vm893, %v1037, %v802
        %v1054 = vsel %vm894, %v1038, %v807
        %v1055 = vsel %vm895, %v1039, %v810
        %v1056 = vsel %vm896, %v1040, %v815
        %v1057 = vsel %vm897, %v1041, %v818
        %v1058 = vsel %vm898, %v1042, %v823
        %v1059 = vsel %vm899, %v1043, %v826
        %v1060 = vsel %vm900, %v1044, %v831
        %v1061 = vsel %vm901, %v1045, %v834
        %v1062 = vpack.c.bf16 %v1047, %v1046
        %v1063 = vpack.c.bf16 %v1049, %v1048
        %v1064 = vpack.c.bf16 %v1051, %v1050
        %v1065 = vpack.c.bf16 %v1053, %v1052
        %v1066 = vpack.c.bf16 %v1055, %v1054
        %v1067 = vpack.c.bf16 %v1057, %v1056
        %v1068 = vpack.c.bf16 %v1059, %v1058
        %v1069 = vpack.c.bf16 %v1061, %v1060
        %v1070 = vpack.c.bf16 %v472, %v469
        %v1071 = vpack.c.bf16 %v480, %v477
        %v1072 = vpack.c.bf16 %v488, %v485
        %v1073 = vpack.c.bf16 %v496, %v493
        %v1074 = vpack.c.bf16 %v504, %v501
        %v1075 = vpack.c.bf16 %v512, %v509
        %v1076 = vpack.c.bf16 %v520, %v517
        %v1077 = vpack.c.bf16 %v528, %v525
        %v1078 = vld [vmem:[#allocation2] sm:$0xf]
        %v1079 = vld [vmem:[#allocation2 + $0x24] sm:$0xf]
        %v1080 = vld [vmem:[#allocation2 + $0x48] sm:$0xf]
        %v1081 = vld [vmem:[#allocation2 + $0x6c] sm:$0xf]
        %v1082 = vld [vmem:[#allocation2 + $0x90] sm:$0xf]
        %v1083 = vld [vmem:[#allocation2 + $0xb4] sm:$0xf]
        %v1084 = vld [vmem:[#allocation2 + $0xd8] sm:$0xf]
        %v1085 = vld [vmem:[#allocation2 + $0xfc] sm:$0xf]
        %v1086 = vld [vmem:[#allocation2 + $0x120] sm:$0xf]
        %v1087 = vld [vmem:[#allocation2 + $0x144] sm:$0xf]
        %v1088 = vld [vmem:[#allocation2 + $0x168] sm:$0xf]
        %v1089 = vld [vmem:[#allocation2 + $0x18c] sm:$0xf]
        %v1090 = vld [vmem:[#allocation2 + $0x1b0] sm:$0xf]
        %v1091 = vld [vmem:[#allocation2 + $0x1d4] sm:$0xf]
        %v1092 = vld [vmem:[#allocation2 + $0x1f8] sm:$0xf]
        %v1093 = vld [vmem:[#allocation2 + $0x21c] sm:$0xf]
        %v1094 = vld [vmem:[%s6] sm:$0x1]
        %v1095 = vlaneseq
        %v1096 = vshrl.u32 %v1095, 7
        %v1097 = vsub.s32 0, %v1096
        %v1098 = vrot.slane %v1094, %v1097
        %v1115 = vunpack.c.l.b16 %v1078
        %v1116 = vunpack.c.l.b16 %v1079
        %v1117 = vunpack.c.l.b16 %v1080
        %v1118 = vunpack.c.l.b16 %v1081
        %v1119 = vunpack.c.l.b16 %v1082
        %v1120 = vunpack.c.l.b16 %v1083
        %v1121 = vunpack.c.l.b16 %v1084
        %v1122 = vunpack.c.l.b16 %v1085
        %v1123 = vunpack.c.l.b16 %v1086
        %v1124 = vunpack.c.l.b16 %v1087
        %v1125 = vunpack.c.l.b16 %v1088
        %v1126 = vunpack.c.l.b16 %v1089
        %v1127 = vunpack.c.l.b16 %v1090
        %v1128 = vunpack.c.l.b16 %v1091
        %v1129 = vunpack.c.l.b16 %v1092
        %v1130 = vunpack.c.l.b16 %v1093
        %v1131 = vpack.c.b16 %v1116, %v1115
        %v1132 = vpack.c.b16 %v1118, %v1117
        %v1133 = vpack.c.b16 %v1120, %v1119
        %v1134 = vpack.c.b16 %v1122, %v1121
        %v1135 = vpack.c.b16 %v1124, %v1123
        %v1136 = vpack.c.b16 %v1126, %v1125
        %v1137 = vpack.c.b16 %v1128, %v1127
        %v1138 = vpack.c.b16 %v1130, %v1129
        %1147 = vmatprep.subr.bf16.mxu0 0
        %1148 = vmatpush1.bf16.msra.mxu0 %v1131
        %1149 = vmatprep.subr.bf16.mxu0 0
        %1150 = vmatpush1.bf16.msra.mxu0 %v1132
        %1151 = vmatprep.subr.bf16.mxu0 0
        %1152 = vmatpush1.bf16.msra.mxu0 %v1133
        %1153 = vmatprep.subr.bf16.mxu0 0
        %1154 = vmatpush1.bf16.msra.mxu0 %v1134
        %1155 = vmatprep.subr.bf16.mxu0 0
        %1156 = vmatpush1.bf16.msra.mxu0 %v1135
        %1157 = vmatprep.subr.bf16.mxu0 0
        %1158 = vmatpush1.bf16.msra.mxu0 %v1136
        %1159 = vmatprep.subr.bf16.mxu0 0
        %1160 = vmatpush1.bf16.msra.mxu0 %v1137
        %1161 = vmatprep.subr.bf16.mxu0 0
        %1162 = vmatpush1.bf16.msra.mxu0 %v1138
        %1163 = vmatprep.subr.bf16.mxu0 0
        %1164 = vmatpush1.bf16.msra.mxu0 0
        %1165 = vmatprep.subr.bf16.mxu0 0
        %1166 = vmatpush1.bf16.msra.mxu0 0
        %1167 = vmatprep.subr.bf16.mxu0 0
        %1168 = vmatpush1.bf16.msra.mxu0 0
        %1169 = vmatprep.subr.bf16.mxu0 0
        %1170 = vmatpush1.bf16.msra.mxu0 0
        %1171 = vmatprep.subr.bf16.mxu0 0
        %1172 = vmatpush1.bf16.msra.mxu0 0
        %1173 = vmatprep.subr.bf16.mxu0 0
        %1174 = vmatpush1.bf16.msra.mxu0 0
        %1175 = vmatprep.subr.bf16.mxu0 0
        %1176 = vmatpush1.bf16.msra.mxu0 0
        %1177 = vmatprep.subr.bf16.mxu0 0
        %1178 = vmatpush1.bf16.msra.mxu0 0
        %1179 = vmatprep.mubr.bf16.mxu0 0
        %1180 = vmatmul.mubr.bf16.gmra.mrb[0].mxu0 %v1070
        %v1181 = vpop.f32.mrb[0].mxu0
        %v1182 = vadd.f32 %v1098, %v1181
        %v1183 = vpop.f32.mrb[0].mxu0
        %v1184 = vpop.f32.mrb[0].mxu0
        %v1185 = vadd.f32 %v1098, %v1184
        %v1186 = vpop.f32.mrb[0].mxu0
        %1187 = vmatprep.mubr.bf16.mxu0 0
        %1188 = vmatmul.mubr.bf16.gmra.mrb[0].mxu0 %v1071
        %v1189 = vpop.f32.mrb[0].mxu0
        %v1190 = vadd.f32 %v1098, %v1189
        %v1191 = vpop.f32.mrb[0].mxu0
        %v1192 = vpop.f32.mrb[0].mxu0
        %v1193 = vadd.f32 %v1098, %v1192
        %v1194 = vpop.f32.mrb[0].mxu0
        %1195 = vmatprep.mubr.bf16.mxu0 0
        %1196 = vmatmul.mubr.bf16.gmra.mrb[0].mxu0 %v1072
        %v1197 = vpop.f32.mrb[0].mxu0
        %v1198 = vadd.f32 %v1098, %v1197
        %v1199 = vpop.f32.mrb[0].mxu0
        %v1200 = vpop.f32.mrb[0].mxu0
        %v1201 = vadd.f32 %v1098, %v1200
        %v1202 = vpop.f32.mrb[0].mxu0
        %1203 = vmatprep.mubr.bf16.mxu0 0
        %1204 = vmatmul.mubr.bf16.gmra.mrb[0].mxu0 %v1073
        %v1205 = vpop.f32.mrb[0].mxu0
        %v1206 = vadd.f32 %v1098, %v1205
        %v1207 = vpop.f32.mrb[0].mxu0
        %v1208 = vpop.f32.mrb[0].mxu0
        %v1209 = vadd.f32 %v1098, %v1208
        %v1210 = vpop.f32.mrb[0].mxu0
        %1211 = vmatprep.mubr.bf16.mxu0 0
        %1212 = vmatmul.mubr.bf16.gmra.mrb[0].mxu0 %v1074
        %v1213 = vpop.f32.mrb[0].mxu0
        %v1214 = vadd.f32 %v1098, %v1213
        %v1215 = vpop.f32.mrb[0].mxu0
        %v1216 = vpop.f32.mrb[0].mxu0
        %v1217 = vadd.f32 %v1098, %v1216
        %v1218 = vpop.f32.mrb[0].mxu0
        %1219 = vmatprep.mubr.bf16.mxu0 0
        %1220 = vmatmul.mubr.bf16.gmra.mrb[0].mxu0 %v1075
        %v1221 = vpop.f32.mrb[0].mxu0
        %v1222 = vadd.f32 %v1098, %v1221
        %v1223 = vpop.f32.mrb[0].mxu0
        %v1224 = vpop.f32.mrb[0].mxu0
        %v1225 = vadd.f32 %v1098, %v1224
        %v1226 = vpop.f32.mrb[0].mxu0
        %1227 = vmatprep.mubr.bf16.mxu0 0
        %1228 = vmatmul.mubr.bf16.gmra.mrb[0].mxu0 %v1076
        %v1229 = vpop.f32.mrb[0].mxu0
        %v1230 = vadd.f32 %v1098, %v1229
        %v1231 = vpop.f32.mrb[0].mxu0
        %v1232 = vpop.f32.mrb[0].mxu0
        %v1233 = vadd.f32 %v1098, %v1232
        %v1234 = vpop.f32.mrb[0].mxu0
        %1235 = vmatprep.mubr.bf16.mxu0 0
        %1236 = vmatmul.mubr.bf16.gmra.mrb[0].mxu0 %v1077
        %v1237 = vpop.f32.mrb[0].mxu0
        %v1238 = vadd.f32 %v1098, %v1237
        %v1239 = vpop.f32.mrb[0].mxu0
        %v1240 = vpop.f32.mrb[0].mxu0
        %v1241 = vadd.f32 %v1098, %v1240
        %v1242 = vpop.f32.mrb[0].mxu0
        %1243 = vdwg.mxu0
        %v1244 = vld [vmem:[#allocation2 + $0x4] sm:$0xf]
        %v1245 = vld [vmem:[#allocation2 + $0x28] sm:$0xf]
        %v1246 = vld [vmem:[#allocation2 + $0x4c] sm:$0xf]
        %v1247 = vld [vmem:[#allocation2 + $0x70] sm:$0xf]
        %v1248 = vld [vmem:[#allocation2 + $0x94] sm:$0xf]
        %v1249 = vld [vmem:[#allocation2 + $0xb8] sm:$0xf]
        %v1250 = vld [vmem:[#allocation2 + $0xdc] sm:$0xf]
        %v1251 = vld [vmem:[#allocation2 + $0x100] sm:$0xf]
        %v1252 = vld [vmem:[#allocation2 + $0x124] sm:$0xf]
        %v1253 = vld [vmem:[#allocation2 + $0x148] sm:$0xf]
        %v1254 = vld [vmem:[#allocation2 + $0x16c] sm:$0xf]
        %v1255 = vld [vmem:[#allocation2 + $0x190] sm:$0xf]
        %v1256 = vld [vmem:[#allocation2 + $0x1b4] sm:$0xf]
        %v1257 = vld [vmem:[#allocation2 + $0x1d8] sm:$0xf]
        %v1258 = vld [vmem:[#allocation2 + $0x1fc] sm:$0xf]
        %v1259 = vld [vmem:[#allocation2 + $0x220] sm:$0xf]
        %v1260 = vld [vmem:[%s6 + $0x1] sm:$0x1]
        %v1261 = vlaneseq
        %v1262 = vshrl.u32 %v1261, 7
        %v1263 = vsub.s32 0, %v1262
        %v1264 = vrot.slane %v1260, %v1263
        %v1281 = vunpack.c.l.b16 %v1244
        %v1282 = vunpack.c.l.b16 %v1245
        %v1283 = vunpack.c.l.b16 %v1246
        %v1284 = vunpack.c.l.b16 %v1247
        %v1285 = vunpack.c.l.b16 %v1248
        %v1286 = vunpack.c.l.b16 %v1249
        %v1287 = vunpack.c.l.b16 %v1250
        %v1288 = vunpack.c.l.b16 %v1251
        %v1289 = vunpack.c.l.b16 %v1252
        %v1290 = vunpack.c.l.b16 %v1253
        %v1291 = vunpack.c.l.b16 %v1254
        %v1292 = vunpack.c.l.b16 %v1255
        %v1293 = vunpack.c.l.b16 %v1256
        %v1294 = vunpack.c.l.b16 %v1257
        %v1295 = vunpack.c.l.b16 %v1258
        %v1296 = vunpack.c.l.b16 %v1259
        %v1297 = vpack.c.b16 %v1282, %v1281
        %v1298 = vpack.c.b16 %v1284, %v1283
        %v1299 = vpack.c.b16 %v1286, %v1285
        %v1300 = vpack.c.b16 %v1288, %v1287
        %v1301 = vpack.c.b16 %v1290, %v1289
        %v1302 = vpack.c.b16 %v1292, %v1291
        %v1303 = vpack.c.b16 %v1294, %v1293
        %v1304 = vpack.c.b16 %v1296, %v1295
        %1313 = vmatprep.subr.bf16.mxu0 0
        %1314 = vmatpush1.bf16.msra.mxu0 %v1297
        %1315 = vmatprep.subr.bf16.mxu0 0
        %1316 = vmatpush1.bf16.msra.mxu0 %v1298
        %1317 = vmatprep.subr.bf16.mxu0 0
        %1318 = vmatpush1.bf16.msra.mxu0 %v1299
        %1319 = vmatprep.subr.bf16.mxu0 0
        %1320 = vmatpush1.bf16.msra.mxu0 %v1300
        %1321 = vmatprep.subr.bf16.mxu0 0
        %1322 = vmatpush1.bf16.msra.mxu0 %v1301
        %1323 = vmatprep.subr.bf16.mxu0 0
        %1324 = vmatpush1.bf16.msra.mxu0 %v1302
        %1325 = vmatprep.subr.bf16.mxu0 0
        %1326 = vmatpush1.bf16.msra.mxu0 %v1303
        %1327 = vmatprep.subr.bf16.mxu0 0
        %1328 = vmatpush1.bf16.msra.mxu0 %v1304
        %1329 = vmatprep.subr.bf16.mxu0 0
        %1330 = vmatpush1.bf16.msra.mxu0 0
        %1331 = vmatprep.subr.bf16.mxu0 0
        %1332 = vmatpush1.bf16.msra.mxu0 0
        %1333 = vmatprep.subr.bf16.mxu0 0
        %1334 = vmatpush1.bf16.msra.mxu0 0
        %1335 = vmatprep.subr.bf16.mxu0 0
        %1336 = vmatpush1.bf16.msra.mxu0 0
        %1337 = vmatprep.subr.bf16.mxu0 0
        %1338 = vmatpush1.bf16.msra.mxu0 0
        %1339 = vmatprep.subr.bf16.mxu0 0
        %1340 = vmatpush1.bf16.msra.mxu0 0
        %1341 = vmatprep.subr.bf16.mxu0 0
        %1342 = vmatpush1.bf16.msra.mxu0 0
        %1343 = vmatprep.subr.bf16.mxu0 0
        %1344 = vmatpush1.bf16.msra.mxu0 0
        %1345 = vmatprep.mubr.bf16.mxu0 0
        %1346 = vmatmul.mubr.bf16.gmra.mrb[0].mxu0 %v1062
        %v1347 = vpop.f32.mrb[0].mxu0
        %v1348 = vadd.f32 %v1264, %v1347
        %v1349 = vpop.f32.mrb[0].mxu0
        %v1350 = vpop.f32.mrb[0].mxu0
        %v1351 = vadd.f32 %v1264, %v1350
        %v1352 = vpop.f32.mrb[0].mxu0
        %1353 = vmatprep.mubr.bf16.mxu0 0
        %1354 = vmatmul.mubr.bf16.gmra.mrb[0].mxu0 %v1063
        %v1355 = vpop.f32.mrb[0].mxu0
        %v1356 = vadd.f32 %v1264, %v1355
        %v1357 = vpop.f32.mrb[0].mxu0
        %v1358 = vpop.f32.mrb[0].mxu0
        %v1359 = vadd.f32 %v1264, %v1358
        %v1360 = vpop.f32.mrb[0].mxu0
        %1361 = vmatprep.mubr.bf16.mxu0 0
        %1362 = vmatmul.mubr.bf16.gmra.mrb[0].mxu0 %v1064
        %v1363 = vpop.f32.mrb[0].mxu0
        %v1364 = vadd.f32 %v1264, %v1363
        %v1365 = vpop.f32.mrb[0].mxu0
        %v1366 = vpop.f32.mrb[0].mxu0
        %v1367 = vadd.f32 %v1264, %v1366
        %v1368 = vpop.f32.mrb[0].mxu0
        %1369 = vmatprep.mubr.bf16.mxu0 0
        %1370 = vmatmul.mubr.bf16.gmra.mrb[0].mxu0 %v1065
        %v1371 = vpop.f32.mrb[0].mxu0
        %v1372 = vadd.f32 %v1264, %v1371
        %v1373 = vpop.f32.mrb[0].mxu0
        %v1374 = vpop.f32.mrb[0].mxu0
        %v1375 = vadd.f32 %v1264, %v1374
        %v1376 = vpop.f32.mrb[0].mxu0
        %1377 = vmatprep.mubr.bf16.mxu0 0
        %1378 = vmatmul.mubr.bf16.gmra.mrb[0].mxu0 %v1066
        %v1379 = vpop.f32.mrb[0].mxu0
        %v1380 = vadd.f32 %v1264, %v1379
        %v1381 = vpop.f32.mrb[0].mxu0
        %v1382 = vpop.f32.mrb[0].mxu0
        %v1383 = vadd.f32 %v1264, %v1382
        %v1384 = vpop.f32.mrb[0].mxu0
        %1385 = vmatprep.mubr.bf16.mxu0 0
        %1386 = vmatmul.mubr.bf16.gmra.mrb[0].mxu0 %v1067
        %v1387 = vpop.f32.mrb[0].mxu0
        %v1388 = vadd.f32 %v1264, %v1387
        %v1389 = vpop.f32.mrb[0].mxu0
        %v1390 = vpop.f32.mrb[0].mxu0
        %v1391 = vadd.f32 %v1264, %v1390
        %v1392 = vpop.f32.mrb[0].mxu0
        %1393 = vmatprep.mubr.bf16.mxu0 0
        %1394 = vmatmul.mubr.bf16.gmra.mrb[0].mxu0 %v1068
        %v1395 = vpop.f32.mrb[0].mxu0
        %v1396 = vadd.f32 %v1264, %v1395
        %v1397 = vpop.f32.mrb[0].mxu0
        %v1398 = vpop.f32.mrb[0].mxu0
        %v1399 = vadd.f32 %v1264, %v1398
        %v1400 = vpop.f32.mrb[0].mxu0
        %1401 = vmatprep.mubr.bf16.mxu0 0
        %1402 = vmatmul.mubr.bf16.gmra.mrb[0].mxu0 %v1069
        %v1403 = vpop.f32.mrb[0].mxu0
        %v1404 = vadd.f32 %v1264, %v1403
        %v1405 = vpop.f32.mrb[0].mxu0
        %v1406 = vpop.f32.mrb[0].mxu0
        %v1407 = vadd.f32 %v1264, %v1406
        %v1408 = vpop.f32.mrb[0].mxu0
        %1409 = vdwg.mxu0
        %v1410 = vld [vmem:[#allocation2 + $0x8] sm:$0xf]
        %v1411 = vld [vmem:[#allocation2 + $0x2c] sm:$0xf]
        %v1412 = vld [vmem:[#allocation2 + $0x50] sm:$0xf]
        %v1413 = vld [vmem:[#allocation2 + $0x74] sm:$0xf]
        %v1414 = vld [vmem:[#allocation2 + $0x98] sm:$0xf]
        %v1415 = vld [vmem:[#allocation2 + $0xbc] sm:$0xf]
        %v1416 = vld [vmem:[#allocation2 + $0xe0] sm:$0xf]
        %v1417 = vld [vmem:[#allocation2 + $0x104] sm:$0xf]
        %v1418 = vld [vmem:[#allocation2 + $0x128] sm:$0xf]
        %v1419 = vld [vmem:[#allocation2 + $0x14c] sm:$0xf]
        %v1420 = vld [vmem:[#allocation2 + $0x170] sm:$0xf]
        %v1421 = vld [vmem:[#allocation2 + $0x194] sm:$0xf]
        %v1422 = vld [vmem:[#allocation2 + $0x1b8] sm:$0xf]
        %v1423 = vld [vmem:[#allocation2 + $0x1dc] sm:$0xf]
        %v1424 = vld [vmem:[#allocation2 + $0x200] sm:$0xf]
        %v1425 = vld [vmem:[#allocation2 + $0x224] sm:$0xf]
        %v1426 = vld [vmem:[%s6 + $0x2] sm:$0x1]
        %v1427 = vlaneseq
        %v1428 = vshrl.u32 %v1427, 7
        %v1429 = vsub.s32 0, %v1428
        %v1430 = vrot.slane %v1426, %v1429
        %v1447 = vunpack.c.l.b16 %v1410
        %v1448 = vunpack.c.l.b16 %v1411
        %v1449 = vunpack.c.l.b16 %v1412
        %v1450 = vunpack.c.l.b16 %v1413
        %v1451 = vunpack.c.l.b16 %v1414
        %v1452 = vunpack.c.l.b16 %v1415
        %v1453 = vunpack.c.l.b16 %v1416
        %v1454 = vunpack.c.l.b16 %v1417
        %v1455 = vunpack.c.l.b16 %v1418
        %v1456 = vunpack.c.l.b16 %v1419
        %v1457 = vunpack.c.l.b16 %v1420
        %v1458 = vunpack.c.l.b16 %v1421
        %v1459 = vunpack.c.l.b16 %v1422
        %v1460 = vunpack.c.l.b16 %v1423
        %v1461 = vunpack.c.l.b16 %v1424
        %v1462 = vunpack.c.l.b16 %v1425
        %v1463 = vpack.c.b16 %v1448, %v1447
        %v1464 = vpack.c.b16 %v1450, %v1449
        %v1465 = vpack.c.b16 %v1452, %v1451
        %v1466 = vpack.c.b16 %v1454, %v1453
        %v1467 = vpack.c.b16 %v1456, %v1455
        %v1468 = vpack.c.b16 %v1458, %v1457
        %v1469 = vpack.c.b16 %v1460, %v1459
        %v1470 = vpack.c.b16 %v1462, %v1461
        %1479 = vmatprep.subr.bf16.mxu0 0
        %1480 = vmatpush1.bf16.msra.mxu0 %v1463
        %1481 = vmatprep.subr.bf16.mxu0 0
        %1482 = vmatpush1.bf16.msra.mxu0 %v1464
        %1483 = vmatprep.subr.bf16.mxu0 0
        %1484 = vmatpush1.bf16.msra.mxu0 %v1465
        %1485 = vmatprep.subr.bf16.mxu0 0
        %1486 = vmatpush1.bf16.msra.mxu0 %v1466
        %1487 = vmatprep.subr.bf16.mxu0 0
        %1488 = vmatpush1.bf16.msra.mxu0 %v1467
        %1489 = vmatprep.subr.bf16.mxu0 0
        %1490 = vmatpush1.bf16.msra.mxu0 %v1468
        %1491 = vmatprep.subr.bf16.mxu0 0
        %1492 = vmatpush1.bf16.msra.mxu0 %v1469
        %1493 = vmatprep.subr.bf16.mxu0 0
        %1494 = vmatpush1.bf16.msra.mxu0 %v1470
        %1495 = vmatprep.subr.bf16.mxu0 0
        %1496 = vmatpush1.bf16.msra.mxu0 0
        %1497 = vmatprep.subr.bf16.mxu0 0
        %1498 = vmatpush1.bf16.msra.mxu0 0
        %1499 = vmatprep.subr.bf16.mxu0 0
        %1500 = vmatpush1.bf16.msra.mxu0 0
        %1501 = vmatprep.subr.bf16.mxu0 0
        %1502 = vmatpush1.bf16.msra.mxu0 0
        %1503 = vmatprep.subr.bf16.mxu0 0
        %1504 = vmatpush1.bf16.msra.mxu0 0
        %1505 = vmatprep.subr.bf16.mxu0 0
        %1506 = vmatpush1.bf16.msra.mxu0 0
        %1507 = vmatprep.subr.bf16.mxu0 0
        %1508 = vmatpush1.bf16.msra.mxu0 0
        %1509 = vmatprep.subr.bf16.mxu0 0
        %1510 = vmatpush1.bf16.msra.mxu0 0
        %1511 = vmatprep.mubr.bf16.mxu0 0
        %1512 = vmatmul.mubr.bf16.gmra.mrb[0].mxu0 %v1062
        %v1513 = vpop.f32.mrb[0].mxu0
        %v1514 = vadd.f32 %v1430, %v1513
        %v1515 = vpop.f32.mrb[0].mxu0
        %v1516 = vpop.f32.mrb[0].mxu0
        %v1517 = vadd.f32 %v1430, %v1516
        %v1518 = vpop.f32.mrb[0].mxu0
        %1519 = vmatprep.mubr.bf16.mxu0 0
        %1520 = vmatmul.mubr.bf16.gmra.mrb[0].mxu0 %v1063
        %v1521 = vpop.f32.mrb[0].mxu0
        %v1522 = vadd.f32 %v1430, %v1521
        %v1523 = vpop.f32.mrb[0].mxu0
        %v1524 = vpop.f32.mrb[0].mxu0
        %v1525 = vadd.f32 %v1430, %v1524
        %v1526 = vpop.f32.mrb[0].mxu0
        %1527 = vmatprep.mubr.bf16.mxu0 0
        %1528 = vmatmul.mubr.bf16.gmra.mrb[0].mxu0 %v1064
        %v1529 = vpop.f32.mrb[0].mxu0
        %v1530 = vadd.f32 %v1430, %v1529
        %v1531 = vpop.f32.mrb[0].mxu0
        %v1532 = vpop.f32.mrb[0].mxu0
        %v1533 = vadd.f32 %v1430, %v1532
        %v1534 = vpop.f32.mrb[0].mxu0
        %1535 = vmatprep.mubr.bf16.mxu0 0
        %1536 = vmatmul.mubr.bf16.gmra.mrb[0].mxu0 %v1065
        %v1537 = vpop.f32.mrb[0].mxu0
        %v1538 = vadd.f32 %v1430, %v1537
        %v1539 = vpop.f32.mrb[0].mxu0
        %v1540 = vpop.f32.mrb[0].mxu0
        %v1541 = vadd.f32 %v1430, %v1540
        %v1542 = vpop.f32.mrb[0].mxu0
        %1543 = vmatprep.mubr.bf16.mxu0 0
        %1544 = vmatmul.mubr.bf16.gmra.mrb[0].mxu0 %v1066
        %v1545 = vpop.f32.mrb[0].mxu0
        %v1546 = vadd.f32 %v1430, %v1545
        %v1547 = vpop.f32.mrb[0].mxu0
        %v1548 = vpop.f32.mrb[0].mxu0
        %v1549 = vadd.f32 %v1430, %v1548
        %v1550 = vpop.f32.mrb[0].mxu0
        %1551 = vmatprep.mubr.bf16.mxu0 0
        %1552 = vmatmul.mubr.bf16.gmra.mrb[0].mxu0 %v1067
        %v1553 = vpop.f32.mrb[0].mxu0
        %v1554 = vadd.f32 %v1430, %v1553
        %v1555 = vpop.f32.mrb[0].mxu0
        %v1556 = vpop.f32.mrb[0].mxu0
        %v1557 = vadd.f32 %v1430, %v1556
        %v1558 = vpop.f32.mrb[0].mxu0
        %1559 = vmatprep.mubr.bf16.mxu0 0
        %1560 = vmatmul.mubr.bf16.gmra.mrb[0].mxu0 %v1068
        %v1561 = vpop.f32.mrb[0].mxu0
        %v1562 = vadd.f32 %v1430, %v1561
        %v1563 = vpop.f32.mrb[0].mxu0
        %v1564 = vpop.f32.mrb[0].mxu0
        %v1565 = vadd.f32 %v1430, %v1564
        %v1566 = vpop.f32.mrb[0].mxu0
        %1567 = vmatprep.mubr.bf16.mxu0 0
        %1568 = vmatmul.mubr.bf16.gmra.mrb[0].mxu0 %v1069
        %v1569 = vpop.f32.mrb[0].mxu0
        %v1570 = vadd.f32 %v1430, %v1569
        %v1571 = vpop.f32.mrb[0].mxu0
        %v1572 = vpop.f32.mrb[0].mxu0
        %v1573 = vadd.f32 %v1430, %v1572
        %v1574 = vpop.f32.mrb[0].mxu0
        %1575 = vdwg.mxu0
        %v1576 = vpack.c.bf16 %v1185, %v1182
        %v1577 = vpack.c.bf16 %v1193, %v1190
        %v1578 = vpack.c.bf16 %v1201, %v1198
        %v1579 = vpack.c.bf16 %v1209, %v1206
        %v1580 = vpack.c.bf16 %v1217, %v1214
        %v1581 = vpack.c.bf16 %v1225, %v1222
        %v1582 = vpack.c.bf16 %v1233, %v1230
        %v1583 = vpack.c.bf16 %v1241, %v1238
        %v1584 = vpack.c.bf16 %v1351, %v1348
        %v1585 = vpack.c.bf16 %v1359, %v1356
        %v1586 = vpack.c.bf16 %v1367, %v1364
        %v1587 = vpack.c.bf16 %v1375, %v1372
        %v1588 = vpack.c.bf16 %v1383, %v1380
        %v1589 = vpack.c.bf16 %v1391, %v1388
        %v1590 = vpack.c.bf16 %v1399, %v1396
        %v1591 = vpack.c.bf16 %v1407, %v1404
        %v1592 = vld [vmem:[%s339] sm:$0x1]
        %v1594 = vlaneseq
        %v1595 = vshrl.u32 %v1594, 7
        %v1596 = vsub.s32 0, %v1595
        %v1597 = vrot.slane %v1592, %v1596
        %1599 = vmatprep.subr.bf16.mxu0 0
        %1600 = vmatpush1.bf16.xpose.msra.mxu0 %v1584
        %1601 = vmatprep.subr.bf16.mxu0 0
        %1602 = vmatpush1.bf16.xpose.msra.mxu0 %v1585
        %1603 = vmatprep.subr.bf16.mxu0 0
        %1604 = vmatpush1.bf16.xpose.msra.mxu0 %v1586
        %1605 = vmatprep.subr.bf16.mxu0 0
        %1606 = vmatpush1.bf16.xpose.msra.mxu0 %v1587
        %1607 = vmatprep.subr.bf16.mxu0 0
        %1608 = vmatpush1.bf16.xpose.msra.mxu0 %v1588
        %1609 = vmatprep.subr.bf16.mxu0 0
        %1610 = vmatpush1.bf16.xpose.msra.mxu0 %v1589
        %1611 = vmatprep.subr.bf16.mxu0 0
        %1612 = vmatpush1.bf16.xpose.msra.mxu0 %v1590
        %1613 = vmatprep.subr.bf16.mxu0 0
        %1614 = vmatpush1.bf16.xpose.msra.mxu0 %v1591
        %1615 = vmatprep.subr.bf16.mxu0 0
        %1616 = vmatpush1.bf16.xpose.msra.mxu0 0
        %1617 = vmatprep.subr.bf16.mxu0 0
        %1618 = vmatpush1.bf16.xpose.msra.mxu0 0
        %1619 = vmatprep.subr.bf16.mxu0 0
        %1620 = vmatpush1.bf16.xpose.msra.mxu0 0
        %1621 = vmatprep.subr.bf16.mxu0 0
        %1622 = vmatpush1.bf16.xpose.msra.mxu0 0
        %1623 = vmatprep.subr.bf16.mxu0 0
        %1624 = vmatpush1.bf16.xpose.msra.mxu0 0
        %1625 = vmatprep.subr.bf16.mxu0 0
        %1626 = vmatpush1.bf16.xpose.msra.mxu0 0
        %1627 = vmatprep.subr.bf16.mxu0 0
        %1628 = vmatpush1.bf16.xpose.msra.mxu0 0
        %1629 = vmatprep.subr.bf16.mxu0 0
        %1630 = vmatpush1.bf16.xpose.msra.mxu0 0
        %1631 = vmatprep.mubr.bf16.mxu0 0
        %1632 = vmatmul.mubr.bf16.gmra.mrb[0].mxu0 %v1576
        %v1633 = vpop.f32.mrb[0].mxu0
        %v1634 = vadd.f32 %v1597, %v1633
        %v1635 = vpop.f32.mrb[0].mxu0
        %v1636 = vpop.f32.mrb[0].mxu0
        %v1637 = vadd.f32 %v1597, %v1636
        %v1638 = vpop.f32.mrb[0].mxu0
        %1639 = vmatprep.mubr.bf16.mxu0 0
        %1640 = vmatmul.mubr.bf16.gmra.mrb[0].mxu0 %v1577
        %v1641 = vpop.f32.mrb[0].mxu0
        %v1642 = vadd.f32 %v1597, %v1641
        %v1643 = vpop.f32.mrb[0].mxu0
        %v1644 = vpop.f32.mrb[0].mxu0
        %v1645 = vadd.f32 %v1597, %v1644
        %v1646 = vpop.f32.mrb[0].mxu0
        %1647 = vmatprep.mubr.bf16.mxu0 0
        %1648 = vmatmul.mubr.bf16.gmra.mrb[0].mxu0 %v1578
        %v1649 = vpop.f32.mrb[0].mxu0
        %v1650 = vadd.f32 %v1597, %v1649
        %v1651 = vpop.f32.mrb[0].mxu0
        %v1652 = vpop.f32.mrb[0].mxu0
        %v1653 = vadd.f32 %v1597, %v1652
        %v1654 = vpop.f32.mrb[0].mxu0
        %1655 = vmatprep.mubr.bf16.mxu0 0
        %1656 = vmatmul.mubr.bf16.gmra.mrb[0].mxu0 %v1579
        %v1657 = vpop.f32.mrb[0].mxu0
        %v1658 = vadd.f32 %v1597, %v1657
        %v1659 = vpop.f32.mrb[0].mxu0
        %v1660 = vpop.f32.mrb[0].mxu0
        %v1661 = vadd.f32 %v1597, %v1660
        %v1662 = vpop.f32.mrb[0].mxu0
        %1663 = vmatprep.mubr.bf16.mxu0 0
        %1664 = vmatmul.mubr.bf16.gmra.mrb[0].mxu0 %v1580
        %v1665 = vpop.f32.mrb[0].mxu0
        %v1666 = vadd.f32 %v1597, %v1665
        %v1667 = vpop.f32.mrb[0].mxu0
        %v1668 = vpop.f32.mrb[0].mxu0
        %v1669 = vadd.f32 %v1597, %v1668
        %v1670 = vpop.f32.mrb[0].mxu0
        %1671 = vmatprep.mubr.bf16.mxu0 0
        %1672 = vmatmul.mubr.bf16.gmra.mrb[0].mxu0 %v1581
        %v1673 = vpop.f32.mrb[0].mxu0
        %v1674 = vadd.f32 %v1597, %v1673
        %v1675 = vpop.f32.mrb[0].mxu0
        %v1676 = vpop.f32.mrb[0].mxu0
        %v1677 = vadd.f32 %v1597, %v1676
        %v1678 = vpop.f32.mrb[0].mxu0
        %1679 = vmatprep.mubr.bf16.mxu0 0
        %1680 = vmatmul.mubr.bf16.gmra.mrb[0].mxu0 %v1582
        %v1681 = vpop.f32.mrb[0].mxu0
        %v1682 = vadd.f32 %v1597, %v1681
        %v1683 = vpop.f32.mrb[0].mxu0
        %v1684 = vpop.f32.mrb[0].mxu0
        %v1685 = vadd.f32 %v1597, %v1684
        %v1686 = vpop.f32.mrb[0].mxu0
        %1687 = vmatprep.mubr.bf16.mxu0 0
        %1688 = vmatmul.mubr.bf16.gmra.mrb[0].mxu0 %v1583
        %v1689 = vpop.f32.mrb[0].mxu0
        %v1690 = vadd.f32 %v1597, %v1689
        %v1691 = vpop.f32.mrb[0].mxu0
        %v1692 = vpop.f32.mrb[0].mxu0
        %v1693 = vadd.f32 %v1597, %v1692
        %v1694 = vpop.f32.mrb[0].mxu0
        %1695 = vdwg.mxu0
        %1696 = vmax.xlane.f32.xlu0 %v1634
        %v1697 = vpop.xlane.xlu0 %1696
        %1698 = vmax.xlane.f32.xlu0 %v1637
        %v1699 = vpop.xlane.xlu0 %1698
        %1700 = vmax.xlane.f32.xlu0 %v1642
        %v1701 = vpop.xlane.xlu0 %1700
        %1702 = vmax.xlane.f32.xlu0 %v1645
        %v1703 = vpop.xlane.xlu0 %1702
        %1704 = vmax.xlane.f32.xlu0 %v1650
        %v1705 = vpop.xlane.xlu0 %1704
        %1706 = vmax.xlane.f32.xlu0 %v1653
        %v1707 = vpop.xlane.xlu0 %1706
        %1708 = vmax.xlane.f32.xlu0 %v1658
        %v1709 = vpop.xlane.xlu0 %1708
        %1710 = vmax.xlane.f32.xlu0 %v1661
        %v1711 = vpop.xlane.xlu0 %1710
        %1712 = vmax.xlane.f32.xlu0 %v1666
        %v1713 = vpop.xlane.xlu0 %1712
        %1714 = vmax.xlane.f32.xlu0 %v1669
        %v1715 = vpop.xlane.xlu0 %1714
        %1716 = vmax.xlane.f32.xlu0 %v1674
        %v1717 = vpop.xlane.xlu0 %1716
        %1718 = vmax.xlane.f32.xlu0 %v1677
        %v1719 = vpop.xlane.xlu0 %1718
        %1720 = vmax.xlane.f32.xlu0 %v1682
        %v1721 = vpop.xlane.xlu0 %1720
        %1722 = vmax.xlane.f32.xlu0 %v1685
        %v1723 = vpop.xlane.xlu0 %1722
        %1724 = vmax.xlane.f32.xlu0 %v1690
        %v1725 = vpop.xlane.xlu0 %1724
        %1726 = vmax.xlane.f32.xlu0 %v1693
        %v1727 = vpop.xlane.xlu0 %1726
        %v1728 = vsub.f32 %v1634, %v1697
        %v1729 = vsub.f32 %v1637, %v1699
        %v1730 = vsub.f32 %v1642, %v1701
        %v1731 = vsub.f32 %v1645, %v1703
        %v1732 = vsub.f32 %v1650, %v1705
        %v1733 = vsub.f32 %v1653, %v1707
        %v1734 = vsub.f32 %v1658, %v1709
        %v1735 = vsub.f32 %v1661, %v1711
        %v1736 = vsub.f32 %v1666, %v1713
        %v1737 = vsub.f32 %v1669, %v1715
        %v1738 = vsub.f32 %v1674, %v1717
        %v1739 = vsub.f32 %v1677, %v1719
        %v1740 = vsub.f32 %v1682, %v1721
        %v1741 = vsub.f32 %v1685, %v1723
        %v1742 = vsub.f32 %v1690, %v1725
        %v1743 = vsub.f32 %v1693, %v1727
        %v1744 = vmul.f32 %v1728, 1.442695
        %v1745 = vpow.pop %v1744
        %v1746 = vmul.f32 %v1729, 1.442695
        %v1747 = vpow.pop %v1746
        %v1748 = vmul.f32 %v1730, 1.442695
        %v1749 = vpow.pop %v1748
        %v1750 = vmul.f32 %v1731, 1.442695
        %v1751 = vpow.pop %v1750
        %v1752 = vmul.f32 %v1732, 1.442695
        %v1753 = vpow.pop %v1752
        %v1754 = vmul.f32 %v1733, 1.442695
        %v1755 = vpow.pop %v1754
        %v1756 = vmul.f32 %v1734, 1.442695
        %v1757 = vpow.pop %v1756
        %v1758 = vmul.f32 %v1735, 1.442695
        %v1759 = vpow.pop %v1758
        %v1760 = vmul.f32 %v1736, 1.442695
        %v1761 = vpow.pop %v1760
        %v1762 = vmul.f32 %v1737, 1.442695
        %v1763 = vpow.pop %v1762
        %v1764 = vmul.f32 %v1738, 1.442695
        %v1765 = vpow.pop %v1764
        %v1766 = vmul.f32 %v1739, 1.442695
        %v1767 = vpow.pop %v1766
        %v1768 = vmul.f32 %v1740, 1.442695
        %v1769 = vpow.pop %v1768
        %v1770 = vmul.f32 %v1741, 1.442695
        %v1771 = vpow.pop %v1770
        %v1772 = vmul.f32 %v1742, 1.442695
        %v1773 = vpow.pop %v1772
        %v1774 = vmul.f32 %v1743, 1.442695
        %v1775 = vpow.pop %v1774
        %1776 = vadd.xlane.f32.xlu0 %v1745
        %v1777 = vpop.xlane.xlu0 %1776
        %1778 = vadd.xlane.f32.xlu0 %v1747
        %v1779 = vpop.xlane.xlu0 %1778
        %1780 = vadd.xlane.f32.xlu0 %v1749
        %v1781 = vpop.xlane.xlu0 %1780
        %1782 = vadd.xlane.f32.xlu0 %v1751
        %v1783 = vpop.xlane.xlu0 %1782
        %1784 = vadd.xlane.f32.xlu0 %v1753
        %v1785 = vpop.xlane.xlu0 %1784
        %1786 = vadd.xlane.f32.xlu0 %v1755
        %v1787 = vpop.xlane.xlu0 %1786
        %1788 = vadd.xlane.f32.xlu0 %v1757
        %v1789 = vpop.xlane.xlu0 %1788
        %1790 = vadd.xlane.f32.xlu0 %v1759
        %v1791 = vpop.xlane.xlu0 %1790
        %1792 = vadd.xlane.f32.xlu0 %v1761
        %v1793 = vpop.xlane.xlu0 %1792
        %1794 = vadd.xlane.f32.xlu0 %v1763
        %v1795 = vpop.xlane.xlu0 %1794
        %1796 = vadd.xlane.f32.xlu0 %v1765
        %v1797 = vpop.xlane.xlu0 %1796
        %1798 = vadd.xlane.f32.xlu0 %v1767
        %v1799 = vpop.xlane.xlu0 %1798
        %1800 = vadd.xlane.f32.xlu0 %v1769
        %v1801 = vpop.xlane.xlu0 %1800
        %1802 = vadd.xlane.f32.xlu0 %v1771
        %v1803 = vpop.xlane.xlu0 %1802
        %1804 = vadd.xlane.f32.xlu0 %v1773
        %v1805 = vpop.xlane.xlu0 %1804
        %1806 = vadd.xlane.f32.xlu0 %v1775
        %v1807 = vpop.xlane.xlu0 %1806
        %v1808 = vrcp.pop %v1777
        %v1809 = vrcp.pop %v1779
        %v1810 = vrcp.pop %v1781
        %v1811 = vrcp.pop %v1783
        %v1812 = vrcp.pop %v1785
        %v1813 = vrcp.pop %v1787
        %v1814 = vrcp.pop %v1789
        %v1815 = vrcp.pop %v1791
        %v1816 = vrcp.pop %v1793
        %v1817 = vrcp.pop %v1795
        %v1818 = vrcp.pop %v1797
        %v1819 = vrcp.pop %v1799
        %v1820 = vrcp.pop %v1801
        %v1821 = vrcp.pop %v1803
        %v1822 = vrcp.pop %v1805
        %v1823 = vrcp.pop %v1807
        %v1824 = vmul.f32 %v1745, %v1808
        %v1825 = vmul.f32 %v1747, %v1809
        %v1826 = vmul.f32 %v1749, %v1810
        %v1827 = vmul.f32 %v1751, %v1811
        %v1828 = vmul.f32 %v1753, %v1812
        %v1829 = vmul.f32 %v1755, %v1813
        %v1830 = vmul.f32 %v1757, %v1814
        %v1831 = vmul.f32 %v1759, %v1815
        %v1832 = vmul.f32 %v1761, %v1816
        %v1833 = vmul.f32 %v1763, %v1817
        %v1834 = vmul.f32 %v1765, %v1818
        %v1835 = vmul.f32 %v1767, %v1819
        %v1836 = vmul.f32 %v1769, %v1820
        %v1837 = vmul.f32 %v1771, %v1821
        %v1838 = vmul.f32 %v1773, %v1822
        %v1839 = vmul.f32 %v1775, %v1823
        %v1840 = vpack.c.bf16 %v1825, %v1824
        %v1841 = vpack.c.bf16 %v1827, %v1826
        %v1842 = vpack.c.bf16 %v1829, %v1828
        %v1843 = vpack.c.bf16 %v1831, %v1830
        %v1844 = vpack.c.bf16 %v1833, %v1832
        %v1845 = vpack.c.bf16 %v1835, %v1834
        %v1846 = vpack.c.bf16 %v1837, %v1836
        %v1847 = vpack.c.bf16 %v1839, %v1838
        %v1848 = vpack.c.bf16 %v1517, %v1514
        %v1849 = vpack.c.bf16 %v1525, %v1522
        %v1850 = vpack.c.bf16 %v1533, %v1530
        %v1851 = vpack.c.bf16 %v1541, %v1538
        %v1852 = vpack.c.bf16 %v1549, %v1546
        %v1853 = vpack.c.bf16 %v1557, %v1554
        %v1854 = vpack.c.bf16 %v1565, %v1562
        %v1855 = vpack.c.bf16 %v1573, %v1570
        %1856 = vmatprep.subr.bf16.mxu0 0
        %1857 = vmatpush1.bf16.msra.mxu0 %v1848
        %1858 = vmatprep.subr.bf16.mxu0 0
        %1859 = vmatpush1.bf16.msra.mxu0 %v1849
        %1860 = vmatprep.subr.bf16.mxu0 0
        %1861 = vmatpush1.bf16.msra.mxu0 %v1850
        %1862 = vmatprep.subr.bf16.mxu0 0
        %1863 = vmatpush1.bf16.msra.mxu0 %v1851
        %1864 = vmatprep.subr.bf16.mxu0 0
        %1865 = vmatpush1.bf16.msra.mxu0 %v1852
        %1866 = vmatprep.subr.bf16.mxu0 0
        %1867 = vmatpush1.bf16.msra.mxu0 %v1853
        %1868 = vmatprep.subr.bf16.mxu0 0
        %1869 = vmatpush1.bf16.msra.mxu0 %v1854
        %1870 = vmatprep.subr.bf16.mxu0 0
        %1871 = vmatpush1.bf16.msra.mxu0 %v1855
        %1872 = vmatprep.subr.bf16.mxu0 0
        %1873 = vmatpush1.bf16.msra.mxu0 0
        %1874 = vmatprep.subr.bf16.mxu0 0
        %1875 = vmatpush1.bf16.msra.mxu0 0
        %1876 = vmatprep.subr.bf16.mxu0 0
        %1877 = vmatpush1.bf16.msra.mxu0 0
        %1878 = vmatprep.subr.bf16.mxu0 0
        %1879 = vmatpush1.bf16.msra.mxu0 0
        %1880 = vmatprep.subr.bf16.mxu0 0
        %1881 = vmatpush1.bf16.msra.mxu0 0
        %1882 = vmatprep.subr.bf16.mxu0 0
        %1883 = vmatpush1.bf16.msra.mxu0 0
        %1884 = vmatprep.subr.bf16.mxu0 0
        %1885 = vmatpush1.bf16.msra.mxu0 0
        %1886 = vmatprep.subr.bf16.mxu0 0
        %1887 = vmatpush1.bf16.msra.mxu0 0
        %1888 = vmatprep.mubr.bf16.mxu0 0
        %1889 = vmatmul.mubr.bf16.gmra.mrb[0].mxu0 %v1840
        %v1890 = vpop.f32.mrb[0].mxu0
        %v1891 = vadd.f32 0.0, %v1890
        %v1892 = vpop.f32.mrb[0].mxu0
        %v1893 = vpop.f32.mrb[0].mxu0
        %v1894 = vadd.f32 0.0, %v1893
        %v1895 = vpop.f32.mrb[0].mxu0
        %1896 = vmatprep.mubr.bf16.mxu0 0
        %1897 = vmatmul.mubr.bf16.gmra.mrb[0].mxu0 %v1841
        %v1898 = vpop.f32.mrb[0].mxu0
        %v1899 = vadd.f32 0.0, %v1898
        %v1900 = vpop.f32.mrb[0].mxu0
        %v1901 = vpop.f32.mrb[0].mxu0
        %v1902 = vadd.f32 0.0, %v1901
        %v1903 = vpop.f32.mrb[0].mxu0
        %1904 = vmatprep.mubr.bf16.mxu0 0
        %1905 = vmatmul.mubr.bf16.gmra.mrb[0].mxu0 %v1842
        %v1906 = vpop.f32.mrb[0].mxu0
        %v1907 = vadd.f32 0.0, %v1906
        %v1908 = vpop.f32.mrb[0].mxu0
        %v1909 = vpop.f32.mrb[0].mxu0
        %v1910 = vadd.f32 0.0, %v1909
        %v1911 = vpop.f32.mrb[0].mxu0
        %1912 = vmatprep.mubr.bf16.mxu0 0
        %1913 = vmatmul.mubr.bf16.gmra.mrb[0].mxu0 %v1843
        %v1914 = vpop.f32.mrb[0].mxu0
        %v1915 = vadd.f32 0.0, %v1914
        %v1916 = vpop.f32.mrb[0].mxu0
        %v1917 = vpop.f32.mrb[0].mxu0
        %v1918 = vadd.f32 0.0, %v1917
        %v1919 = vpop.f32.mrb[0].mxu0
        %1920 = vmatprep.mubr.bf16.mxu0 0
        %1921 = vmatmul.mubr.bf16.gmra.mrb[0].mxu0 %v1844
        %v1922 = vpop.f32.mrb[0].mxu0
        %v1923 = vadd.f32 0.0, %v1922
        %v1924 = vpop.f32.mrb[0].mxu0
        %v1925 = vpop.f32.mrb[0].mxu0
        %v1926 = vadd.f32 0.0, %v1925
        %v1927 = vpop.f32.mrb[0].mxu0
        %1928 = vmatprep.mubr.bf16.mxu0 0
        %1929 = vmatmul.mubr.bf16.gmra.mrb[0].mxu0 %v1845
        %v1930 = vpop.f32.mrb[0].mxu0
        %v1931 = vadd.f32 0.0, %v1930
        %v1932 = vpop.f32.mrb[0].mxu0
        %v1933 = vpop.f32.mrb[0].mxu0
        %v1934 = vadd.f32 0.0, %v1933
        %v1935 = vpop.f32.mrb[0].mxu0
        %1936 = vmatprep.mubr.bf16.mxu0 0
        %1937 = vmatmul.mubr.bf16.gmra.mrb[0].mxu0 %v1846
        %v1938 = vpop.f32.mrb[0].mxu0
        %v1939 = vadd.f32 0.0, %v1938
        %v1940 = vpop.f32.mrb[0].mxu0
        %v1941 = vpop.f32.mrb[0].mxu0
        %v1942 = vadd.f32 0.0, %v1941
        %v1943 = vpop.f32.mrb[0].mxu0
        %1944 = vmatprep.mubr.bf16.mxu0 0
        %1945 = vmatmul.mubr.bf16.gmra.mrb[0].mxu0 %v1847
        %v1946 = vpop.f32.mrb[0].mxu0
        %v1947 = vadd.f32 0.0, %v1946
        %v1948 = vpop.f32.mrb[0].mxu0
        %v1949 = vpop.f32.mrb[0].mxu0
        %v1950 = vadd.f32 0.0, %v1949
        %v1951 = vpop.f32.mrb[0].mxu0
        %1952 = vdwg.mxu0
        %v1953 = vpack.c.bf16 %v1894, %v1891
        %v1954 = vpack.c.bf16 %v1902, %v1899
        %v1955 = vpack.c.bf16 %v1910, %v1907
        %v1956 = vpack.c.bf16 %v1918, %v1915
        %v1957 = vpack.c.bf16 %v1926, %v1923
        %v1958 = vpack.c.bf16 %v1934, %v1931
        %v1959 = vpack.c.bf16 %v1942, %v1939
        %v1960 = vpack.c.bf16 %v1950, %v1947
        %v1961 = vld [vmem:[#allocation2 + $0xc] sm:$0xf]
        %v1962 = vld [vmem:[#allocation2 + $0x30] sm:$0xf]
        %v1963 = vld [vmem:[#allocation2 + $0x54] sm:$0xf]
        %v1964 = vld [vmem:[#allocation2 + $0x78] sm:$0xf]
        %v1965 = vld [vmem:[#allocation2 + $0x9c] sm:$0xf]
        %v1966 = vld [vmem:[#allocation2 + $0xc0] sm:$0xf]
        %v1967 = vld [vmem:[#allocation2 + $0xe4] sm:$0xf]
        %v1968 = vld [vmem:[#allocation2 + $0x108] sm:$0xf]
        %v1969 = vld [vmem:[#allocation2 + $0x12c] sm:$0xf]
        %v1970 = vld [vmem:[#allocation2 + $0x150] sm:$0xf]
        %v1971 = vld [vmem:[#allocation2 + $0x174] sm:$0xf]
        %v1972 = vld [vmem:[#allocation2 + $0x198] sm:$0xf]
        %v1973 = vld [vmem:[#allocation2 + $0x1bc] sm:$0xf]
        %v1974 = vld [vmem:[#allocation2 + $0x1e0] sm:$0xf]
        %v1975 = vld [vmem:[#allocation2 + $0x204] sm:$0xf]
        %v1976 = vld [vmem:[#allocation2 + $0x228] sm:$0xf]
        %v1993 = vunpack.c.l.b16 %v1961
        %v1994 = vunpack.c.l.b16 %v1962
        %v1995 = vunpack.c.l.b16 %v1963
        %v1996 = vunpack.c.l.b16 %v1964
        %v1997 = vunpack.c.l.b16 %v1965
        %v1998 = vunpack.c.l.b16 %v1966
        %v1999 = vunpack.c.l.b16 %v1967
        %v2000 = vunpack.c.l.b16 %v1968
        %v2001 = vunpack.c.l.b16 %v1969
        %v2002 = vunpack.c.l.b16 %v1970
        %v2003 = vunpack.c.l.b16 %v1971
        %v2004 = vunpack.c.l.b16 %v1972
        %v2005 = vunpack.c.l.b16 %v1973
        %v2006 = vunpack.c.l.b16 %v1974
        %v2007 = vunpack.c.l.b16 %v1975
        %v2008 = vunpack.c.l.b16 %v1976
        %v2009 = vpack.c.b16 %v1994, %v1993
        %v2010 = vpack.c.b16 %v1996, %v1995
        %v2011 = vpack.c.b16 %v1998, %v1997
        %v2012 = vpack.c.b16 %v2000, %v1999
        %v2013 = vpack.c.b16 %v2002, %v2001
        %v2014 = vpack.c.b16 %v2004, %v2003
        %v2015 = vpack.c.b16 %v2006, %v2005
        %v2016 = vpack.c.b16 %v2008, %v2007
        %2025 = vmatprep.subr.bf16.mxu0 0
        %2026 = vmatpush1.bf16.msra.mxu0 %v2009
        %2027 = vmatprep.subr.bf16.mxu0 0
        %2028 = vmatpush1.bf16.msra.mxu0 %v2010
        %2029 = vmatprep.subr.bf16.mxu0 0
        %2030 = vmatpush1.bf16.msra.mxu0 %v2011
        %2031 = vmatprep.subr.bf16.mxu0 0
        %2032 = vmatpush1.bf16.msra.mxu0 %v2012
        %2033 = vmatprep.subr.bf16.mxu0 0
        %2034 = vmatpush1.bf16.msra.mxu0 %v2013
        %2035 = vmatprep.subr.bf16.mxu0 0
        %2036 = vmatpush1.bf16.msra.mxu0 %v2014
        %2037 = vmatprep.subr.bf16.mxu0 0
        %2038 = vmatpush1.bf16.msra.mxu0 %v2015
        %2039 = vmatprep.subr.bf16.mxu0 0
        %2040 = vmatpush1.bf16.msra.mxu0 %v2016
        %2041 = vmatprep.subr.bf16.mxu0 0
        %2042 = vmatpush1.bf16.msra.mxu0 0
        %2043 = vmatprep.subr.bf16.mxu0 0
        %2044 = vmatpush1.bf16.msra.mxu0 0
        %2045 = vmatprep.subr.bf16.mxu0 0
        %2046 = vmatpush1.bf16.msra.mxu0 0
        %2047 = vmatprep.subr.bf16.mxu0 0
        %2048 = vmatpush1.bf16.msra.mxu0 0
        %2049 = vmatprep.subr.bf16.mxu0 0
        %2050 = vmatpush1.bf16.msra.mxu0 0
        %2051 = vmatprep.subr.bf16.mxu0 0
        %2052 = vmatpush1.bf16.msra.mxu0 0
        %2053 = vmatprep.subr.bf16.mxu0 0
        %2054 = vmatpush1.bf16.msra.mxu0 0
        %2055 = vmatprep.subr.bf16.mxu0 0
        %2056 = vmatpush1.bf16.msra.mxu0 0
        %2057 = vmatprep.mubr.bf16.mxu0 0
        %2058 = vmatmul.mubr.bf16.gmra.mrb[0].mxu0 %v1953
        %v2059 = vpop.f32.mrb[0].mxu0
        %v2060 = vadd.f32 0.0, %v2059
        %v2061 = vpop.f32.mrb[0].mxu0
        %v2062 = vpop.f32.mrb[0].mxu0
        %v2063 = vadd.f32 0.0, %v2062
        %v2064 = vpop.f32.mrb[0].mxu0
        %2065 = vmatprep.mubr.bf16.mxu0 0
        %2066 = vmatmul.mubr.bf16.gmra.mrb[0].mxu0 %v1954
        %v2067 = vpop.f32.mrb[0].mxu0
        %v2068 = vadd.f32 0.0, %v2067
        %v2069 = vpop.f32.mrb[0].mxu0
        %v2070 = vpop.f32.mrb[0].mxu0
        %v2071 = vadd.f32 0.0, %v2070
        %v2072 = vpop.f32.mrb[0].mxu0
        %2073 = vmatprep.mubr.bf16.mxu0 0
        %2074 = vmatmul.mubr.bf16.gmra.mrb[0].mxu0 %v1955
        %v2075 = vpop.f32.mrb[0].mxu0
        %v2076 = vadd.f32 0.0, %v2075
        %v2077 = vpop.f32.mrb[0].mxu0
        %v2078 = vpop.f32.mrb[0].mxu0
        %v2079 = vadd.f32 0.0, %v2078
        %v2080 = vpop.f32.mrb[0].mxu0
        %2081 = vmatprep.mubr.bf16.mxu0 0
        %2082 = vmatmul.mubr.bf16.gmra.mrb[0].mxu0 %v1956
        %v2083 = vpop.f32.mrb[0].mxu0
        %v2084 = vadd.f32 0.0, %v2083
        %v2085 = vpop.f32.mrb[0].mxu0
        %v2086 = vpop.f32.mrb[0].mxu0
        %v2087 = vadd.f32 0.0, %v2086
        %v2088 = vpop.f32.mrb[0].mxu0
        %2089 = vmatprep.mubr.bf16.mxu0 0
        %2090 = vmatmul.mubr.bf16.gmra.mrb[0].mxu0 %v1957
        %v2091 = vpop.f32.mrb[0].mxu0
        %v2092 = vadd.f32 0.0, %v2091
        %v2093 = vpop.f32.mrb[0].mxu0
        %v2094 = vpop.f32.mrb[0].mxu0
        %v2095 = vadd.f32 0.0, %v2094
        %v2096 = vpop.f32.mrb[0].mxu0
        %2097 = vmatprep.mubr.bf16.mxu0 0
        %2098 = vmatmul.mubr.bf16.gmra.mrb[0].mxu0 %v1958
        %v2099 = vpop.f32.mrb[0].mxu0
        %v2100 = vadd.f32 0.0, %v2099
        %v2101 = vpop.f32.mrb[0].mxu0
        %v2102 = vpop.f32.mrb[0].mxu0
        %v2103 = vadd.f32 0.0, %v2102
        %v2104 = vpop.f32.mrb[0].mxu0
        %2105 = vmatprep.mubr.bf16.mxu0 0
        %2106 = vmatmul.mubr.bf16.gmra.mrb[0].mxu0 %v1959
        %v2107 = vpop.f32.mrb[0].mxu0
        %v2108 = vadd.f32 0.0, %v2107
        %v2109 = vpop.f32.mrb[0].mxu0
        %v2110 = vpop.f32.mrb[0].mxu0
        %v2111 = vadd.f32 0.0, %v2110
        %v2112 = vpop.f32.mrb[0].mxu0
        %2113 = vmatprep.mubr.bf16.mxu0 0
        %2114 = vmatmul.mubr.bf16.gmra.mrb[0].mxu0 %v1960
        %v2115 = vpop.f32.mrb[0].mxu0
        %v2116 = vadd.f32 0.0, %v2115
        %v2117 = vpop.f32.mrb[0].mxu0
        %v2118 = vpop.f32.mrb[0].mxu0
        %v2119 = vadd.f32 0.0, %v2118
        %v2120 = vpop.f32.mrb[0].mxu0
        %2121 = vdwg.mxu0
        %v2122 = vadd.f32 %v469, %v2060
        %v2123 = vadd.f32 %v472, %v2063
        %v2124 = vadd.f32 %v477, %v2068
        %v2125 = vadd.f32 %v480, %v2071
        %v2126 = vadd.f32 %v485, %v2076
        %v2127 = vadd.f32 %v488, %v2079
        %v2128 = vadd.f32 %v493, %v2084
        %v2129 = vadd.f32 %v496, %v2087
        %v2130 = vadd.f32 %v501, %v2092
        %v2131 = vadd.f32 %v504, %v2095
        %v2132 = vadd.f32 %v509, %v2100
        %v2133 = vadd.f32 %v512, %v2103
        %v2134 = vadd.f32 %v517, %v2108
        %v2135 = vadd.f32 %v520, %v2111
        %v2136 = vadd.f32 %v525, %v2116
        %v2137 = vadd.f32 %v528, %v2119
        %v2138 = vld [vmem:[%s6 + $0x3] sm:$0x1]
        %v2139 = vlaneseq
        %v2140 = vshrl.u32 %v2139, 7
        %v2141 = vsub.s32 0, %v2140
        %v2142 = vrot.slane %v2138, %v2141
        %v2143 = vadd.f32 %v2122, %v2142
        %v2144 = vadd.f32 %v2123, %v2142
        %v2145 = vadd.f32 %v2124, %v2142
        %v2146 = vadd.f32 %v2125, %v2142
        %v2147 = vadd.f32 %v2126, %v2142
        %v2148 = vadd.f32 %v2127, %v2142
        %v2149 = vadd.f32 %v2128, %v2142
        %v2150 = vadd.f32 %v2129, %v2142
        %v2151 = vadd.f32 %v2130, %v2142
        %v2152 = vadd.f32 %v2131, %v2142
        %v2153 = vadd.f32 %v2132, %v2142
        %v2154 = vadd.f32 %v2133, %v2142
        %v2155 = vadd.f32 %v2134, %v2142
        %v2156 = vadd.f32 %v2135, %v2142
        %v2157 = vadd.f32 %v2136, %v2142
        %v2158 = vadd.f32 %v2137, %v2142
        %v2159 = vpack.c.bf16 %v2144, %v2143
        %v2160 = vpack.c.bf16 %v2146, %v2145
        %v2161 = vpack.c.bf16 %v2148, %v2147
        %v2162 = vpack.c.bf16 %v2150, %v2149
        %v2163 = vpack.c.bf16 %v2152, %v2151
        %v2164 = vpack.c.bf16 %v2154, %v2153
        %v2165 = vpack.c.bf16 %v2156, %v2155
        %v2166 = vpack.c.bf16 %v2158, %v2157
        %v2167 = vld [vmem:[#allocation2 + $0x10] sm:$0xf]
        %v2168 = vld [vmem:[#allocation2 + $0x34] sm:$0xf]
        %v2169 = vld [vmem:[#allocation2 + $0x58] sm:$0xf]
        %v2170 = vld [vmem:[#allocation2 + $0x7c] sm:$0xf]
        %v2171 = vld [vmem:[#allocation2 + $0xa0] sm:$0xf]
        %v2172 = vld [vmem:[#allocation2 + $0xc4] sm:$0xf]
        %v2173 = vld [vmem:[#allocation2 + $0xe8] sm:$0xf]
        %v2174 = vld [vmem:[#allocation2 + $0x10c] sm:$0xf]
        %v2175 = vld [vmem:[#allocation2 + $0x130] sm:$0xf]
        %v2176 = vld [vmem:[#allocation2 + $0x154] sm:$0xf]
        %v2177 = vld [vmem:[#allocation2 + $0x178] sm:$0xf]
        %v2178 = vld [vmem:[#allocation2 + $0x19c] sm:$0xf]
        %v2179 = vld [vmem:[#allocation2 + $0x1c0] sm:$0xf]
        %v2180 = vld [vmem:[#allocation2 + $0x1e4] sm:$0xf]
        %v2181 = vld [vmem:[#allocation2 + $0x208] sm:$0xf]
        %v2182 = vld [vmem:[#allocation2 + $0x22c] sm:$0xf]
        %v2183 = vld [vmem:[%s6 + $0x4] sm:$0x1]
        %v2184 = vlaneseq
        %v2185 = vshrl.u32 %v2184, 7
        %v2186 = vsub.s32 0, %v2185
        %v2187 = vrot.slane %v2183, %v2186
        %v2204 = vunpack.c.l.b16 %v2167
        %v2205 = vunpack.c.l.b16 %v2168
        %v2206 = vunpack.c.l.b16 %v2169
        %v2207 = vunpack.c.l.b16 %v2170
        %v2208 = vunpack.c.l.b16 %v2171
        %v2209 = vunpack.c.l.b16 %v2172
        %v2210 = vunpack.c.l.b16 %v2173
        %v2211 = vunpack.c.l.b16 %v2174
        %v2212 = vunpack.c.l.b16 %v2175
        %v2213 = vunpack.c.l.b16 %v2176
        %v2214 = vunpack.c.l.b16 %v2177
        %v2215 = vunpack.c.l.b16 %v2178
        %v2216 = vunpack.c.l.b16 %v2179
        %v2217 = vunpack.c.l.b16 %v2180
        %v2218 = vunpack.c.l.b16 %v2181
        %v2219 = vunpack.c.l.b16 %v2182
        %v2220 = vpack.c.b16 %v2205, %v2204
        %v2221 = vpack.c.b16 %v2207, %v2206
        %v2222 = vpack.c.b16 %v2209, %v2208
        %v2223 = vpack.c.b16 %v2211, %v2210
        %v2224 = vpack.c.b16 %v2213, %v2212
        %v2225 = vpack.c.b16 %v2215, %v2214
        %v2226 = vpack.c.b16 %v2217, %v2216
        %v2227 = vpack.c.b16 %v2219, %v2218
        %2236 = vmatprep.subr.bf16.mxu0 0
        %2237 = vmatpush1.bf16.msra.mxu0 %v2220
        %2238 = vmatprep.subr.bf16.mxu0 0
        %2239 = vmatpush1.bf16.msra.mxu0 %v2221
        %2240 = vmatprep.subr.bf16.mxu0 0
        %2241 = vmatpush1.bf16.msra.mxu0 %v2222
        %2242 = vmatprep.subr.bf16.mxu0 0
        %2243 = vmatpush1.bf16.msra.mxu0 %v2223
        %2244 = vmatprep.subr.bf16.mxu0 0
        %2245 = vmatpush1.bf16.msra.mxu0 %v2224
        %2246 = vmatprep.subr.bf16.mxu0 0
        %2247 = vmatpush1.bf16.msra.mxu0 %v2225
        %2248 = vmatprep.subr.bf16.mxu0 0
        %2249 = vmatpush1.bf16.msra.mxu0 %v2226
        %2250 = vmatprep.subr.bf16.mxu0 0
        %2251 = vmatpush1.bf16.msra.mxu0 %v2227
        %2252 = vmatprep.subr.bf16.mxu0 0
        %2253 = vmatpush1.bf16.msra.mxu0 0
        %2254 = vmatprep.subr.bf16.mxu0 0
        %2255 = vmatpush1.bf16.msra.mxu0 0
        %2256 = vmatprep.subr.bf16.mxu0 0
        %2257 = vmatpush1.bf16.msra.mxu0 0
        %2258 = vmatprep.subr.bf16.mxu0 0
        %2259 = vmatpush1.bf16.msra.mxu0 0
        %2260 = vmatprep.subr.bf16.mxu0 0
        %2261 = vmatpush1.bf16.msra.mxu0 0
        %2262 = vmatprep.subr.bf16.mxu0 0
        %2263 = vmatpush1.bf16.msra.mxu0 0
        %2264 = vmatprep.subr.bf16.mxu0 0
        %2265 = vmatpush1.bf16.msra.mxu0 0
        %2266 = vmatprep.subr.bf16.mxu0 0
        %2267 = vmatpush1.bf16.msra.mxu0 0
        %2268 = vmatprep.mubr.bf16.mxu0 0
        %2269 = vmatmul.mubr.bf16.gmra.mrb[0].mxu0 %v2159
        %v2270 = vpop.f32.mrb[0].mxu0
        %v2271 = vadd.f32 %v2187, %v2270
        %v2272 = vpop.f32.mrb[0].mxu0
        %v2273 = vpop.f32.mrb[0].mxu0
        %v2274 = vadd.f32 %v2187, %v2273
        %v2275 = vpop.f32.mrb[0].mxu0
        %2276 = vmatprep.mubr.bf16.mxu0 0
        %2277 = vmatmul.mubr.bf16.gmra.mrb[0].mxu0 %v2160
        %v2278 = vpop.f32.mrb[0].mxu0
        %v2279 = vadd.f32 %v2187, %v2278
        %v2280 = vpop.f32.mrb[0].mxu0
        %v2281 = vpop.f32.mrb[0].mxu0
        %v2282 = vadd.f32 %v2187, %v2281
        %v2283 = vpop.f32.mrb[0].mxu0
        %2284 = vmatprep.mubr.bf16.mxu0 0
        %2285 = vmatmul.mubr.bf16.gmra.mrb[0].mxu0 %v2161
        %v2286 = vpop.f32.mrb[0].mxu0
        %v2287 = vadd.f32 %v2187, %v2286
        %v2288 = vpop.f32.mrb[0].mxu0
        %v2289 = vpop.f32.mrb[0].mxu0
        %v2290 = vadd.f32 %v2187, %v2289
        %v2291 = vpop.f32.mrb[0].mxu0
        %2292 = vmatprep.mubr.bf16.mxu0 0
        %2293 = vmatmul.mubr.bf16.gmra.mrb[0].mxu0 %v2162
        %v2294 = vpop.f32.mrb[0].mxu0
        %v2295 = vadd.f32 %v2187, %v2294
        %v2296 = vpop.f32.mrb[0].mxu0
        %v2297 = vpop.f32.mrb[0].mxu0
        %v2298 = vadd.f32 %v2187, %v2297
        %v2299 = vpop.f32.mrb[0].mxu0
        %2300 = vmatprep.mubr.bf16.mxu0 0
        %2301 = vmatmul.mubr.bf16.gmra.mrb[0].mxu0 %v2163
        %v2302 = vpop.f32.mrb[0].mxu0
        %v2303 = vadd.f32 %v2187, %v2302
        %v2304 = vpop.f32.mrb[0].mxu0
        %v2305 = vpop.f32.mrb[0].mxu0
        %v2306 = vadd.f32 %v2187, %v2305
        %v2307 = vpop.f32.mrb[0].mxu0
        %2308 = vmatprep.mubr.bf16.mxu0 0
        %2309 = vmatmul.mubr.bf16.gmra.mrb[0].mxu0 %v2164
        %v2310 = vpop.f32.mrb[0].mxu0
        %v2311 = vadd.f32 %v2187, %v2310
        %v2312 = vpop.f32.mrb[0].mxu0
        %v2313 = vpop.f32.mrb[0].mxu0
        %v2314 = vadd.f32 %v2187, %v2313
        %v2315 = vpop.f32.mrb[0].mxu0
        %2316 = vmatprep.mubr.bf16.mxu0 0
        %2317 = vmatmul.mubr.bf16.gmra.mrb[0].mxu0 %v2165
        %v2318 = vpop.f32.mrb[0].mxu0
        %v2319 = vadd.f32 %v2187, %v2318
        %v2320 = vpop.f32.mrb[0].mxu0
        %v2321 = vpop.f32.mrb[0].mxu0
        %v2322 = vadd.f32 %v2187, %v2321
        %v2323 = vpop.f32.mrb[0].mxu0
        %2324 = vmatprep.mubr.bf16.mxu0 0
        %2325 = vmatmul.mubr.bf16.gmra.mrb[0].mxu0 %v2166
        %v2326 = vpop.f32.mrb[0].mxu0
        %v2327 = vadd.f32 %v2187, %v2326
        %v2328 = vpop.f32.mrb[0].mxu0
        %v2329 = vpop.f32.mrb[0].mxu0
        %v2330 = vadd.f32 %v2187, %v2329
        %v2331 = vpop.f32.mrb[0].mxu0
        %2332 = vdwg.mxu0
        %v2333 = vmul.f32 %v2271, %v2271
        %v2334 = vmul.f32 %v2274, %v2274
        %v2335 = vmul.f32 %v2279, %v2279
        %v2336 = vmul.f32 %v2282, %v2282
        %v2337 = vmul.f32 %v2287, %v2287
        %v2338 = vmul.f32 %v2290, %v2290
        %v2339 = vmul.f32 %v2295, %v2295
        %v2340 = vmul.f32 %v2298, %v2298
        %v2341 = vmul.f32 %v2303, %v2303
        %v2342 = vmul.f32 %v2306, %v2306
        %v2343 = vmul.f32 %v2311, %v2311
        %v2344 = vmul.f32 %v2314, %v2314
        %v2345 = vmul.f32 %v2319, %v2319
        %v2346 = vmul.f32 %v2322, %v2322
        %v2347 = vmul.f32 %v2327, %v2327
        %v2348 = vmul.f32 %v2330, %v2330
        %v2349 = vmul.f32 %v2271, %v2333
        %v2350 = vmul.f32 %v2274, %v2334
        %v2351 = vmul.f32 %v2279, %v2335
        %v2352 = vmul.f32 %v2282, %v2336
        %v2353 = vmul.f32 %v2287, %v2337
        %v2354 = vmul.f32 %v2290, %v2338
        %v2355 = vmul.f32 %v2295, %v2339
        %v2356 = vmul.f32 %v2298, %v2340
        %v2357 = vmul.f32 %v2303, %v2341
        %v2358 = vmul.f32 %v2306, %v2342
        %v2359 = vmul.f32 %v2311, %v2343
        %v2360 = vmul.f32 %v2314, %v2344
        %v2361 = vmul.f32 %v2319, %v2345
        %v2362 = vmul.f32 %v2322, %v2346
        %v2363 = vmul.f32 %v2327, %v2347
        %v2364 = vmul.f32 %v2330, %v2348
        %v2365 = vmul.f32 %v2349, 0.044715
        %v2366 = vmul.f32 %v2350, 0.044715
        %v2367 = vmul.f32 %v2351, 0.044715
        %v2368 = vmul.f32 %v2352, 0.044715
        %v2369 = vmul.f32 %v2353, 0.044715
        %v2370 = vmul.f32 %v2354, 0.044715
        %v2371 = vmul.f32 %v2355, 0.044715
        %v2372 = vmul.f32 %v2356, 0.044715
        %v2373 = vmul.f32 %v2357, 0.044715
        %v2374 = vmul.f32 %v2358, 0.044715
        %v2375 = vmul.f32 %v2359, 0.044715
        %v2376 = vmul.f32 %v2360, 0.044715
        %v2377 = vmul.f32 %v2361, 0.044715
        %v2378 = vmul.f32 %v2362, 0.044715
        %v2379 = vmul.f32 %v2363, 0.044715
        %v2380 = vmul.f32 %v2364, 0.044715
        %v2381 = vadd.f32 %v2271, %v2365
        %v2382 = vadd.f32 %v2274, %v2366
        %v2383 = vadd.f32 %v2279, %v2367
        %v2384 = vadd.f32 %v2282, %v2368
        %v2385 = vadd.f32 %v2287, %v2369
        %v2386 = vadd.f32 %v2290, %v2370
        %v2387 = vadd.f32 %v2295, %v2371
        %v2388 = vadd.f32 %v2298, %v2372
        %v2389 = vadd.f32 %v2303, %v2373
        %v2390 = vadd.f32 %v2306, %v2374
        %v2391 = vadd.f32 %v2311, %v2375
        %v2392 = vadd.f32 %v2314, %v2376
        %v2393 = vadd.f32 %v2319, %v2377
        %v2394 = vadd.f32 %v2322, %v2378
        %v2395 = vadd.f32 %v2327, %v2379
        %v2396 = vadd.f32 %v2330, %v2380
        %v2397 = vmul.f32 %v2381, 0.7978846
        %v2398 = vmul.f32 %v2382, 0.7978846
        %v2399 = vmul.f32 %v2383, 0.7978846
        %v2400 = vmul.f32 %v2384, 0.7978846
        %v2401 = vmul.f32 %v2385, 0.7978846
        %v2402 = vmul.f32 %v2386, 0.7978846
        %v2403 = vmul.f32 %v2387, 0.7978846
        %v2404 = vmul.f32 %v2388, 0.7978846
        %v2405 = vmul.f32 %v2389, 0.7978846
        %v2406 = vmul.f32 %v2390, 0.7978846
        %v2407 = vmul.f32 %v2391, 0.7978846
        %v2408 = vmul.f32 %v2392, 0.7978846
        %v2409 = vmul.f32 %v2393, 0.7978846
        %v2410 = vmul.f32 %v2394, 0.7978846
        %v2411 = vmul.f32 %v2395, 0.7978846
        %v2412 = vmul.f32 %v2396, 0.7978846
        %v2413 = vtanh.pop %v2397
        %v2414 = vtanh.pop %v2398
        %v2415 = vtanh.pop %v2399
        %v2416 = vtanh.pop %v2400
        %v2417 = vtanh.pop %v2401
        %v2418 = vtanh.pop %v2402
        %v2419 = vtanh.pop %v2403
        %v2420 = vtanh.pop %v2404
        %v2421 = vtanh.pop %v2405
        %v2422 = vtanh.pop %v2406
        %v2423 = vtanh.pop %v2407
        %v2424 = vtanh.pop %v2408
        %v2425 = vtanh.pop %v2409
        %v2426 = vtanh.pop %v2410
        %v2427 = vtanh.pop %v2411
        %v2428 = vtanh.pop %v2412
        %v2429 = vadd.f32 %v2413, 1.0
        %v2430 = vadd.f32 %v2414, 1.0
        %v2431 = vadd.f32 %v2415, 1.0
        %v2432 = vadd.f32 %v2416, 1.0
        %v2433 = vadd.f32 %v2417, 1.0
        %v2434 = vadd.f32 %v2418, 1.0
        %v2435 = vadd.f32 %v2419, 1.0
        %v2436 = vadd.f32 %v2420, 1.0
        %v2437 = vadd.f32 %v2421, 1.0
        %v2438 = vadd.f32 %v2422, 1.0
        %v2439 = vadd.f32 %v2423, 1.0
        %v2440 = vadd.f32 %v2424, 1.0
        %v2441 = vadd.f32 %v2425, 1.0
        %v2442 = vadd.f32 %v2426, 1.0
        %v2443 = vadd.f32 %v2427, 1.0
        %v2444 = vadd.f32 %v2428, 1.0
        %v2445 = vmul.f32 %v2429, 0.5
        %v2446 = vmul.f32 %v2430, 0.5
        %v2447 = vmul.f32 %v2431, 0.5
        %v2448 = vmul.f32 %v2432, 0.5
        %v2449 = vmul.f32 %v2433, 0.5
        %v2450 = vmul.f32 %v2434, 0.5
        %v2451 = vmul.f32 %v2435, 0.5
        %v2452 = vmul.f32 %v2436, 0.5
        %v2453 = vmul.f32 %v2437, 0.5
        %v2454 = vmul.f32 %v2438, 0.5
        %v2455 = vmul.f32 %v2439, 0.5
        %v2456 = vmul.f32 %v2440, 0.5
        %v2457 = vmul.f32 %v2441, 0.5
        %v2458 = vmul.f32 %v2442, 0.5
        %v2459 = vmul.f32 %v2443, 0.5
        %v2460 = vmul.f32 %v2444, 0.5
        %v2461 = vmul.f32 %v2271, %v2445
        %v2462 = vmul.f32 %v2274, %v2446
        %v2463 = vmul.f32 %v2279, %v2447
        %v2464 = vmul.f32 %v2282, %v2448
        %v2465 = vmul.f32 %v2287, %v2449
        %v2466 = vmul.f32 %v2290, %v2450
        %v2467 = vmul.f32 %v2295, %v2451
        %v2468 = vmul.f32 %v2298, %v2452
        %v2469 = vmul.f32 %v2303, %v2453
        %v2470 = vmul.f32 %v2306, %v2454
        %v2471 = vmul.f32 %v2311, %v2455
        %v2472 = vmul.f32 %v2314, %v2456
        %v2473 = vmul.f32 %v2319, %v2457
        %v2474 = vmul.f32 %v2322, %v2458
        %v2475 = vmul.f32 %v2327, %v2459
        %v2476 = vmul.f32 %v2330, %v2460
        %v2477 = vpack.c.bf16 %v2462, %v2461
        %v2478 = vpack.c.bf16 %v2464, %v2463
        %v2479 = vpack.c.bf16 %v2466, %v2465
        %v2480 = vpack.c.bf16 %v2468, %v2467
        %v2481 = vpack.c.bf16 %v2470, %v2469
        %v2482 = vpack.c.bf16 %v2472, %v2471
        %v2483 = vpack.c.bf16 %v2474, %v2473
        %v2484 = vpack.c.bf16 %v2476, %v2475
        %v2485 = vld [vmem:[#allocation2 + $0x14] sm:$0xf]
        %v2486 = vld [vmem:[#allocation2 + $0x38] sm:$0xf]
        %v2487 = vld [vmem:[#allocation2 + $0x5c] sm:$0xf]
        %v2488 = vld [vmem:[#allocation2 + $0x80] sm:$0xf]
        %v2489 = vld [vmem:[#allocation2 + $0xa4] sm:$0xf]
        %v2490 = vld [vmem:[#allocation2 + $0xc8] sm:$0xf]
        %v2491 = vld [vmem:[#allocation2 + $0xec] sm:$0xf]
        %v2492 = vld [vmem:[#allocation2 + $0x110] sm:$0xf]
        %v2493 = vld [vmem:[#allocation2 + $0x134] sm:$0xf]
        %v2494 = vld [vmem:[#allocation2 + $0x158] sm:$0xf]
        %v2495 = vld [vmem:[#allocation2 + $0x17c] sm:$0xf]
        %v2496 = vld [vmem:[#allocation2 + $0x1a0] sm:$0xf]
        %v2497 = vld [vmem:[#allocation2 + $0x1c4] sm:$0xf]
        %v2498 = vld [vmem:[#allocation2 + $0x1e8] sm:$0xf]
        %v2499 = vld [vmem:[#allocation2 + $0x20c] sm:$0xf]
        %v2500 = vld [vmem:[#allocation2 + $0x230] sm:$0xf]
        %v2501 = vld [vmem:[%s6 + $0x5] sm:$0x1]
        %v2502 = vlaneseq
        %v2503 = vshrl.u32 %v2502, 7
        %v2504 = vsub.s32 0, %v2503
        %v2505 = vrot.slane %v2501, %v2504
        %v2522 = vunpack.c.l.b16 %v2485
        %v2523 = vunpack.c.l.b16 %v2486
        %v2524 = vunpack.c.l.b16 %v2487
        %v2525 = vunpack.c.l.b16 %v2488
        %v2526 = vunpack.c.l.b16 %v2489
        %v2527 = vunpack.c.l.b16 %v2490
        %v2528 = vunpack.c.l.b16 %v2491
        %v2529 = vunpack.c.l.b16 %v2492
        %v2530 = vunpack.c.l.b16 %v2493
        %v2531 = vunpack.c.l.b16 %v2494
        %v2532 = vunpack.c.l.b16 %v2495
        %v2533 = vunpack.c.l.b16 %v2496
        %v2534 = vunpack.c.l.b16 %v2497
        %v2535 = vunpack.c.l.b16 %v2498
        %v2536 = vunpack.c.l.b16 %v2499
        %v2537 = vunpack.c.l.b16 %v2500
        %v2538 = vpack.c.b16 %v2523, %v2522
        %v2539 = vpack.c.b16 %v2525, %v2524
        %v2540 = vpack.c.b16 %v2527, %v2526
        %v2541 = vpack.c.b16 %v2529, %v2528
        %v2542 = vpack.c.b16 %v2531, %v2530
        %v2543 = vpack.c.b16 %v2533, %v2532
        %v2544 = vpack.c.b16 %v2535, %v2534
        %v2545 = vpack.c.b16 %v2537, %v2536
        %2554 = vmatprep.subr.bf16.mxu0 0
        %2555 = vmatpush1.bf16.msra.mxu0 %v2538
        %2556 = vmatprep.subr.bf16.mxu0 0
        %2557 = vmatpush1.bf16.msra.mxu0 %v2539
        %2558 = vmatprep.subr.bf16.mxu0 0
        %2559 = vmatpush1.bf16.msra.mxu0 %v2540
        %2560 = vmatprep.subr.bf16.mxu0 0
        %2561 = vmatpush1.bf16.msra.mxu0 %v2541
        %2562 = vmatprep.subr.bf16.mxu0 0
        %2563 = vmatpush1.bf16.msra.mxu0 %v2542
        %2564 = vmatprep.subr.bf16.mxu0 0
        %2565 = vmatpush1.bf16.msra.mxu0 %v2543
        %2566 = vmatprep.subr.bf16.mxu0 0
        %2567 = vmatpush1.bf16.msra.mxu0 %v2544
        %2568 = vmatprep.subr.bf16.mxu0 0
        %2569 = vmatpush1.bf16.msra.mxu0 %v2545
        %2570 = vmatprep.subr.bf16.mxu0 0
        %2571 = vmatpush1.bf16.msra.mxu0 0
        %2572 = vmatprep.subr.bf16.mxu0 0
        %2573 = vmatpush1.bf16.msra.mxu0 0
        %2574 = vmatprep.subr.bf16.mxu0 0
        %2575 = vmatpush1.bf16.msra.mxu0 0
        %2576 = vmatprep.subr.bf16.mxu0 0
        %2577 = vmatpush1.bf16.msra.mxu0 0
        %2578 = vmatprep.subr.bf16.mxu0 0
        %2579 = vmatpush1.bf16.msra.mxu0 0
        %2580 = vmatprep.subr.bf16.mxu0 0
        %2581 = vmatpush1.bf16.msra.mxu0 0
        %2582 = vmatprep.subr.bf16.mxu0 0
        %2583 = vmatpush1.bf16.msra.mxu0 0
        %2584 = vmatprep.subr.bf16.mxu0 0
        %2585 = vmatpush1.bf16.msra.mxu0 0
        %2586 = vmatprep.mubr.bf16.mxu0 0
        %2587 = vmatmul.mubr.bf16.gmra.mrb[0].mxu0 %v2159
        %v2588 = vpop.f32.mrb[0].mxu0
        %v2589 = vadd.f32 %v2505, %v2588
        %v2590 = vpop.f32.mrb[0].mxu0
        %v2591 = vpop.f32.mrb[0].mxu0
        %v2592 = vadd.f32 %v2505, %v2591
        %v2593 = vpop.f32.mrb[0].mxu0
        %2594 = vmatprep.mubr.bf16.mxu0 0
        %2595 = vmatmul.mubr.bf16.gmra.mrb[0].mxu0 %v2160
        %v2596 = vpop.f32.mrb[0].mxu0
        %v2597 = vadd.f32 %v2505, %v2596
        %v2598 = vpop.f32.mrb[0].mxu0
        %v2599 = vpop.f32.mrb[0].mxu0
        %v2600 = vadd.f32 %v2505, %v2599
        %v2601 = vpop.f32.mrb[0].mxu0
        %2602 = vmatprep.mubr.bf16.mxu0 0
        %2603 = vmatmul.mubr.bf16.gmra.mrb[0].mxu0 %v2161
        %v2604 = vpop.f32.mrb[0].mxu0
        %v2605 = vadd.f32 %v2505, %v2604
        %v2606 = vpop.f32.mrb[0].mxu0
        %v2607 = vpop.f32.mrb[0].mxu0
        %v2608 = vadd.f32 %v2505, %v2607
        %v2609 = vpop.f32.mrb[0].mxu0
        %2610 = vmatprep.mubr.bf16.mxu0 0
        %2611 = vmatmul.mubr.bf16.gmra.mrb[0].mxu0 %v2162
        %v2612 = vpop.f32.mrb[0].mxu0
        %v2613 = vadd.f32 %v2505, %v2612
        %v2614 = vpop.f32.mrb[0].mxu0
        %v2615 = vpop.f32.mrb[0].mxu0
        %v2616 = vadd.f32 %v2505, %v2615
        %v2617 = vpop.f32.mrb[0].mxu0
        %2618 = vmatprep.mubr.bf16.mxu0 0
        %2619 = vmatmul.mubr.bf16.gmra.mrb[0].mxu0 %v2163
        %v2620 = vpop.f32.mrb[0].mxu0
        %v2621 = vadd.f32 %v2505, %v2620
        %v2622 = vpop.f32.mrb[0].mxu0
        %v2623 = vpop.f32.mrb[0].mxu0
        %v2624 = vadd.f32 %v2505, %v2623
        %v2625 = vpop.f32.mrb[0].mxu0
        %2626 = vmatprep.mubr.bf16.mxu0 0
        %2627 = vmatmul.mubr.bf16.gmra.mrb[0].mxu0 %v2164
        %v2628 = vpop.f32.mrb[0].mxu0
        %v2629 = vadd.f32 %v2505, %v2628
        %v2630 = vpop.f32.mrb[0].mxu0
        %v2631 = vpop.f32.mrb[0].mxu0
        %v2632 = vadd.f32 %v2505, %v2631
        %v2633 = vpop.f32.mrb[0].mxu0
        %2634 = vmatprep.mubr.bf16.mxu0 0
        %2635 = vmatmul.mubr.bf16.gmra.mrb[0].mxu0 %v2165
        %v2636 = vpop.f32.mrb[0].mxu0
        %v2637 = vadd.f32 %v2505, %v2636
        %v2638 = vpop.f32.mrb[0].mxu0
        %v2639 = vpop.f32.mrb[0].mxu0
        %v2640 = vadd.f32 %v2505, %v2639
        %v2641 = vpop.f32.mrb[0].mxu0
        %2642 = vmatprep.mubr.bf16.mxu0 0
        %2643 = vmatmul.mubr.bf16.gmra.mrb[0].mxu0 %v2166
        %v2644 = vpop.f32.mrb[0].mxu0
        %v2645 = vadd.f32 %v2505, %v2644
        %v2646 = vpop.f32.mrb[0].mxu0
        %v2647 = vpop.f32.mrb[0].mxu0
        %v2648 = vadd.f32 %v2505, %v2647
        %v2649 = vpop.f32.mrb[0].mxu0
        %2650 = vdwg.mxu0
        %v2651 = vmul.f32 %v2589, %v2589
        %v2652 = vmul.f32 %v2592, %v2592
        %v2653 = vmul.f32 %v2597, %v2597
        %v2654 = vmul.f32 %v2600, %v2600
        %v2655 = vmul.f32 %v2605, %v2605
        %v2656 = vmul.f32 %v2608, %v2608
        %v2657 = vmul.f32 %v2613, %v2613
        %v2658 = vmul.f32 %v2616, %v2616
        %v2659 = vmul.f32 %v2621, %v2621
        %v2660 = vmul.f32 %v2624, %v2624
        %v2661 = vmul.f32 %v2629, %v2629
        %v2662 = vmul.f32 %v2632, %v2632
        %v2663 = vmul.f32 %v2637, %v2637
        %v2664 = vmul.f32 %v2640, %v2640
        %v2665 = vmul.f32 %v2645, %v2645
        %v2666 = vmul.f32 %v2648, %v2648
        %v2667 = vmul.f32 %v2589, %v2651
        %v2668 = vmul.f32 %v2592, %v2652
        %v2669 = vmul.f32 %v2597, %v2653
        %v2670 = vmul.f32 %v2600, %v2654
        %v2671 = vmul.f32 %v2605, %v2655
        %v2672 = vmul.f32 %v2608, %v2656
        %v2673 = vmul.f32 %v2613, %v2657
        %v2674 = vmul.f32 %v2616, %v2658
        %v2675 = vmul.f32 %v2621, %v2659
        %v2676 = vmul.f32 %v2624, %v2660
        %v2677 = vmul.f32 %v2629, %v2661
        %v2678 = vmul.f32 %v2632, %v2662
        %v2679 = vmul.f32 %v2637, %v2663
        %v2680 = vmul.f32 %v2640, %v2664
        %v2681 = vmul.f32 %v2645, %v2665
        %v2682 = vmul.f32 %v2648, %v2666
        %v2683 = vmul.f32 %v2667, 0.044715
        %v2684 = vmul.f32 %v2668, 0.044715
        %v2685 = vmul.f32 %v2669, 0.044715
        %v2686 = vmul.f32 %v2670, 0.044715
        %v2687 = vmul.f32 %v2671, 0.044715
        %v2688 = vmul.f32 %v2672, 0.044715
        %v2689 = vmul.f32 %v2673, 0.044715
        %v2690 = vmul.f32 %v2674, 0.044715
        %v2691 = vmul.f32 %v2675, 0.044715
        %v2692 = vmul.f32 %v2676, 0.044715
        %v2693 = vmul.f32 %v2677, 0.044715
        %v2694 = vmul.f32 %v2678, 0.044715
        %v2695 = vmul.f32 %v2679, 0.044715
        %v2696 = vmul.f32 %v2680, 0.044715
        %v2697 = vmul.f32 %v2681, 0.044715
        %v2698 = vmul.f32 %v2682, 0.044715
        %v2699 = vadd.f32 %v2589, %v2683
        %v2700 = vadd.f32 %v2592, %v2684
        %v2701 = vadd.f32 %v2597, %v2685
        %v2702 = vadd.f32 %v2600, %v2686
        %v2703 = vadd.f32 %v2605, %v2687
        %v2704 = vadd.f32 %v2608, %v2688
        %v2705 = vadd.f32 %v2613, %v2689
        %v2706 = vadd.f32 %v2616, %v2690
        %v2707 = vadd.f32 %v2621, %v2691
        %v2708 = vadd.f32 %v2624, %v2692
        %v2709 = vadd.f32 %v2629, %v2693
        %v2710 = vadd.f32 %v2632, %v2694
        %v2711 = vadd.f32 %v2637, %v2695
        %v2712 = vadd.f32 %v2640, %v2696
        %v2713 = vadd.f32 %v2645, %v2697
        %v2714 = vadd.f32 %v2648, %v2698
        %v2715 = vmul.f32 %v2699, 0.7978846
        %v2716 = vmul.f32 %v2700, 0.7978846
        %v2717 = vmul.f32 %v2701, 0.7978846
        %v2718 = vmul.f32 %v2702, 0.7978846
        %v2719 = vmul.f32 %v2703, 0.7978846
        %v2720 = vmul.f32 %v2704, 0.7978846
        %v2721 = vmul.f32 %v2705, 0.7978846
        %v2722 = vmul.f32 %v2706, 0.7978846
        %v2723 = vmul.f32 %v2707, 0.7978846
        %v2724 = vmul.f32 %v2708, 0.7978846
        %v2725 = vmul.f32 %v2709, 0.7978846
        %v2726 = vmul.f32 %v2710, 0.7978846
        %v2727 = vmul.f32 %v2711, 0.7978846
        %v2728 = vmul.f32 %v2712, 0.7978846
        %v2729 = vmul.f32 %v2713, 0.7978846
        %v2730 = vmul.f32 %v2714, 0.7978846
        %v2731 = vtanh.pop %v2715
        %v2732 = vtanh.pop %v2716
        %v2733 = vtanh.pop %v2717
        %v2734 = vtanh.pop %v2718
        %v2735 = vtanh.pop %v2719
        %v2736 = vtanh.pop %v2720
        %v2737 = vtanh.pop %v2721
        %v2738 = vtanh.pop %v2722
        %v2739 = vtanh.pop %v2723
        %v2740 = vtanh.pop %v2724
        %v2741 = vtanh.pop %v2725
        %v2742 = vtanh.pop %v2726
        %v2743 = vtanh.pop %v2727
        %v2744 = vtanh.pop %v2728
        %v2745 = vtanh.pop %v2729
        %v2746 = vtanh.pop %v2730
        %v2747 = vadd.f32 %v2731, 1.0
        %v2748 = vadd.f32 %v2732, 1.0
        %v2749 = vadd.f32 %v2733, 1.0
        %v2750 = vadd.f32 %v2734, 1.0
        %v2751 = vadd.f32 %v2735, 1.0
        %v2752 = vadd.f32 %v2736, 1.0
        %v2753 = vadd.f32 %v2737, 1.0
        %v2754 = vadd.f32 %v2738, 1.0
        %v2755 = vadd.f32 %v2739, 1.0
        %v2756 = vadd.f32 %v2740, 1.0
        %v2757 = vadd.f32 %v2741, 1.0
        %v2758 = vadd.f32 %v2742, 1.0
        %v2759 = vadd.f32 %v2743, 1.0
        %v2760 = vadd.f32 %v2744, 1.0
        %v2761 = vadd.f32 %v2745, 1.0
        %v2762 = vadd.f32 %v2746, 1.0
        %v2763 = vmul.f32 %v2747, 0.5
        %v2764 = vmul.f32 %v2748, 0.5
        %v2765 = vmul.f32 %v2749, 0.5
        %v2766 = vmul.f32 %v2750, 0.5
        %v2767 = vmul.f32 %v2751, 0.5
        %v2768 = vmul.f32 %v2752, 0.5
        %v2769 = vmul.f32 %v2753, 0.5
        %v2770 = vmul.f32 %v2754, 0.5
        %v2771 = vmul.f32 %v2755, 0.5
        %v2772 = vmul.f32 %v2756, 0.5
        %v2773 = vmul.f32 %v2757, 0.5
        %v2774 = vmul.f32 %v2758, 0.5
        %v2775 = vmul.f32 %v2759, 0.5
        %v2776 = vmul.f32 %v2760, 0.5
        %v2777 = vmul.f32 %v2761, 0.5
        %v2778 = vmul.f32 %v2762, 0.5
        %v2779 = vmul.f32 %v2589, %v2763
        %v2780 = vmul.f32 %v2592, %v2764
        %v2781 = vmul.f32 %v2597, %v2765
        %v2782 = vmul.f32 %v2600, %v2766
        %v2783 = vmul.f32 %v2605, %v2767
        %v2784 = vmul.f32 %v2608, %v2768
        %v2785 = vmul.f32 %v2613, %v2769
        %v2786 = vmul.f32 %v2616, %v2770
        %v2787 = vmul.f32 %v2621, %v2771
        %v2788 = vmul.f32 %v2624, %v2772
        %v2789 = vmul.f32 %v2629, %v2773
        %v2790 = vmul.f32 %v2632, %v2774
        %v2791 = vmul.f32 %v2637, %v2775
        %v2792 = vmul.f32 %v2640, %v2776
        %v2793 = vmul.f32 %v2645, %v2777
        %v2794 = vmul.f32 %v2648, %v2778
        %v2795 = vpack.c.bf16 %v2780, %v2779
        %v2796 = vpack.c.bf16 %v2782, %v2781
        %v2797 = vpack.c.bf16 %v2784, %v2783
        %v2798 = vpack.c.bf16 %v2786, %v2785
        %v2799 = vpack.c.bf16 %v2788, %v2787
        %v2800 = vpack.c.bf16 %v2790, %v2789
        %v2801 = vpack.c.bf16 %v2792, %v2791
        %v2802 = vpack.c.bf16 %v2794, %v2793
        %v2803 = vld [vmem:[#allocation2 + $0x18] sm:$0xf]
        %v2804 = vld [vmem:[#allocation2 + $0x3c] sm:$0xf]
        %v2805 = vld [vmem:[#allocation2 + $0x60] sm:$0xf]
        %v2806 = vld [vmem:[#allocation2 + $0x84] sm:$0xf]
        %v2807 = vld [vmem:[#allocation2 + $0xa8] sm:$0xf]
        %v2808 = vld [vmem:[#allocation2 + $0xcc] sm:$0xf]
        %v2809 = vld [vmem:[#allocation2 + $0xf0] sm:$0xf]
        %v2810 = vld [vmem:[#allocation2 + $0x114] sm:$0xf]
        %v2811 = vld [vmem:[#allocation2 + $0x138] sm:$0xf]
        %v2812 = vld [vmem:[#allocation2 + $0x15c] sm:$0xf]
        %v2813 = vld [vmem:[#allocation2 + $0x180] sm:$0xf]
        %v2814 = vld [vmem:[#allocation2 + $0x1a4] sm:$0xf]
        %v2815 = vld [vmem:[#allocation2 + $0x1c8] sm:$0xf]
        %v2816 = vld [vmem:[#allocation2 + $0x1ec] sm:$0xf]
        %v2817 = vld [vmem:[#allocation2 + $0x210] sm:$0xf]
        %v2818 = vld [vmem:[#allocation2 + $0x234] sm:$0xf]
        %v2819 = vld [vmem:[#allocation2 + $0x1c] sm:$0xf]
        %v2820 = vld [vmem:[#allocation2 + $0x40] sm:$0xf]
        %v2821 = vld [vmem:[#allocation2 + $0x64] sm:$0xf]
        %v2822 = vld [vmem:[#allocation2 + $0x88] sm:$0xf]
        %v2823 = vld [vmem:[#allocation2 + $0xac] sm:$0xf]
        %v2824 = vld [vmem:[#allocation2 + $0xd0] sm:$0xf]
        %v2825 = vld [vmem:[#allocation2 + $0xf4] sm:$0xf]
        %v2826 = vld [vmem:[#allocation2 + $0x118] sm:$0xf]
        %v2827 = vld [vmem:[#allocation2 + $0x13c] sm:$0xf]
        %v2828 = vld [vmem:[#allocation2 + $0x160] sm:$0xf]
        %v2829 = vld [vmem:[#allocation2 + $0x184] sm:$0xf]
        %v2830 = vld [vmem:[#allocation2 + $0x1a8] sm:$0xf]
        %v2831 = vld [vmem:[#allocation2 + $0x1cc] sm:$0xf]
        %v2832 = vld [vmem:[#allocation2 + $0x1f0] sm:$0xf]
        %v2833 = vld [vmem:[#allocation2 + $0x214] sm:$0xf]
        %v2834 = vld [vmem:[#allocation2 + $0x238] sm:$0xf]
        %v2851 = vunpack.c.l.b16 %v2819
        %v2852 = vunpack.c.l.b16 %v2820
        %v2853 = vunpack.c.l.b16 %v2821
        %v2854 = vunpack.c.l.b16 %v2822
        %v2855 = vunpack.c.l.b16 %v2823
        %v2856 = vunpack.c.l.b16 %v2824
        %v2857 = vunpack.c.l.b16 %v2825
        %v2858 = vunpack.c.l.b16 %v2826
        %v2859 = vunpack.c.l.b16 %v2827
        %v2860 = vunpack.c.l.b16 %v2828
        %v2861 = vunpack.c.l.b16 %v2829
        %v2862 = vunpack.c.l.b16 %v2830
        %v2863 = vunpack.c.l.b16 %v2831
        %v2864 = vunpack.c.l.b16 %v2832
        %v2865 = vunpack.c.l.b16 %v2833
        %v2866 = vunpack.c.l.b16 %v2834
        %v2867 = vpack.c.b16 %v2852, %v2851
        %v2868 = vpack.c.b16 %v2854, %v2853
        %v2869 = vpack.c.b16 %v2856, %v2855
        %v2870 = vpack.c.b16 %v2858, %v2857
        %v2871 = vpack.c.b16 %v2860, %v2859
        %v2872 = vpack.c.b16 %v2862, %v2861
        %v2873 = vpack.c.b16 %v2864, %v2863
        %v2874 = vpack.c.b16 %v2866, %v2865
        %2883 = vmatprep.subr.bf16.mxu0 0
        %2884 = vmatpush1.bf16.msra.mxu0 %v2867
        %2885 = vmatprep.subr.bf16.mxu0 0
        %2886 = vmatpush1.bf16.msra.mxu0 %v2868
        %2887 = vmatprep.subr.bf16.mxu0 0
        %2888 = vmatpush1.bf16.msra.mxu0 %v2869
        %2889 = vmatprep.subr.bf16.mxu0 0
        %2890 = vmatpush1.bf16.msra.mxu0 %v2870
        %2891 = vmatprep.subr.bf16.mxu0 0
        %2892 = vmatpush1.bf16.msra.mxu0 %v2871
        %2893 = vmatprep.subr.bf16.mxu0 0
        %2894 = vmatpush1.bf16.msra.mxu0 %v2872
        %2895 = vmatprep.subr.bf16.mxu0 0
        %2896 = vmatpush1.bf16.msra.mxu0 %v2873
        %2897 = vmatprep.subr.bf16.mxu0 0
        %2898 = vmatpush1.bf16.msra.mxu0 %v2874
        %2899 = vmatprep.subr.bf16.mxu0 0
        %2900 = vmatpush1.bf16.msra.mxu0 0
        %2901 = vmatprep.subr.bf16.mxu0 0
        %2902 = vmatpush1.bf16.msra.mxu0 0
        %2903 = vmatprep.subr.bf16.mxu0 0
        %2904 = vmatpush1.bf16.msra.mxu0 0
        %2905 = vmatprep.subr.bf16.mxu0 0
        %2906 = vmatpush1.bf16.msra.mxu0 0
        %2907 = vmatprep.subr.bf16.mxu0 0
        %2908 = vmatpush1.bf16.msra.mxu0 0
        %2909 = vmatprep.subr.bf16.mxu0 0
        %2910 = vmatpush1.bf16.msra.mxu0 0
        %2911 = vmatprep.subr.bf16.mxu0 0
        %2912 = vmatpush1.bf16.msra.mxu0 0
        %2913 = vmatprep.subr.bf16.mxu0 0
        %2914 = vmatpush1.bf16.msra.mxu0 0
        %2915 = vmatprep.mubr.bf16.mxu0 0
        %2916 = vmatmul.mubr.bf16.gmra.mrb[0].mxu0 %v2795
        %v2917 = vpop.f32.mrb[0].mxu0
        %v2918 = vadd.f32 0.0, %v2917
        %v2919 = vpop.f32.mrb[0].mxu0
        %v2920 = vpop.f32.mrb[0].mxu0
        %v2921 = vadd.f32 0.0, %v2920
        %v2922 = vpop.f32.mrb[0].mxu0
        %2923 = vmatprep.mubr.bf16.mxu0 0
        %2924 = vmatmul.mubr.bf16.gmra.mrb[0].mxu0 %v2796
        %v2925 = vpop.f32.mrb[0].mxu0
        %v2926 = vadd.f32 0.0, %v2925
        %v2927 = vpop.f32.mrb[0].mxu0
        %v2928 = vpop.f32.mrb[0].mxu0
        %v2929 = vadd.f32 0.0, %v2928
        %v2930 = vpop.f32.mrb[0].mxu0
        %2931 = vmatprep.mubr.bf16.mxu0 0
        %2932 = vmatmul.mubr.bf16.gmra.mrb[0].mxu0 %v2797
        %v2933 = vpop.f32.mrb[0].mxu0
        %v2934 = vadd.f32 0.0, %v2933
        %v2935 = vpop.f32.mrb[0].mxu0
        %v2936 = vpop.f32.mrb[0].mxu0
        %v2937 = vadd.f32 0.0, %v2936
        %v2938 = vpop.f32.mrb[0].mxu0
        %2939 = vmatprep.mubr.bf16.mxu0 0
        %2940 = vmatmul.mubr.bf16.gmra.mrb[0].mxu0 %v2798
        %v2941 = vpop.f32.mrb[0].mxu0
        %v2942 = vadd.f32 0.0, %v2941
        %v2943 = vpop.f32.mrb[0].mxu0
        %v2944 = vpop.f32.mrb[0].mxu0
        %v2945 = vadd.f32 0.0, %v2944
        %v2946 = vpop.f32.mrb[0].mxu0
        %2947 = vmatprep.mubr.bf16.mxu0 0
        %2948 = vmatmul.mubr.bf16.gmra.mrb[0].mxu0 %v2799
        %v2949 = vpop.f32.mrb[0].mxu0
        %v2950 = vadd.f32 0.0, %v2949
        %v2951 = vpop.f32.mrb[0].mxu0
        %v2952 = vpop.f32.mrb[0].mxu0
        %v2953 = vadd.f32 0.0, %v2952
        %v2954 = vpop.f32.mrb[0].mxu0
        %2955 = vmatprep.mubr.bf16.mxu0 0
        %2956 = vmatmul.mubr.bf16.gmra.mrb[0].mxu0 %v2800
        %v2957 = vpop.f32.mrb[0].mxu0
        %v2958 = vadd.f32 0.0, %v2957
        %v2959 = vpop.f32.mrb[0].mxu0
        %v2960 = vpop.f32.mrb[0].mxu0
        %v2961 = vadd.f32 0.0, %v2960
        %v2962 = vpop.f32.mrb[0].mxu0
        %2963 = vmatprep.mubr.bf16.mxu0 0
        %2964 = vmatmul.mubr.bf16.gmra.mrb[0].mxu0 %v2801
        %v2965 = vpop.f32.mrb[0].mxu0
        %v2966 = vadd.f32 0.0, %v2965
        %v2967 = vpop.f32.mrb[0].mxu0
        %v2968 = vpop.f32.mrb[0].mxu0
        %v2969 = vadd.f32 0.0, %v2968
        %v2970 = vpop.f32.mrb[0].mxu0
        %2971 = vmatprep.mubr.bf16.mxu0 0
        %2972 = vmatmul.mubr.bf16.gmra.mrb[0].mxu0 %v2802
        %v2973 = vpop.f32.mrb[0].mxu0
        %v2974 = vadd.f32 0.0, %v2973
        %v2975 = vpop.f32.mrb[0].mxu0
        %v2976 = vpop.f32.mrb[0].mxu0
        %v2977 = vadd.f32 0.0, %v2976
        %v2978 = vpop.f32.mrb[0].mxu0
        %2979 = vdwg.mxu0
        %v2996 = vunpack.c.l.b16 %v2803
        %v2997 = vunpack.c.l.b16 %v2804
        %v2998 = vunpack.c.l.b16 %v2805
        %v2999 = vunpack.c.l.b16 %v2806
        %v3000 = vunpack.c.l.b16 %v2807
        %v3001 = vunpack.c.l.b16 %v2808
        %v3002 = vunpack.c.l.b16 %v2809
        %v3003 = vunpack.c.l.b16 %v2810
        %v3004 = vunpack.c.l.b16 %v2811
        %v3005 = vunpack.c.l.b16 %v2812
        %v3006 = vunpack.c.l.b16 %v2813
        %v3007 = vunpack.c.l.b16 %v2814
        %v3008 = vunpack.c.l.b16 %v2815
        %v3009 = vunpack.c.l.b16 %v2816
        %v3010 = vunpack.c.l.b16 %v2817
        %v3011 = vunpack.c.l.b16 %v2818
        %v3012 = vpack.c.b16 %v2997, %v2996
        %v3013 = vpack.c.b16 %v2999, %v2998
        %v3014 = vpack.c.b16 %v3001, %v3000
        %v3015 = vpack.c.b16 %v3003, %v3002
        %v3016 = vpack.c.b16 %v3005, %v3004
        %v3017 = vpack.c.b16 %v3007, %v3006
        %v3018 = vpack.c.b16 %v3009, %v3008
        %v3019 = vpack.c.b16 %v3011, %v3010
        %3028 = vmatprep.subr.bf16.mxu0 0
        %3029 = vmatpush1.bf16.msra.mxu0 %v3012
        %3030 = vmatprep.subr.bf16.mxu0 0
        %3031 = vmatpush1.bf16.msra.mxu0 %v3013
        %3032 = vmatprep.subr.bf16.mxu0 0
        %3033 = vmatpush1.bf16.msra.mxu0 %v3014
        %3034 = vmatprep.subr.bf16.mxu0 0
        %3035 = vmatpush1.bf16.msra.mxu0 %v3015
        %3036 = vmatprep.subr.bf16.mxu0 0
        %3037 = vmatpush1.bf16.msra.mxu0 %v3016
        %3038 = vmatprep.subr.bf16.mxu0 0
        %3039 = vmatpush1.bf16.msra.mxu0 %v3017
        %3040 = vmatprep.subr.bf16.mxu0 0
        %3041 = vmatpush1.bf16.msra.mxu0 %v3018
        %3042 = vmatprep.subr.bf16.mxu0 0
        %3043 = vmatpush1.bf16.msra.mxu0 %v3019
        %3044 = vmatprep.subr.bf16.mxu0 0
        %3045 = vmatpush1.bf16.msra.mxu0 0
        %3046 = vmatprep.subr.bf16.mxu0 0
        %3047 = vmatpush1.bf16.msra.mxu0 0
        %3048 = vmatprep.subr.bf16.mxu0 0
        %3049 = vmatpush1.bf16.msra.mxu0 0
        %3050 = vmatprep.subr.bf16.mxu0 0
        %3051 = vmatpush1.bf16.msra.mxu0 0
        %3052 = vmatprep.subr.bf16.mxu0 0
        %3053 = vmatpush1.bf16.msra.mxu0 0
        %3054 = vmatprep.subr.bf16.mxu0 0
        %3055 = vmatpush1.bf16.msra.mxu0 0
        %3056 = vmatprep.subr.bf16.mxu0 0
        %3057 = vmatpush1.bf16.msra.mxu0 0
        %3058 = vmatprep.subr.bf16.mxu0 0
        %3059 = vmatpush1.bf16.msra.mxu0 0
        %3060 = vmatprep.mubr.bf16.mxu0 0
        %3061 = vmatmul.mubr.bf16.gmra.mrb[0].mxu0 %v2477
        %v3062 = vpop.f32.mrb[0].mxu0
        %v3063 = vadd.f32 %v2918, %v3062
        %v3064 = vpop.f32.mrb[0].mxu0
        %v3065 = vpop.f32.mrb[0].mxu0
        %v3066 = vadd.f32 %v2921, %v3065
        %v3067 = vpop.f32.mrb[0].mxu0
        %3068 = vmatprep.mubr.bf16.mxu0 0
        %3069 = vmatmul.mubr.bf16.gmra.mrb[0].mxu0 %v2478
        %v3070 = vpop.f32.mrb[0].mxu0
        %v3071 = vadd.f32 %v2926, %v3070
        %v3072 = vpop.f32.mrb[0].mxu0
        %v3073 = vpop.f32.mrb[0].mxu0
        %v3074 = vadd.f32 %v2929, %v3073
        %v3075 = vpop.f32.mrb[0].mxu0
        %3076 = vmatprep.mubr.bf16.mxu0 0
        %3077 = vmatmul.mubr.bf16.gmra.mrb[0].mxu0 %v2479
        %v3078 = vpop.f32.mrb[0].mxu0
        %v3079 = vadd.f32 %v2934, %v3078
        %v3080 = vpop.f32.mrb[0].mxu0
        %v3081 = vpop.f32.mrb[0].mxu0
        %v3082 = vadd.f32 %v2937, %v3081
        %v3083 = vpop.f32.mrb[0].mxu0
        %3084 = vmatprep.mubr.bf16.mxu0 0
        %3085 = vmatmul.mubr.bf16.gmra.mrb[0].mxu0 %v2480
        %v3086 = vpop.f32.mrb[0].mxu0
        %v3087 = vadd.f32 %v2942, %v3086
        %v3088 = vpop.f32.mrb[0].mxu0
        %v3089 = vpop.f32.mrb[0].mxu0
        %v3090 = vadd.f32 %v2945, %v3089
        %v3091 = vpop.f32.mrb[0].mxu0
        %3092 = vmatprep.mubr.bf16.mxu0 0
        %3093 = vmatmul.mubr.bf16.gmra.mrb[0].mxu0 %v2481
        %v3094 = vpop.f32.mrb[0].mxu0
        %v3095 = vadd.f32 %v2950, %v3094
        %v3096 = vpop.f32.mrb[0].mxu0
        %v3097 = vpop.f32.mrb[0].mxu0
        %v3098 = vadd.f32 %v2953, %v3097
        %v3099 = vpop.f32.mrb[0].mxu0
        %3100 = vmatprep.mubr.bf16.mxu0 0
        %3101 = vmatmul.mubr.bf16.gmra.mrb[0].mxu0 %v2482
        %v3102 = vpop.f32.mrb[0].mxu0
        %v3103 = vadd.f32 %v2958, %v3102
        %v3104 = vpop.f32.mrb[0].mxu0
        %v3105 = vpop.f32.mrb[0].mxu0
        %v3106 = vadd.f32 %v2961, %v3105
        %v3107 = vpop.f32.mrb[0].mxu0
        %3108 = vmatprep.mubr.bf16.mxu0 0
        %3109 = vmatmul.mubr.bf16.gmra.mrb[0].mxu0 %v2483
        %v3110 = vpop.f32.mrb[0].mxu0
        %v3111 = vadd.f32 %v2966, %v3110
        %v3112 = vpop.f32.mrb[0].mxu0
        %v3113 = vpop.f32.mrb[0].mxu0
        %v3114 = vadd.f32 %v2969, %v3113
        %v3115 = vpop.f32.mrb[0].mxu0
        %3116 = vmatprep.mubr.bf16.mxu0 0
        %3117 = vmatmul.mubr.bf16.gmra.mrb[0].mxu0 %v2484
        %v3118 = vpop.f32.mrb[0].mxu0
        %v3119 = vadd.f32 %v2974, %v3118
        %v3120 = vpop.f32.mrb[0].mxu0
        %v3121 = vpop.f32.mrb[0].mxu0
        %v3122 = vadd.f32 %v2977, %v3121
        %v3123 = vpop.f32.mrb[0].mxu0
        %3124 = vdwg.mxu0
        %v3125 = vld [vmem:[%s6 + $0x6] sm:$0x1]
        %v3126 = vlaneseq
        %v3127 = vshrl.u32 %v3126, 7
        %v3128 = vsub.s32 0, %v3127
        %v3129 = vrot.slane %v3125, %v3128
        %v3130 = vadd.f32 %v3063, %v3129
        %v3131 = vadd.f32 %v3066, %v3129
        %v3132 = vadd.f32 %v3071, %v3129
        %v3133 = vadd.f32 %v3074, %v3129
        %v3134 = vadd.f32 %v3079, %v3129
        %v3135 = vadd.f32 %v3082, %v3129
        %v3136 = vadd.f32 %v3087, %v3129
        %v3137 = vadd.f32 %v3090, %v3129
        %v3138 = vadd.f32 %v3095, %v3129
        %v3139 = vadd.f32 %v3098, %v3129
        %v3140 = vadd.f32 %v3103, %v3129
        %v3141 = vadd.f32 %v3106, %v3129
        %v3142 = vadd.f32 %v3111, %v3129
        %v3143 = vadd.f32 %v3114, %v3129
        %v3144 = vadd.f32 %v3119, %v3129
        %v3145 = vadd.f32 %v3122, %v3129
        %v3146 = vadd.f32 %v2143, %v3130
        %v3147 = vadd.f32 %v2144, %v3131
        %v3148 = vadd.f32 %v2145, %v3132
        %v3149 = vadd.f32 %v2146, %v3133
        %v3150 = vadd.f32 %v2147, %v3134
        %v3151 = vadd.f32 %v2148, %v3135
        %v3152 = vadd.f32 %v2149, %v3136
        %v3153 = vadd.f32 %v2150, %v3137
        %v3154 = vadd.f32 %v2151, %v3138
        %v3155 = vadd.f32 %v2152, %v3139
        %v3156 = vadd.f32 %v2153, %v3140
        %v3157 = vadd.f32 %v2154, %v3141
        %v3158 = vadd.f32 %v2155, %v3142
        %v3159 = vadd.f32 %v2156, %v3143
        %v3160 = vadd.f32 %v2157, %v3144
        %v3161 = vadd.f32 %v2158, %v3145
        %v3162 = vpack.c.bf16 %v3147, %v3146
        %v3163 = vpack.c.bf16 %v3149, %v3148
        %v3164 = vpack.c.bf16 %v3151, %v3150
        %v3165 = vpack.c.bf16 %v3153, %v3152
        %v3166 = vpack.c.bf16 %v3155, %v3154
        %v3167 = vpack.c.bf16 %v3157, %v3156
        %v3168 = vpack.c.bf16 %v3159, %v3158
        %v3169 = vpack.c.bf16 %v3161, %v3160
        %v3170 = vld [vmem:[#allocation2 + $0x20] sm:$0xf]
        %v3171 = vld [vmem:[#allocation2 + $0x44] sm:$0xf]
        %v3172 = vld [vmem:[#allocation2 + $0x68] sm:$0xf]
        %v3173 = vld [vmem:[#allocation2 + $0x8c] sm:$0xf]
        %v3174 = vld [vmem:[#allocation2 + $0xb0] sm:$0xf]
        %v3175 = vld [vmem:[#allocation2 + $0xd4] sm:$0xf]
        %v3176 = vld [vmem:[#allocation2 + $0xf8] sm:$0xf]
        %v3177 = vld [vmem:[#allocation2 + $0x11c] sm:$0xf]
        %v3178 = vld [vmem:[#allocation2 + $0x140] sm:$0xf]
        %v3179 = vld [vmem:[#allocation2 + $0x164] sm:$0xf]
        %v3180 = vld [vmem:[#allocation2 + $0x188] sm:$0xf]
        %v3181 = vld [vmem:[#allocation2 + $0x1ac] sm:$0xf]
        %v3182 = vld [vmem:[#allocation2 + $0x1d0] sm:$0xf]
        %v3183 = vld [vmem:[#allocation2 + $0x1f4] sm:$0xf]
        %v3184 = vld [vmem:[#allocation2 + $0x218] sm:$0xf]
        %v3185 = vld [vmem:[#allocation2 + $0x23c] sm:$0xf]
        %v3186 = vld [vmem:[%s6 + $0x7] sm:$0x1]
        %v3187 = vlaneseq
        %v3188 = vshrl.u32 %v3187, 7
        %v3189 = vsub.s32 0, %v3188
        %v3190 = vrot.slane %v3186, %v3189
        %v3207 = vunpack.c.l.b16 %v3170
        %v3208 = vunpack.c.l.b16 %v3171
        %v3209 = vunpack.c.l.b16 %v3172
        %v3210 = vunpack.c.l.b16 %v3173
        %v3211 = vunpack.c.l.b16 %v3174
        %v3212 = vunpack.c.l.b16 %v3175
        %v3213 = vunpack.c.l.b16 %v3176
        %v3214 = vunpack.c.l.b16 %v3177
        %v3215 = vunpack.c.l.b16 %v3178
        %v3216 = vunpack.c.l.b16 %v3179
        %v3217 = vunpack.c.l.b16 %v3180
        %v3218 = vunpack.c.l.b16 %v3181
        %v3219 = vunpack.c.l.b16 %v3182
        %v3220 = vunpack.c.l.b16 %v3183
        %v3221 = vunpack.c.l.b16 %v3184
        %v3222 = vunpack.c.l.b16 %v3185
        %v3223 = vpack.c.b16 %v3208, %v3207
        %v3224 = vpack.c.b16 %v3210, %v3209
        %v3225 = vpack.c.b16 %v3212, %v3211
        %v3226 = vpack.c.b16 %v3214, %v3213
        %v3227 = vpack.c.b16 %v3216, %v3215
        %v3228 = vpack.c.b16 %v3218, %v3217
        %v3229 = vpack.c.b16 %v3220, %v3219
        %v3230 = vpack.c.b16 %v3222, %v3221
        %3239 = vmatprep.subr.bf16.mxu0 0
        %3240 = vmatpush1.bf16.msra.mxu0 %v3223
        %3241 = vmatprep.subr.bf16.mxu0 0
        %3242 = vmatpush1.bf16.msra.mxu0 %v3224
        %3243 = vmatprep.subr.bf16.mxu0 0
        %3244 = vmatpush1.bf16.msra.mxu0 %v3225
        %3245 = vmatprep.subr.bf16.mxu0 0
        %3246 = vmatpush1.bf16.msra.mxu0 %v3226
        %3247 = vmatprep.subr.bf16.mxu0 0
        %3248 = vmatpush1.bf16.msra.mxu0 %v3227
        %3249 = vmatprep.subr.bf16.mxu0 0
        %3250 = vmatpush1.bf16.msra.mxu0 %v3228
        %3251 = vmatprep.subr.bf16.mxu0 0
        %3252 = vmatpush1.bf16.msra.mxu0 %v3229
        %3253 = vmatprep.subr.bf16.mxu0 0
        %3254 = vmatpush1.bf16.msra.mxu0 %v3230
        %3255 = vmatprep.subr.bf16.mxu0 0
        %3256 = vmatpush1.bf16.msra.mxu0 0
        %3257 = vmatprep.subr.bf16.mxu0 0
        %3258 = vmatpush1.bf16.msra.mxu0 0
        %3259 = vmatprep.subr.bf16.mxu0 0
        %3260 = vmatpush1.bf16.msra.mxu0 0
        %3261 = vmatprep.subr.bf16.mxu0 0
        %3262 = vmatpush1.bf16.msra.mxu0 0
        %3263 = vmatprep.subr.bf16.mxu0 0
        %3264 = vmatpush1.bf16.msra.mxu0 0
        %3265 = vmatprep.subr.bf16.mxu0 0
        %3266 = vmatpush1.bf16.msra.mxu0 0
        %3267 = vmatprep.subr.bf16.mxu0 0
        %3268 = vmatpush1.bf16.msra.mxu0 0
        %3269 = vmatprep.subr.bf16.mxu0 0
        %3270 = vmatpush1.bf16.msra.mxu0 0
        %3271 = vmatprep.mubr.bf16.mxu0 0
        %3272 = vmatmul.mubr.bf16.gmra.mrb[0].mxu0 %v3162
        %v3273 = vpop.f32.mrb[0].mxu0
        %v3274 = vadd.f32 %v3190, %v3273
        %v3275 = vpop.f32.mrb[0].mxu0
        %v3276 = vpop.f32.mrb[0].mxu0
        %v3277 = vadd.f32 %v3190, %v3276
        %v3278 = vpop.f32.mrb[0].mxu0
        %3279 = vmatprep.mubr.bf16.mxu0 0
        %3280 = vmatmul.mubr.bf16.gmra.mrb[0].mxu0 %v3163
        %v3281 = vpop.f32.mrb[0].mxu0
        %v3282 = vadd.f32 %v3190, %v3281
        %v3283 = vpop.f32.mrb[0].mxu0
        %v3284 = vpop.f32.mrb[0].mxu0
        %v3285 = vadd.f32 %v3190, %v3284
        %v3286 = vpop.f32.mrb[0].mxu0
        %3287 = vmatprep.mubr.bf16.mxu0 0
        %3288 = vmatmul.mubr.bf16.gmra.mrb[0].mxu0 %v3164
        %v3289 = vpop.f32.mrb[0].mxu0
        %v3290 = vadd.f32 %v3190, %v3289
        %v3291 = vpop.f32.mrb[0].mxu0
        %v3292 = vpop.f32.mrb[0].mxu0
        %v3293 = vadd.f32 %v3190, %v3292
        %v3294 = vpop.f32.mrb[0].mxu0
        %3295 = vmatprep.mubr.bf16.mxu0 0
        %3296 = vmatmul.mubr.bf16.gmra.mrb[0].mxu0 %v3165
        %v3297 = vpop.f32.mrb[0].mxu0
        %v3298 = vadd.f32 %v3190, %v3297
        %v3299 = vpop.f32.mrb[0].mxu0
        %v3300 = vpop.f32.mrb[0].mxu0
        %v3301 = vadd.f32 %v3190, %v3300
        %v3302 = vpop.f32.mrb[0].mxu0
        %3303 = vmatprep.mubr.bf16.mxu0 0
        %3304 = vmatmul.mubr.bf16.gmra.mrb[0].mxu0 %v3166
        %v3305 = vpop.f32.mrb[0].mxu0
        %v3306 = vadd.f32 %v3190, %v3305
        %v3307 = vpop.f32.mrb[0].mxu0
        %v3308 = vpop.f32.mrb[0].mxu0
        %v3309 = vadd.f32 %v3190, %v3308
        %v3310 = vpop.f32.mrb[0].mxu0
        %3311 = vmatprep.mubr.bf16.mxu0 0
        %3312 = vmatmul.mubr.bf16.gmra.mrb[0].mxu0 %v3167
        %v3313 = vpop.f32.mrb[0].mxu0
        %v3314 = vadd.f32 %v3190, %v3313
        %v3315 = vpop.f32.mrb[0].mxu0
        %v3316 = vpop.f32.mrb[0].mxu0
        %v3317 = vadd.f32 %v3190, %v3316
        %v3318 = vpop.f32.mrb[0].mxu0
        %3319 = vmatprep.mubr.bf16.mxu0 0
        %3320 = vmatmul.mubr.bf16.gmra.mrb[0].mxu0 %v3168
        %v3321 = vpop.f32.mrb[0].mxu0
        %v3322 = vadd.f32 %v3190, %v3321
        %v3323 = vpop.f32.mrb[0].mxu0
        %v3324 = vpop.f32.mrb[0].mxu0
        %v3325 = vadd.f32 %v3190, %v3324
        %v3326 = vpop.f32.mrb[0].mxu0
        %3327 = vmatprep.mubr.bf16.mxu0 0
        %3328 = vmatmul.mubr.bf16.gmra.mrb[0].mxu0 %v3169
        %v3329 = vpop.f32.mrb[0].mxu0
        %v3330 = vadd.f32 %v3190, %v3329
        %v3331 = vpop.f32.mrb[0].mxu0
        %v3332 = vpop.f32.mrb[0].mxu0
        %v3333 = vadd.f32 %v3190, %v3332
        %v3334 = vpop.f32.mrb[0].mxu0
        %3335 = vdwg.mxu0
        %v3336 = vpack.c.bf16 %v3277, %v3274
        %v3337 = vpack.c.bf16 %v3285, %v3282
        %v3338 = vpack.c.bf16 %v3293, %v3290
        %v3339 = vpack.c.bf16 %v3301, %v3298
        %v3340 = vpack.c.bf16 %v3309, %v3306
        %v3341 = vpack.c.bf16 %v3317, %v3314
        %v3342 = vpack.c.bf16 %v3325, %v3322
        %v3343 = vpack.c.bf16 %v3333, %v3330
        %v3352 = vunpack.c.l.b16 %v3336
        %v3353 = vunpack.c.h.b16 %v3336
        %v3354 = vunpack.c.l.b16 %v3337
        %v3355 = vunpack.c.h.b16 %v3337
        %v3356 = vunpack.c.l.b16 %v3338
        %v3357 = vunpack.c.h.b16 %v3338
        %v3358 = vunpack.c.l.b16 %v3339
        %v3359 = vunpack.c.h.b16 %v3339
        %v3360 = vunpack.c.l.b16 %v3340
        %v3361 = vunpack.c.h.b16 %v3340
        %v3362 = vunpack.c.l.b16 %v3341
        %v3363 = vunpack.c.h.b16 %v3341
        %v3364 = vunpack.c.l.b16 %v3342
        %v3365 = vunpack.c.h.b16 %v3342
        %v3366 = vunpack.c.l.b16 %v3343
        %v3367 = vunpack.c.h.b16 %v3343
        %v3368 = vpack.c.b16 %v3352, %v3352
        %v3369 = vpack.c.b16 %v3353, %v3353
        %v3370 = vpack.c.b16 %v3354, %v3354
        %v3371 = vpack.c.b16 %v3355, %v3355
        %v3372 = vpack.c.b16 %v3356, %v3356
        %v3373 = vpack.c.b16 %v3357, %v3357
        %v3374 = vpack.c.b16 %v3358, %v3358
        %v3375 = vpack.c.b16 %v3359, %v3359
        %v3376 = vpack.c.b16 %v3360, %v3360
        %v3377 = vpack.c.b16 %v3361, %v3361
        %v3378 = vpack.c.b16 %v3362, %v3362
        %v3379 = vpack.c.b16 %v3363, %v3363
        %v3380 = vpack.c.b16 %v3364, %v3364
        %v3381 = vpack.c.b16 %v3365, %v3365
        %v3382 = vpack.c.b16 %v3366, %v3366
        %v3383 = vpack.c.b16 %v3367, %v3367
        %3400 = vst [vmem:[%s323] sm:$0xf] %v3368
        %3401 = vst [vmem:[%s323 + $0x4] sm:$0xf] %v3369
        %3402 = vst [vmem:[%s323 + $0x8] sm:$0xf] %v3370
        %3403 = vst [vmem:[%s323 + $0xc] sm:$0xf] %v3371
        %3404 = vst [vmem:[%s323 + $0x10] sm:$0xf] %v3372
        %3405 = vst [vmem:[%s323 + $0x14] sm:$0xf] %v3373
        %3406 = vst [vmem:[%s323 + $0x18] sm:$0xf] %v3374
        %3407 = vst [vmem:[%s323 + $0x1c] sm:$0xf] %v3375
        %3408 = vst [vmem:[%s323 + $0x20] sm:$0xf] %v3376
        %3409 = vst [vmem:[%s323 + $0x24] sm:$0xf] %v3377
        %3410 = vst [vmem:[%s323 + $0x28] sm:$0xf] %v3378
        %3411 = vst [vmem:[%s323 + $0x2c] sm:$0xf] %v3379
        %3412 = vst [vmem:[%s323 + $0x30] sm:$0xf] %v3380
        %3413 = vst [vmem:[%s323 + $0x34] sm:$0xf] %v3381
        %3414 = vst [vmem:[%s323 + $0x38] sm:$0xf] %v3382
        %3415 = vst [vmem:[%s323 + $0x3c] sm:$0xf] %v3383
        %s3416 = sand.u32 %s197, 1
        %s3417 = scalar_lea.sflag [#allocation4], %s3416
        %s3418 = sand.u32 %s197, 1
        %s3419 = smul.addr %s3418, 64
        %s3420 = scalar_lea.vmem [#allocation5], %s3419
        // Predicated region
        $region53: #{tpu_custom_call.1} parent=47 // pred_check
          %p3421 = pneg %p207
        $region54: #{tpu_custom_call.1} parent=47 // pred_check_branch
          %3423 = sbr.rel (%p3421) target = $region56
        $region55: #{tpu_custom_call.1} parent=47 // pred_region
          %s3425 = ssub.s32 1024, 1024
          %3426 = vsyncadd %s3417, %s3425
          %s3427 = smul.addr %s22, 16
          %s3428 = smul.addr %s3427, 64
          %s3429 = scalar_lea.hbm %s7, %s3428
          %s3430 = sshll.u32 %s3420, 4
          %s3431 = int_to_ptr.vmem [resolvable:$true] %s3430
          %3436 = dma.vmem_to_hbm [thread:$0]  %s3431, 1024, %s3429, %s3417, 64, 64, 4
        $region56: #{tpu_custom_call.1} parent=47 // pred_fallthru
          _
      $region48: #{tpu_custom_call.1} parent=5 // pred_fallthru
        _
      %p3437 = scmp.le.s32.totalorder 2, %s17
      // Predicated region
      $region57: #{tpu_custom_call.1} parent=5 // pred_check
        %p3438 = pneg %p3437
      $region58: #{tpu_custom_call.1} parent=5 // pred_check_branch
        %3440 = sbr.rel (%p3438) target = $region60
      $region59: #{tpu_custom_call.1} parent=5 // pred_region
        %s3441 = ssub.s32 %s17, 2
        // Predicated region
        $region61: #{tpu_custom_call.1} parent=59 // pred_check
          %p3442 = pneg %p213
        $region62: #{tpu_custom_call.1} parent=59 // pred_check_branch
          %3444 = sbr.rel (%p3442) target = $region64
        $region63: #{tpu_custom_call.1} parent=59 // pred_region
          %s3445 = sand.u32 %s198, 1
          %s3446 = scalar_lea.sflag [#allocation4], %s3445
          %s3447 = sand.u32 %s198, 1
          %s3448 = smul.addr %s3447, 64
          %s3449 = scalar_lea.vmem [#allocation5], %s3448
          %3450 = dma.done %s3446, 1024
        $region64: #{tpu_custom_call.1} parent=59 // pred_fallthru
          _
      $region60: #{tpu_custom_call.1} parent=5 // pred_fallthru
        _
    $region6: #{tpu_custom_call.1} parent=1 // loop_footer
      %s21 = sadd.s32 1, %s17
    $region7: #{tpu_custom_call.1} parent=1 // loop_footer_branch
      %16 = sbr.rel target = $region3
    $region8: #{tpu_custom_call.1} parent=1 // loop_exit
      _
    %3451 = vsyncpa [#allocation3], 1
    %s3452 = scalar_lea.sflag [#allocation3], 1
    %3453 = vsyncpa %s3452, 1
    %3454 = vsyncpa [#allocation4], 1
    %s3455 = scalar_lea.sflag [#allocation4], 1
    %3456 = vsyncpa %s3455, 1

</llo_original>
